<compile_context>
chip_gen: v6e
topology: v6e:2x2x1
jax: 0.10.0
libtpu: 0.0.40
codegen_flags: <defaults>
</compile_context>

<pallas_src>
import functools

import jax
import jax.numpy as jnp
import numpy as np
from jax.experimental import pallas as pl
from jax.experimental.pallas import tpu as pltpu


def _layer_norm(x, w, b, eps=1e-5):
    mu = jnp.mean(x, axis=-1, keepdims=True)
    var = jnp.mean((x - mu) ** 2, axis=-1, keepdims=True)
    return (x - mu) * jax.lax.rsqrt(var + eps) * w + b


def _encoder_kernel(feat_ref, mask_ref, pos_ref,
                    wqkv_ref, bqkv_ref, wo_ref, bo_ref,
                    ln1w_ref, ln1b_ref,
                    w1_ref, b1_ref, w2_ref, b2_ref,
                    ln2w_ref, ln2b_ref,
                    out_ref, x_ref, *, n_heads):
    l = pl.program_id(1)
    n_layers = pl.num_programs(1)
    Bt, S, D = feat_ref.shape
    M = Bt * S
    Dh = D // n_heads
    scale = Dh ** -0.5
    cdt = wqkv_ref.dtype                              # bf16 MXU compute dtype

    valid = mask_ref[...]                             # [Bt, 1, S]; 1.0 = keep, 0.0 = padded
    # key_padding_mask: large finite negative in f32 (avoids inf-inf NaN for empty rows)
    neg = jnp.where(valid > 0.5, 0.0, -1e30)          # [Bt, 1, S]

    # ---- init the carried activation once per batch block (layer axis start) ----
    @pl.when(l == 0)
    def _init():
        x_ref[...] = (feat_ref[...] + pos_ref[...][None, :, :]).reshape(M, D)

    x = x_ref[...]                                    # [M, D] f32 residual stream

    # per-layer weight blocks carry a leading singleton layer dim
    wqkv = wqkv_ref[0]; bqkv = bqkv_ref[0]
    wo = wo_ref[0];     bo = bo_ref[0]
    ln1w = ln1w_ref[0]; ln1b = ln1b_ref[0]
    w1 = w1_ref[0];     b1 = b1_ref[0]
    w2 = w2_ref[0];     b2 = b2_ref[0]
    ln2w = ln2w_ref[0]; ln2b = ln2b_ref[0]

    # ---- fused QKV projection: one bf16 MXU pass over M = Bt*S rows, f32 accumulate ----
    qkv = jnp.dot(x.astype(cdt), wqkv,
                  preferred_element_type=jnp.float32) + bqkv          # [M, 3D] f32
    qkv3 = qkv.reshape(Bt, S, 3 * D)                                  # tile-aligned (S % 8 == 0)
    # fold 1/sqrt(Dh) into q (f32), single bf16 cast of q/k/v before head slicing
    q3 = (qkv3[:, :, 0:D] * scale).astype(cdt)
    k3 = qkv3[:, :, D:2 * D].astype(cdt)
    v3 = qkv3[:, :, 2 * D:3 * D].astype(cdt)

    # ---- attention: per-head loop, each head batched over Bt (bf16 MXU, f32 softmax) ----
    heads = []
    for h in range(n_heads):
        sl = slice(h * Dh, (h + 1) * Dh)
        sc = jnp.einsum('bqd,bkd->bqk', q3[:, :, sl], k3[:, :, sl],
                        preferred_element_type=jnp.float32)           # [Bt, S, S] f32
        sc = sc + neg                                                  # f32 mask add post-matmul
        sc = sc - jnp.max(sc, axis=-1, keepdims=True)
        p = jnp.exp(sc)
        p = p / jnp.sum(p, axis=-1, keepdims=True)                     # exact recip (softmax)
        heads.append(jnp.einsum('bqk,bkd->bqd', p.astype(cdt), v3[:, :, sl],
                                preferred_element_type=jnp.float32))
    attn = jnp.concatenate(heads, axis=-1).reshape(M, D)               # [M, D] f32

    attn = jnp.dot(attn.astype(cdt), wo,
                   preferred_element_type=jnp.float32) + bo
    x = _layer_norm(x + attn, ln1w, ln1b)

    hdn = jnp.maximum(
        jnp.dot(x.astype(cdt), w1, preferred_element_type=jnp.float32) + b1, 0.0)
    ff = jnp.dot(hdn.astype(cdt), w2, preferred_element_type=jnp.float32) + b2
    x = _layer_norm(x + ff, ln2w, ln2b)
    x_ref[...] = x                                                     # carry to next layer

    # ---- AvgPoolSequence with attn_mask = ~ignore_mask (finalize at last layer) ----
    @pl.when(l == n_layers - 1)
    def _final():
        length = jnp.sum(valid, axis=-1, keepdims=True)                # [Bt, 1, 1]
        w = valid * pl.reciprocal(length + 1e-12, approx=True)         # [Bt, 1, S]
        x3 = x.reshape(Bt, S, D)
        # VPU weighted sum (overlaps last-layer MXU work) instead of an M=1 matvec
        out_ref[...] = jnp.sum(x3 * w.reshape(Bt, S, 1), axis=1, keepdims=True)


def single_transformer_encoder(feat, ignore_mask, params, *, block_b=None,
                               compute_dtype=jnp.bfloat16,
                               vmem_limit_bytes=48 * 1024 * 1024):
    B, S, D = feat.shape
    n_heads = params["n_heads"]
    n_layers = params["n_layers"]

    # ---- pad S to a sublane multiple (8) so in-kernel reshapes are layout no-ops ----
    Sp = max(8, ((S + 7) // 8) * 8)
    pos = params["pos"][:S].astype(jnp.float32)                        # [S, D]
    if Sp != S:
        feat = jnp.pad(feat, ((0, 0), (0, Sp - S), (0, 0)))
        ignore_mask = jnp.pad(ignore_mask, ((0, 0), (0, Sp - S)), constant_values=True)
        pos = jnp.pad(pos, ((0, Sp - S), (0, 0)))

    # ---- batch block: target ~512 activation rows / grid step; prefer >=2 blocks ----
    if block_b is None:
        block_b = max(1, min(B, pl.cdiv(512, Sp)))
        if block_b >= B and B > 1 and pl.cdiv(B, 2) * Sp >= 256:
            block_b = pl.cdiv(B, 2)                                    # let the parallel axis shard
    n_blocks = pl.cdiv(B, block_b)
    Bp = n_blocks * block_b
    if Bp != B:                                                        # pad batch to block multiple
        feat = jnp.pad(feat, ((0, Bp - B), (0, 0), (0, 0)))
        ignore_mask = jnp.pad(ignore_mask, ((0, Bp - B), (0, 0)), constant_values=True)

    valid = jnp.logical_not(ignore_mask).astype(jnp.float32).reshape(Bp, 1, Sp)

    # bf16 weights on the MXU path (f32 accumulation); biases / LayerNorm params stay f32.
    wparams = [params["wqkv"].astype(compute_dtype), params["bqkv"],
               params["wo"].astype(compute_dtype), params["bo"],
               params["ln1w"], params["ln1b"],
               params["w1"].astype(compute_dtype), params["b1"],
               params["w2"].astype(compute_dtype), params["b2"],
               params["ln2w"], params["ln2b"]]

    def layer_spec(a):
        # stream one layer's slice per step of the (last, "arbitrary") layer grid axis
        return pl.BlockSpec((1,) + a.shape[1:], lambda b, l: (l, 0, 0))

    kernel = functools.partial(_encoder_kernel, n_heads=n_heads)

    out = pl.pallas_call(
        kernel,
        out_shape=jax.ShapeDtypeStruct((Bp, 1, D), jnp.float32),
        grid=(n_blocks, n_layers),
        in_specs=[pl.BlockSpec((block_b, Sp, D), lambda b, l: (b, 0, 0)),
                  pl.BlockSpec((block_b, 1, Sp), lambda b, l: (b, 0, 0)),
                  pl.BlockSpec((Sp, D), lambda b, l: (0, 0))] +
                 [layer_spec(p) for p in wparams],
        out_specs=pl.BlockSpec((block_b, 1, D), lambda b, l: (b, 0, 0)),
        scratch_shapes=[pltpu.VMEM((block_b * Sp, D), jnp.float32)],   # carried residual stream
        compiler_params=pltpu.CompilerParams(
            dimension_semantics=("parallel", "arbitrary"),             # batch blocks independent
            vmem_limit_bytes=vmem_limit_bytes),
    )(feat, valid, pos, *wparams)
    return out.reshape(Bp, D)[:B]


def ref_forward(feat, ignore_mask, params):
    """Pure-JAX f32 reference (same math, XLA path) for validation."""
    B, S, D = feat.shape
    H = params["n_heads"]
    L = params["n_layers"]
    Dh = D // H
    hp = jax.lax.Precision.HIGHEST
    x = feat + params["pos"][:S][None]
    valid = jnp.logical_not(ignore_mask).astype(jnp.float32)          # [B, S]
    neg = jnp.where(valid > 0.5, 0.0, -jnp.inf)[:, None, :]           # [B, 1, S]
    for l in range(L):
        qkv = jnp.dot(x, params["wqkv"][l], precision=hp) + params["bqkv"][l]
        q, k, v = qkv[..., :D], qkv[..., D:2 * D], qkv[..., 2 * D:]
        heads = []
        for h in range(H):
            qh = q[..., h * Dh:(h + 1) * Dh]
            kh = k[..., h * Dh:(h + 1) * Dh]
            vh = v[..., h * Dh:(h + 1) * Dh]
            sc = jnp.einsum("bqd,bkd->bqk", qh, kh, precision=hp) / (Dh ** 0.5) + neg
            p = jax.nn.softmax(sc, axis=-1)
            heads.append(jnp.einsum("bqk,bkd->bqd", p, vh, precision=hp))
        attn = jnp.concatenate(heads, axis=-1)
        attn = jnp.dot(attn, params["wo"][l], precision=hp) + params["bo"][l]
        x = _layer_norm(x + attn, params["ln1w"][l], params["ln1b"][l])
        hdn = jax.nn.relu(jnp.dot(x, params["w1"][l], precision=hp) + params["b1"][l])
        ff = jnp.dot(hdn, params["w2"][l], precision=hp) + params["b2"][l]
        x = _layer_norm(x + ff, params["ln2w"][l], params["ln2b"][l])
    length = valid.sum(-1, keepdims=True)
    w = valid * (1.0 / (length + 1e-12))
    return jnp.einsum("bs,bsd->bd", w, x, precision=hp)


if __name__ == "__main__":
    B, S, D, H, L = 2, 8, 32, 4, 2
    F = 2048  # PyTorch nn.TransformerEncoderLayer default dim_feedforward

    key = jax.random.PRNGKey(0)
    ks = jax.random.split(key, 12)

    def nrm(k, shape, scale=0.02):
        return scale * jax.random.normal(k, shape, jnp.float32)

    params = dict(
        n_heads=H, n_layers=L,
        pos=nrm(ks[0], (50, D)),                 # LearnedPositionalEncoding.weight
        wqkv=nrm(ks[1], (L, D, 3 * D)),          # attn in_proj (pre-transposed: x @ W)
        bqkv=nrm(ks[2], (L, 1, 3 * D)),
        wo=nrm(ks[3], (L, D, D)),                # attn out_proj
        bo=nrm(ks[4], (L, 1, D)),
        ln1w=jnp.ones((L, 1, D), jnp.float32),
        ln1b=jnp.zeros((L, 1, D), jnp.float32),
        w1=nrm(ks[5], (L, D, F)),                # FFN linear1
        b1=nrm(ks[6], (L, 1, F)),
        w2=nrm(ks[7], (L, F, D)),                # FFN linear2
        b2=nrm(ks[8], (L, 1, D)),
        ln2w=jnp.ones((L, 1, D), jnp.float32),
        ln2b=jnp.zeros((L, 1, D), jnp.float32),
    )

    feat = jax.random.normal(ks[9], (B, S, D), jnp.float32)
    lengths = jnp.array([S, 5])
    ignore_mask = jnp.arange(S)[None, :] >= lengths[:, None]   # True = padded/ignored

    out = jax.block_until_ready(single_transformer_encoder(feat, ignore_mask, params))
    ref = jax.block_until_ready(ref_forward(feat, ignore_mask, params))

    assert out.shape == (B, D)
    assert np.allclose(np.asarray(out), np.asarray(ref), atol=5e-2, rtol=5e-2), (
        np.max(np.abs(np.asarray(out) - np.asarray(ref))))
    print("KERNEL_OK")
</pallas_src>

<mosaic_0001>
module attributes {stable_mosaic.version = 11 : i64} {
  func.func @_encoder_kernel(%arg0: i32, %arg1: i32, %arg2: memref<2x8x32xf32, #tpu.memory_space<vmem>>, %arg3: memref<2x1x8xf32, #tpu.memory_space<vmem>>, %arg4: memref<8x32xf32, #tpu.memory_space<vmem>>, %arg5: memref<1x32x96xbf16, #tpu.memory_space<vmem>>, %arg6: memref<1x1x96xf32, #tpu.memory_space<vmem>>, %arg7: memref<1x32x32xbf16, #tpu.memory_space<vmem>>, %arg8: memref<1x1x32xf32, #tpu.memory_space<vmem>>, %arg9: memref<1x1x32xf32, #tpu.memory_space<vmem>>, %arg10: memref<1x1x32xf32, #tpu.memory_space<vmem>>, %arg11: memref<1x32x2048xbf16, #tpu.memory_space<vmem>>, %arg12: memref<1x1x2048xf32, #tpu.memory_space<vmem>>, %arg13: memref<1x2048x32xbf16, #tpu.memory_space<vmem>>, %arg14: memref<1x1x32xf32, #tpu.memory_space<vmem>>, %arg15: memref<1x1x32xf32, #tpu.memory_space<vmem>>, %arg16: memref<1x1x32xf32, #tpu.memory_space<vmem>>, %arg17: memref<2x1x32xf32, #tpu.memory_space<vmem>>, %arg18: memref<16x32xf32, #tpu.memory_space<vmem>>) attributes {dimension_semantics = [#tpu.dimension_semantics<parallel>, #tpu.dimension_semantics<arbitrary>], iteration_bounds = array<i64: 1, 2>, scalar_prefetch = 0 : i64, scratch_operands = 1 : i64, tpu.core_type = #tpu.core_type<tc>, window_params = [{transform_indices = @transform_0, window_bounds = array<i64: 2, 8, 32>}, {transform_indices = @transform_1, window_bounds = array<i64: 2, 1, 8>}, {pipeline_mode = #tpu.pipeline_mode<synchronous>, transform_indices = @transform_2, window_bounds = array<i64: 8, 32>}, {transform_indices = @transform_3, window_bounds = array<i64: 1, 32, 96>}, {transform_indices = @transform_4, window_bounds = array<i64: 1, 1, 96>}, {transform_indices = @transform_5, window_bounds = array<i64: 1, 32, 32>}, {transform_indices = @transform_6, window_bounds = array<i64: 1, 1, 32>}, {transform_indices = @transform_7, window_bounds = array<i64: 1, 1, 32>}, {transform_indices = @transform_8, window_bounds = array<i64: 1, 1, 32>}, {transform_indices = @transform_9, window_bounds = array<i64: 1, 32, 2048>}, {transform_indices = @transform_10, window_bounds = array<i64: 1, 1, 2048>}, {transform_indices = @transform_11, window_bounds = array<i64: 1, 2048, 32>}, {transform_indices = @transform_12, window_bounds = array<i64: 1, 1, 32>}, {transform_indices = @transform_13, window_bounds = array<i64: 1, 1, 32>}, {transform_indices = @transform_14, window_bounds = array<i64: 1, 1, 32>}, {transform_indices = @transform_15, window_bounds = array<i64: 2, 1, 32>}]} {
    %c0 = arith.constant 0 : index
    %c0_0 = arith.constant 0 : index
    %c0_1 = arith.constant 0 : index
    %0 = vector.load %arg3[%c0, %c0_0, %c0_1] : memref<2x1x8xf32, #tpu.memory_space<vmem>>, vector<2x1x8xf32>
    %cst = arith.constant 5.000000e-01 : f32
    %1 = vector.broadcast %cst : f32 to vector<2x1x8xf32>
    %2 = arith.cmpf ogt, %0, %1 : vector<2x1x8xf32>
    %cst_2 = arith.constant 0.000000e+00 : f32
    %cst_3 = arith.constant -1.000000e+30 : f32
    %3 = vector.broadcast %cst_2 : f32 to vector<2x1x8xf32>
    %4 = vector.broadcast %cst_3 : f32 to vector<2x1x8xf32>
    %5 = arith.select %2, %3, %4 : vector<2x1x8xi1>, vector<2x1x8xf32>
    %c0_i32 = arith.constant 0 : i32
    %6 = arith.cmpi eq, %arg1, %c0_i32 : i32
    %7 = arith.extui %6 : i1 to i32
    %c0_i32_4 = arith.constant 0 : i32
    %8 = arith.cmpi ne, %7, %c0_i32_4 : i32
    scf.if %8 {
      %c0_78 = arith.constant 0 : index
      %c0_79 = arith.constant 0 : index
      %c0_80 = arith.constant 0 : index
      %181 = vector.load %arg2[%c0_78, %c0_79, %c0_80] : memref<2x8x32xf32, #tpu.memory_space<vmem>>, vector<2x8x32xf32>
      %c0_81 = arith.constant 0 : index
      %c0_82 = arith.constant 0 : index
      %182 = vector.load %arg4[%c0_81, %c0_82] : memref<8x32xf32, #tpu.memory_space<vmem>>, vector<8x32xf32>
      %183 = vector.shape_cast %182 : vector<8x32xf32> to vector<1x8x32xf32>
      %184 = vector.broadcast %183 : vector<1x8x32xf32> to vector<2x8x32xf32>
      %185 = arith.addf %181, %184 : vector<2x8x32xf32>
      %186 = vector.shape_cast %185 : vector<2x8x32xf32> to vector<16x32xf32>
      %c0_83 = arith.constant 0 : index
      %c0_84 = arith.constant 0 : index
      %187 = vector.load %arg18[%c0_83, %c0_84] : memref<16x32xf32, #tpu.memory_space<vmem>>, vector<16x32xf32>
      tpu.vector_store %arg18[%c0_83, %c0_84], %186 {strides = array<i32>} : memref<16x32xf32, #tpu.memory_space<vmem>>, vector<16x32xf32>,
    } else {
    }
    %c0_5 = arith.constant 0 : index
    %c0_6 = arith.constant 0 : index
    %9 = vector.load %arg18[%c0_5, %c0_6] : memref<16x32xf32, #tpu.memory_space<vmem>>, vector<16x32xf32>
    %c0_7 = arith.constant 0 : index
    %c0_8 = arith.constant 0 : index
    %c0_9 = arith.constant 0 : index
    %10 = vector.load %arg5[%c0_7, %c0_8, %c0_9] : memref<1x32x96xbf16, #tpu.memory_space<vmem>>, vector<1x32x96xbf16>
    %11 = vector.shape_cast %10 : vector<1x32x96xbf16> to vector<32x96xbf16>
    %c0_10 = arith.constant 0 : index
    %c0_11 = arith.constant 0 : index
    %c0_12 = arith.constant 0 : index
    %12 = vector.load %arg6[%c0_10, %c0_11, %c0_12] : memref<1x1x96xf32, #tpu.memory_space<vmem>>, vector<1x1x96xf32>
    %13 = vector.shape_cast %12 : vector<1x1x96xf32> to vector<1x96xf32>
    %c0_13 = arith.constant 0 : index
    %c0_14 = arith.constant 0 : index
    %c0_15 = arith.constant 0 : index
    %14 = vector.load %arg7[%c0_13, %c0_14, %c0_15] : memref<1x32x32xbf16, #tpu.memory_space<vmem>>, vector<1x32x32xbf16>
    %15 = vector.shape_cast %14 : vector<1x32x32xbf16> to vector<32x32xbf16>
    %c0_16 = arith.constant 0 : index
    %c0_17 = arith.constant 0 : index
    %c0_18 = arith.constant 0 : index
    %16 = vector.load %arg8[%c0_16, %c0_17, %c0_18] : memref<1x1x32xf32, #tpu.memory_space<vmem>>, vector<1x1x32xf32>
    %17 = vector.shape_cast %16 : vector<1x1x32xf32> to vector<1x32xf32>
    %c0_19 = arith.constant 0 : index
    %c0_20 = arith.constant 0 : index
    %c0_21 = arith.constant 0 : index
    %18 = vector.load %arg9[%c0_19, %c0_20, %c0_21] : memref<1x1x32xf32, #tpu.memory_space<vmem>>, vector<1x1x32xf32>
    %19 = vector.shape_cast %18 : vector<1x1x32xf32> to vector<1x32xf32>
    %c0_22 = arith.constant 0 : index
    %c0_23 = arith.constant 0 : index
    %c0_24 = arith.constant 0 : index
    %20 = vector.load %arg10[%c0_22, %c0_23, %c0_24] : memref<1x1x32xf32, #tpu.memory_space<vmem>>, vector<1x1x32xf32>
    %21 = vector.shape_cast %20 : vector<1x1x32xf32> to vector<1x32xf32>
    %c0_25 = arith.constant 0 : index
    %c0_26 = arith.constant 0 : index
    %c0_27 = arith.constant 0 : index
    %22 = vector.load %arg11[%c0_25, %c0_26, %c0_27] : memref<1x32x2048xbf16, #tpu.memory_space<vmem>>, vector<1x32x2048xbf16>
    %23 = vector.shape_cast %22 : vector<1x32x2048xbf16> to vector<32x2048xbf16>
    %c0_28 = arith.constant 0 : index
    %c0_29 = arith.constant 0 : index
    %c0_30 = arith.constant 0 : index
    %24 = vector.load %arg12[%c0_28, %c0_29, %c0_30] : memref<1x1x2048xf32, #tpu.memory_space<vmem>>, vector<1x1x2048xf32>
    %25 = vector.shape_cast %24 : vector<1x1x2048xf32> to vector<1x2048xf32>
    %c0_31 = arith.constant 0 : index
    %c0_32 = arith.constant 0 : index
    %c0_33 = arith.constant 0 : index
    %26 = vector.load %arg13[%c0_31, %c0_32, %c0_33] : memref<1x2048x32xbf16, #tpu.memory_space<vmem>>, vector<1x2048x32xbf16>
    %27 = vector.shape_cast %26 : vector<1x2048x32xbf16> to vector<2048x32xbf16>
    %c0_34 = arith.constant 0 : index
    %c0_35 = arith.constant 0 : index
    %c0_36 = arith.constant 0 : index
    %28 = vector.load %arg14[%c0_34, %c0_35, %c0_36] : memref<1x1x32xf32, #tpu.memory_space<vmem>>, vector<1x1x32xf32>
    %29 = vector.shape_cast %28 : vector<1x1x32xf32> to vector<1x32xf32>
    %c0_37 = arith.constant 0 : index
    %c0_38 = arith.constant 0 : index
    %c0_39 = arith.constant 0 : index
    %30 = vector.load %arg15[%c0_37, %c0_38, %c0_39] : memref<1x1x32xf32, #tpu.memory_space<vmem>>, vector<1x1x32xf32>
    %31 = vector.shape_cast %30 : vector<1x1x32xf32> to vector<1x32xf32>
    %c0_40 = arith.constant 0 : index
    %c0_41 = arith.constant 0 : index
    %c0_42 = arith.constant 0 : index
    %32 = vector.load %arg16[%c0_40, %c0_41, %c0_42] : memref<1x1x32xf32, #tpu.memory_space<vmem>>, vector<1x1x32xf32>
    %33 = vector.shape_cast %32 : vector<1x1x32xf32> to vector<1x32xf32>
    %34 = arith.truncf %9 : vector<16x32xf32> to vector<16x32xbf16>
    %cst_43 = arith.constant dense<0.000000e+00> : vector<16x96xf32>
    %35 = tpu.matmul %34, %11, %cst_43 {dimension_numbers = #tpu.dot_dimension_numbers<[1], [0], [0], [1], [0, 0, 1, 1], [], []>} : vector<16x32xbf16>, vector<32x96xbf16>, vector<16x96xf32> -> vector<16x96xf32>
    %36 = vector.broadcast %13 : vector<1x96xf32> to vector<16x96xf32>
    %37 = arith.addf %35, %36 : vector<16x96xf32>
    %38 = vector.shape_cast %37 : vector<16x96xf32> to vector<2x8x96xf32>
    %39 = vector.extract_strided_slice %38 {offsets = [0, 0, 0], sizes = [2, 8, 32], strides = [1, 1, 1]} : vector<2x8x96xf32> to vector<2x8x32xf32>
    %cst_44 = arith.constant 0.353553385 : f32
    %40 = vector.broadcast %cst_44 : f32 to vector<2x8x32xf32>
    %41 = arith.mulf %39, %40 : vector<2x8x32xf32>
    %42 = arith.truncf %41 : vector<2x8x32xf32> to vector<2x8x32xbf16>
    %43 = vector.extract_strided_slice %38 {offsets = [0, 0, 32], sizes = [2, 8, 32], strides = [1, 1, 1]} : vector<2x8x96xf32> to vector<2x8x32xf32>
    %44 = arith.truncf %43 : vector<2x8x32xf32> to vector<2x8x32xbf16>
    %45 = vector.extract_strided_slice %38 {offsets = [0, 0, 64], sizes = [2, 8, 32], strides = [1, 1, 1]} : vector<2x8x96xf32> to vector<2x8x32xf32>
    %46 = arith.truncf %45 : vector<2x8x32xf32> to vector<2x8x32xbf16>
    %47 = vector.extract_strided_slice %42 {offsets = [0, 0, 0], sizes = [2, 8, 8], strides = [1, 1, 1]} : vector<2x8x32xbf16> to vector<2x8x8xbf16>
    %48 = vector.extract_strided_slice %44 {offsets = [0, 0, 0], sizes = [2, 8, 8], strides = [1, 1, 1]} : vector<2x8x32xbf16> to vector<2x8x8xbf16>
    "tpu.trace_start"() <{level = 10 : i32, message = "bqd,bkd->bqk"}> : () -> ()
    %cst_45 = arith.constant dense<0.000000e+00> : vector<2x8x8xf32>
    %49 = tpu.matmul %47, %48, %cst_45 {dimension_numbers = #tpu.dot_dimension_numbers<[2], [2], [1], [1], [0, 0, 0, 1, 1, 1], [0], [0]>} : vector<2x8x8xbf16>, vector<2x8x8xbf16>, vector<2x8x8xf32> -> vector<2x8x8xf32>
    "tpu.trace_stop"() : () -> ()
    %50 = vector.broadcast %5 : vector<2x1x8xf32> to vector<2x8x8xf32>
    %51 = arith.addf %49, %50 : vector<2x8x8xf32>
    %cst_46 = arith.constant dense<0xFF800000> : vector<2x8xf32>
    %52 = vector.multi_reduction <maximumf>, %51, %cst_46 [2] : vector<2x8x8xf32> to vector<2x8xf32>
    %53 = vector.shape_cast %52 : vector<2x8xf32> to vector<2x8x1xf32>
    %54 = vector.broadcast %53 : vector<2x8x1xf32> to vector<2x8x8xf32>
    %55 = arith.subf %51, %54 : vector<2x8x8xf32>
    %56 = math.exp %55 : vector<2x8x8xf32>
    %cst_47 = arith.constant dense<0.000000e+00> : vector<2x8xf32>
    %57 = vector.multi_reduction <add>, %56, %cst_47 [2] : vector<2x8x8xf32> to vector<2x8xf32>
    %58 = vector.shape_cast %57 : vector<2x8xf32> to vector<2x8x1xf32>
    %59 = vector.broadcast %58 : vector<2x8x1xf32> to vector<2x8x8xf32>
    %60 = arith.divf %56, %59 : vector<2x8x8xf32>
    %61 = arith.truncf %60 : vector<2x8x8xf32> to vector<2x8x8xbf16>
    %62 = vector.extract_strided_slice %46 {offsets = [0, 0, 0], sizes = [2, 8, 8], strides = [1, 1, 1]} : vector<2x8x32xbf16> to vector<2x8x8xbf16>
    "tpu.trace_start"() <{level = 10 : i32, message = "bqk,bkd->bqd"}> : () -> ()
    %cst_48 = arith.constant dense<0.000000e+00> : vector<2x8x8xf32>
    %63 = tpu.matmul %61, %62, %cst_48 {dimension_numbers = #tpu.dot_dimension_numbers<[2], [1], [1], [2], [0, 0, 0, 1, 1, 2], [0], [0]>} : vector<2x8x8xbf16>, vector<2x8x8xbf16>, vector<2x8x8xf32> -> vector<2x8x8xf32>
    "tpu.trace_stop"() : () -> ()
    %64 = vector.extract_strided_slice %42 {offsets = [0, 0, 8], sizes = [2, 8, 8], strides = [1, 1, 1]} : vector<2x8x32xbf16> to vector<2x8x8xbf16>
    %65 = vector.extract_strided_slice %44 {offsets = [0, 0, 8], sizes = [2, 8, 8], strides = [1, 1, 1]} : vector<2x8x32xbf16> to vector<2x8x8xbf16>
    "tpu.trace_start"() <{level = 10 : i32, message = "bqd,bkd->bqk"}> : () -> ()
    %cst_49 = arith.constant dense<0.000000e+00> : vector<2x8x8xf32>
    %66 = tpu.matmul %64, %65, %cst_49 {dimension_numbers = #tpu.dot_dimension_numbers<[2], [2], [1], [1], [0, 0, 0, 1, 1, 1], [0], [0]>} : vector<2x8x8xbf16>, vector<2x8x8xbf16>, vector<2x8x8xf32> -> vector<2x8x8xf32>
    "tpu.trace_stop"() : () -> ()
    %67 = vector.broadcast %5 : vector<2x1x8xf32> to vector<2x8x8xf32>
    %68 = arith.addf %66, %67 : vector<2x8x8xf32>
    %cst_50 = arith.constant dense<0xFF800000> : vector<2x8xf32>
    %69 = vector.multi_reduction <maximumf>, %68, %cst_50 [2] : vector<2x8x8xf32> to vector<2x8xf32>
    %70 = vector.shape_cast %69 : vector<2x8xf32> to vector<2x8x1xf32>
    %71 = vector.broadcast %70 : vector<2x8x1xf32> to vector<2x8x8xf32>
    %72 = arith.subf %68, %71 : vector<2x8x8xf32>
    %73 = math.exp %72 : vector<2x8x8xf32>
    %cst_51 = arith.constant dense<0.000000e+00> : vector<2x8xf32>
    %74 = vector.multi_reduction <add>, %73, %cst_51 [2] : vector<2x8x8xf32> to vector<2x8xf32>
    %75 = vector.shape_cast %74 : vector<2x8xf32> to vector<2x8x1xf32>
    %76 = vector.broadcast %75 : vector<2x8x1xf32> to vector<2x8x8xf32>
    %77 = arith.divf %73, %76 : vector<2x8x8xf32>
    %78 = arith.truncf %77 : vector<2x8x8xf32> to vector<2x8x8xbf16>
    %79 = vector.extract_strided_slice %46 {offsets = [0, 0, 8], sizes = [2, 8, 8], strides = [1, 1, 1]} : vector<2x8x32xbf16> to vector<2x8x8xbf16>
    "tpu.trace_start"() <{level = 10 : i32, message = "bqk,bkd->bqd"}> : () -> ()
    %cst_52 = arith.constant dense<0.000000e+00> : vector<2x8x8xf32>
    %80 = tpu.matmul %78, %79, %cst_52 {dimension_numbers = #tpu.dot_dimension_numbers<[2], [1], [1], [2], [0, 0, 0, 1, 1, 2], [0], [0]>} : vector<2x8x8xbf16>, vector<2x8x8xbf16>, vector<2x8x8xf32> -> vector<2x8x8xf32>
    "tpu.trace_stop"() : () -> ()
    %81 = vector.extract_strided_slice %42 {offsets = [0, 0, 16], sizes = [2, 8, 8], strides = [1, 1, 1]} : vector<2x8x32xbf16> to vector<2x8x8xbf16>
    %82 = vector.extract_strided_slice %44 {offsets = [0, 0, 16], sizes = [2, 8, 8], strides = [1, 1, 1]} : vector<2x8x32xbf16> to vector<2x8x8xbf16>
    "tpu.trace_start"() <{level = 10 : i32, message = "bqd,bkd->bqk"}> : () -> ()
    %cst_53 = arith.constant dense<0.000000e+00> : vector<2x8x8xf32>
    %83 = tpu.matmul %81, %82, %cst_53 {dimension_numbers = #tpu.dot_dimension_numbers<[2], [2], [1], [1], [0, 0, 0, 1, 1, 1], [0], [0]>} : vector<2x8x8xbf16>, vector<2x8x8xbf16>, vector<2x8x8xf32> -> vector<2x8x8xf32>
    "tpu.trace_stop"() : () -> ()
    %84 = vector.broadcast %5 : vector<2x1x8xf32> to vector<2x8x8xf32>
    %85 = arith.addf %83, %84 : vector<2x8x8xf32>
    %cst_54 = arith.constant dense<0xFF800000> : vector<2x8xf32>
    %86 = vector.multi_reduction <maximumf>, %85, %cst_54 [2] : vector<2x8x8xf32> to vector<2x8xf32>
    %87 = vector.shape_cast %86 : vector<2x8xf32> to vector<2x8x1xf32>
    %88 = vector.broadcast %87 : vector<2x8x1xf32> to vector<2x8x8xf32>
    %89 = arith.subf %85, %88 : vector<2x8x8xf32>
    %90 = math.exp %89 : vector<2x8x8xf32>
    %cst_55 = arith.constant dense<0.000000e+00> : vector<2x8xf32>
    %91 = vector.multi_reduction <add>, %90, %cst_55 [2] : vector<2x8x8xf32> to vector<2x8xf32>
    %92 = vector.shape_cast %91 : vector<2x8xf32> to vector<2x8x1xf32>
    %93 = vector.broadcast %92 : vector<2x8x1xf32> to vector<2x8x8xf32>
    %94 = arith.divf %90, %93 : vector<2x8x8xf32>
    %95 = arith.truncf %94 : vector<2x8x8xf32> to vector<2x8x8xbf16>
    %96 = vector.extract_strided_slice %46 {offsets = [0, 0, 16], sizes = [2, 8, 8], strides = [1, 1, 1]} : vector<2x8x32xbf16> to vector<2x8x8xbf16>
    "tpu.trace_start"() <{level = 10 : i32, message = "bqk,bkd->bqd"}> : () -> ()
    %cst_56 = arith.constant dense<0.000000e+00> : vector<2x8x8xf32>
    %97 = tpu.matmul %95, %96, %cst_56 {dimension_numbers = #tpu.dot_dimension_numbers<[2], [1], [1], [2], [0, 0, 0, 1, 1, 2], [0], [0]>} : vector<2x8x8xbf16>, vector<2x8x8xbf16>, vector<2x8x8xf32> -> vector<2x8x8xf32>
    "tpu.trace_stop"() : () -> ()
    %98 = vector.extract_strided_slice %42 {offsets = [0, 0, 24], sizes = [2, 8, 8], strides = [1, 1, 1]} : vector<2x8x32xbf16> to vector<2x8x8xbf16>
    %99 = vector.extract_strided_slice %44 {offsets = [0, 0, 24], sizes = [2, 8, 8], strides = [1, 1, 1]} : vector<2x8x32xbf16> to vector<2x8x8xbf16>
    "tpu.trace_start"() <{level = 10 : i32, message = "bqd,bkd->bqk"}> : () -> ()
    %cst_57 = arith.constant dense<0.000000e+00> : vector<2x8x8xf32>
    %100 = tpu.matmul %98, %99, %cst_57 {dimension_numbers = #tpu.dot_dimension_numbers<[2], [2], [1], [1], [0, 0, 0, 1, 1, 1], [0], [0]>} : vector<2x8x8xbf16>, vector<2x8x8xbf16>, vector<2x8x8xf32> -> vector<2x8x8xf32>
    "tpu.trace_stop"() : () -> ()
    %101 = vector.broadcast %5 : vector<2x1x8xf32> to vector<2x8x8xf32>
    %102 = arith.addf %100, %101 : vector<2x8x8xf32>
    %cst_58 = arith.constant dense<0xFF800000> : vector<2x8xf32>
    %103 = vector.multi_reduction <maximumf>, %102, %cst_58 [2] : vector<2x8x8xf32> to vector<2x8xf32>
    %104 = vector.shape_cast %103 : vector<2x8xf32> to vector<2x8x1xf32>
    %105 = vector.broadcast %104 : vector<2x8x1xf32> to vector<2x8x8xf32>
    %106 = arith.subf %102, %105 : vector<2x8x8xf32>
    %107 = math.exp %106 : vector<2x8x8xf32>
    %cst_59 = arith.constant dense<0.000000e+00> : vector<2x8xf32>
    %108 = vector.multi_reduction <add>, %107, %cst_59 [2] : vector<2x8x8xf32> to vector<2x8xf32>
    %109 = vector.shape_cast %108 : vector<2x8xf32> to vector<2x8x1xf32>
    %110 = vector.broadcast %109 : vector<2x8x1xf32> to vector<2x8x8xf32>
    %111 = arith.divf %107, %110 : vector<2x8x8xf32>
    %112 = arith.truncf %111 : vector<2x8x8xf32> to vector<2x8x8xbf16>
    %113 = vector.extract_strided_slice %46 {offsets = [0, 0, 24], sizes = [2, 8, 8], strides = [1, 1, 1]} : vector<2x8x32xbf16> to vector<2x8x8xbf16>
    "tpu.trace_start"() <{level = 10 : i32, message = "bqk,bkd->bqd"}> : () -> ()
    %cst_60 = arith.constant dense<0.000000e+00> : vector<2x8x8xf32>
    %114 = tpu.matmul %112, %113, %cst_60 {dimension_numbers = #tpu.dot_dimension_numbers<[2], [1], [1], [2], [0, 0, 0, 1, 1, 2], [0], [0]>} : vector<2x8x8xbf16>, vector<2x8x8xbf16>, vector<2x8x8xf32> -> vector<2x8x8xf32>
    "tpu.trace_stop"() : () -> ()
    %115 = tpu.concatenate %63, %80, %97, %114 in 2 : vector<2x8x8xf32>, vector<2x8x8xf32>, vector<2x8x8xf32>, vector<2x8x8xf32> -> vector<2x8x32xf32>
    %116 = vector.shape_cast %115 : vector<2x8x32xf32> to vector<16x32xf32>
    %117 = arith.truncf %116 : vector<16x32xf32> to vector<16x32xbf16>
    %cst_61 = arith.constant dense<0.000000e+00> : vector<16x32xf32>
    %118 = tpu.matmul %117, %15, %cst_61 {dimension_numbers = #tpu.dot_dimension_numbers<[1], [0], [0], [1], [0, 0, 1, 1], [], []>} : vector<16x32xbf16>, vector<32x32xbf16>, vector<16x32xf32> -> vector<16x32xf32>
    %119 = vector.broadcast %17 : vector<1x32xf32> to vector<16x32xf32>
    %120 = arith.addf %118, %119 : vector<16x32xf32>
    %121 = arith.addf %9, %120 : vector<16x32xf32>
    %cst_62 = arith.constant dense<0.000000e+00> : vector<16xf32>
    %122 = vector.multi_reduction <add>, %121, %cst_62 [1] : vector<16x32xf32> to vector<16xf32>
    %123 = vector.shape_cast %122 : vector<16xf32> to vector<16x1xf32>
    %cst_63 = arith.constant 3.200000e+01 : f32
    %124 = vector.broadcast %cst_63 : f32 to vector<16x1xf32>
    %125 = arith.divf %123, %124 : vector<16x1xf32>
    %126 = vector.broadcast %125 : vector<16x1xf32> to vector<16x32xf32>
    %127 = arith.subf %121, %126 : vector<16x32xf32>
    %128 = arith.mulf %127, %127 : vector<16x32xf32>
    %cst_64 = arith.constant dense<0.000000e+00> : vector<16xf32>
    %129 = vector.multi_reduction <add>, %128, %cst_64 [1] : vector<16x32xf32> to vector<16xf32>
    %130 = vector.shape_cast %129 : vector<16xf32> to vector<16x1xf32>
    %cst_65 = arith.constant 3.200000e+01 : f32
    %131 = vector.broadcast %cst_65 : f32 to vector<16x1xf32>
    %132 = arith.divf %130, %131 : vector<16x1xf32>
    %133 = vector.broadcast %125 : vector<16x1xf32> to vector<16x32xf32>
    %134 = arith.subf %121, %133 : vector<16x32xf32>
    %cst_66 = arith.constant 9.99999974E-6 : f32
    %135 = vector.broadcast %cst_66 : f32 to vector<16x1xf32>
    %136 = arith.addf %132, %135 : vector<16x1xf32>
    %137 = math.rsqrt %136 : vector<16x1xf32>
    %138 = vector.broadcast %137 : vector<16x1xf32> to vector<16x32xf32>
    %139 = arith.mulf %134, %138 : vector<16x32xf32>
    %140 = vector.broadcast %19 : vector<1x32xf32> to vector<16x32xf32>
    %141 = arith.mulf %139, %140 : vector<16x32xf32>
    %142 = vector.broadcast %21 : vector<1x32xf32> to vector<16x32xf32>
    %143 = arith.addf %141, %142 : vector<16x32xf32>
    %144 = arith.truncf %143 : vector<16x32xf32> to vector<16x32xbf16>
    %cst_67 = arith.constant dense<0.000000e+00> : vector<16x2048xf32>
    %145 = tpu.matmul %144, %23, %cst_67 {dimension_numbers = #tpu.dot_dimension_numbers<[1], [0], [0], [1], [0, 0, 1, 1], [], []>} : vector<16x32xbf16>, vector<32x2048xbf16>, vector<16x2048xf32> -> vector<16x2048xf32>
    %146 = vector.broadcast %25 : vector<1x2048xf32> to vector<16x2048xf32>
    %147 = arith.addf %145, %146 : vector<16x2048xf32>
    %cst_68 = arith.constant 0.000000e+00 : f32
    %148 = vector.broadcast %cst_68 : f32 to vector<16x2048xf32>
    %149 = arith.maximumf %147, %148 : vector<16x2048xf32>
    %150 = arith.truncf %149 : vector<16x2048xf32> to vector<16x2048xbf16>
    %cst_69 = arith.constant dense<0.000000e+00> : vector<16x32xf32>
    %151 = tpu.matmul %150, %27, %cst_69 {dimension_numbers = #tpu.dot_dimension_numbers<[1], [0], [0], [1], [0, 0, 1, 1], [], []>} : vector<16x2048xbf16>, vector<2048x32xbf16>, vector<16x32xf32> -> vector<16x32xf32>
    %152 = vector.broadcast %29 : vector<1x32xf32> to vector<16x32xf32>
    %153 = arith.addf %151, %152 : vector<16x32xf32>
    %154 = arith.addf %143, %153 : vector<16x32xf32>
    %cst_70 = arith.constant dense<0.000000e+00> : vector<16xf32>
    %155 = vector.multi_reduction <add>, %154, %cst_70 [1] : vector<16x32xf32> to vector<16xf32>
    %156 = vector.shape_cast %155 : vector<16xf32> to vector<16x1xf32>
    %cst_71 = arith.constant 3.200000e+01 : f32
    %157 = vector.broadcast %cst_71 : f32 to vector<16x1xf32>
    %158 = arith.divf %156, %157 : vector<16x1xf32>
    %159 = vector.broadcast %158 : vector<16x1xf32> to vector<16x32xf32>
    %160 = arith.subf %154, %159 : vector<16x32xf32>
    %161 = arith.mulf %160, %160 : vector<16x32xf32>
    %cst_72 = arith.constant dense<0.000000e+00> : vector<16xf32>
    %162 = vector.multi_reduction <add>, %161, %cst_72 [1] : vector<16x32xf32> to vector<16xf32>
    %163 = vector.shape_cast %162 : vector<16xf32> to vector<16x1xf32>
    %cst_73 = arith.constant 3.200000e+01 : f32
    %164 = vector.broadcast %cst_73 : f32 to vector<16x1xf32>
    %165 = arith.divf %163, %164 : vector<16x1xf32>
    %166 = vector.broadcast %158 : vector<16x1xf32> to vector<16x32xf32>
    %167 = arith.subf %154, %166 : vector<16x32xf32>
    %cst_74 = arith.constant 9.99999974E-6 : f32
    %168 = vector.broadcast %cst_74 : f32 to vector<16x1xf32>
    %169 = arith.addf %165, %168 : vector<16x1xf32>
    %170 = math.rsqrt %169 : vector<16x1xf32>
    %171 = vector.broadcast %170 : vector<16x1xf32> to vector<16x32xf32>
    %172 = arith.mulf %167, %171 : vector<16x32xf32>
    %173 = vector.broadcast %31 : vector<1x32xf32> to vector<16x32xf32>
    %174 = arith.mulf %172, %173 : vector<16x32xf32>
    %175 = vector.broadcast %33 : vector<1x32xf32> to vector<16x32xf32>
    %176 = arith.addf %174, %175 : vector<16x32xf32>
    %c0_75 = arith.constant 0 : index
    %c0_76 = arith.constant 0 : index
    %177 = vector.load %arg18[%c0_75, %c0_76] : memref<16x32xf32, #tpu.memory_space<vmem>>, vector<16x32xf32>
    tpu.vector_store %arg18[%c0_75, %c0_76], %176 {strides = array<i32>} : memref<16x32xf32, #tpu.memory_space<vmem>>, vector<16x32xf32>,
    %c1_i32 = arith.constant 1 : i32
    %178 = arith.cmpi eq, %arg1, %c1_i32 : i32
    %179 = arith.extui %178 : i1 to i32
    %c0_i32_77 = arith.constant 0 : i32
    %180 = arith.cmpi ne, %179, %c0_i32_77 : i32
    scf.if %180 {
      %cst_78 = arith.constant dense<0.000000e+00> : vector<2x1xf32>
      %181 = vector.multi_reduction <add>, %0, %cst_78 [2] : vector<2x1x8xf32> to vector<2x1xf32>
      %182 = vector.shape_cast %181 : vector<2x1xf32> to vector<2x1x1xf32>
      %cst_79 = arith.constant 9.99999996E-13 : f32
      %183 = vector.broadcast %cst_79 : f32 to vector<2x1x1xf32>
      %184 = arith.addf %182, %183 : vector<2x1x1xf32>
      %185 = tpu.reciprocal %184 {approx = true} : vector<2x1x1xf32> -> vector<2x1x1xf32>
      %186 = vector.broadcast %185 : vector<2x1x1xf32> to vector<2x1x8xf32>
      %187 = arith.mulf %0, %186 : vector<2x1x8xf32>
      %188 = vector.shape_cast %176 : vector<16x32xf32> to vector<2x8x32xf32>
      %189 = vector.shape_cast %187 : vector<2x1x8xf32> to vector<2x8x1xf32>
      %190 = vector.broadcast %189 : vector<2x8x1xf32> to vector<2x8x32xf32>
      %191 = arith.mulf %188, %190 : vector<2x8x32xf32>
      %cst_80 = arith.constant dense<0.000000e+00> : vector<2x32xf32>
      %192 = vector.multi_reduction <add>, %191, %cst_80 [1] : vector<2x8x32xf32> to vector<2x32xf32>
      %193 = vector.shape_cast %192 : vector<2x32xf32> to vector<2x1x32xf32>
      %c0_81 = arith.constant 0 : index
      %c0_82 = arith.constant 0 : index
      %c0_83 = arith.constant 0 : index
      %194 = vector.load %arg17[%c0_81, %c0_82, %c0_83] : memref<2x1x32xf32, #tpu.memory_space<vmem>>, vector<2x1x32xf32>
      tpu.vector_store %arg17[%c0_81, %c0_82, %c0_83], %193 {strides = array<i32>} : memref<2x1x32xf32, #tpu.memory_space<vmem>>, vector<2x1x32xf32>,
    } else {
    }
    return
  }
  func.func @transform_0(%arg0: i32, %arg1: i32) -> (i32, i32, i32) {
    %c0_i32 = arith.constant 0 : i32
    %c0_i32_0 = arith.constant 0 : i32
    %c0_i32_1 = arith.constant 0 : i32
    return %arg0, %c0_i32, %c0_i32_0 : i32, i32, i32
  }
  func.func @transform_1(%arg0: i32, %arg1: i32) -> (i32, i32, i32) {
    %c0_i32 = arith.constant 0 : i32
    %c0_i32_0 = arith.constant 0 : i32
    %c0_i32_1 = arith.constant 0 : i32
    return %arg0, %c0_i32, %c0_i32_0 : i32, i32, i32
  }
  func.func @transform_2(%arg0: i32, %arg1: i32) -> (i32, i32) {
    %c0_i32 = arith.constant 0 : i32
    %c0_i32_0 = arith.constant 0 : i32
    %c0_i32_1 = arith.constant 0 : i32
    return %c0_i32, %c0_i32_0 : i32, i32
  }
  func.func @transform_3(%arg0: i32, %arg1: i32) -> (i32, i32, i32) {
    %c0_i32 = arith.constant 0 : i32
    %c0_i32_0 = arith.constant 0 : i32
    %c0_i32_1 = arith.constant 0 : i32
    return %arg1, %c0_i32, %c0_i32_0 : i32, i32, i32
  }
  func.func @transform_4(%arg0: i32, %arg1: i32) -> (i32, i32, i32) {
    %c0_i32 = arith.constant 0 : i32
    %c0_i32_0 = arith.constant 0 : i32
    %c0_i32_1 = arith.constant 0 : i32
    return %arg1, %c0_i32, %c0_i32_0 : i32, i32, i32
  }
  func.func @transform_5(%arg0: i32, %arg1: i32) -> (i32, i32, i32) {
    %c0_i32 = arith.constant 0 : i32
    %c0_i32_0 = arith.constant 0 : i32
    %c0_i32_1 = arith.constant 0 : i32
    return %arg1, %c0_i32, %c0_i32_0 : i32, i32, i32
  }
  func.func @transform_6(%arg0: i32, %arg1: i32) -> (i32, i32, i32) {
    %c0_i32 = arith.constant 0 : i32
    %c0_i32_0 = arith.constant 0 : i32
    %c0_i32_1 = arith.constant 0 : i32
    return %arg1, %c0_i32, %c0_i32_0 : i32, i32, i32
  }
  func.func @transform_7(%arg0: i32, %arg1: i32) -> (i32, i32, i32) {
    %c0_i32 = arith.constant 0 : i32
    %c0_i32_0 = arith.constant 0 : i32
    %c0_i32_1 = arith.constant 0 : i32
    return %arg1, %c0_i32, %c0_i32_0 : i32, i32, i32
  }
  func.func @transform_8(%arg0: i32, %arg1: i32) -> (i32, i32, i32) {
    %c0_i32 = arith.constant 0 : i32
    %c0_i32_0 = arith.constant 0 : i32
    %c0_i32_1 = arith.constant 0 : i32
    return %arg1, %c0_i32, %c0_i32_0 : i32, i32, i32
  }
  func.func @transform_9(%arg0: i32, %arg1: i32) -> (i32, i32, i32) {
    %c0_i32 = arith.constant 0 : i32
    %c0_i32_0 = arith.constant 0 : i32
    %c0_i32_1 = arith.constant 0 : i32
    return %arg1, %c0_i32, %c0_i32_0 : i32, i32, i32
  }
  func.func @transform_10(%arg0: i32, %arg1: i32) -> (i32, i32, i32) {
    %c0_i32 = arith.constant 0 : i32
    %c0_i32_0 = arith.constant 0 : i32
    %c0_i32_1 = arith.constant 0 : i32
    return %arg1, %c0_i32, %c0_i32_0 : i32, i32, i32
  }
  func.func @transform_11(%arg0: i32, %arg1: i32) -> (i32, i32, i32) {
    %c0_i32 = arith.constant 0 : i32
    %c0_i32_0 = arith.constant 0 : i32
    %c0_i32_1 = arith.constant 0 : i32
    return %arg1, %c0_i32, %c0_i32_0 : i32, i32, i32
  }
  func.func @transform_12(%arg0: i32, %arg1: i32) -> (i32, i32, i32) {
    %c0_i32 = arith.constant 0 : i32
    %c0_i32_0 = arith.constant 0 : i32
    %c0_i32_1 = arith.constant 0 : i32
    return %arg1, %c0_i32, %c0_i32_0 : i32, i32, i32
  }
  func.func @transform_13(%arg0: i32, %arg1: i32) -> (i32, i32, i32) {
    %c0_i32 = arith.constant 0 : i32
    %c0_i32_0 = arith.constant 0 : i32
    %c0_i32_1 = arith.constant 0 : i32
    return %arg1, %c0_i32, %c0_i32_0 : i32, i32, i32
  }
  func.func @transform_14(%arg0: i32, %arg1: i32) -> (i32, i32, i32) {
    %c0_i32 = arith.constant 0 : i32
    %c0_i32_0 = arith.constant 0 : i32
    %c0_i32_1 = arith.constant 0 : i32
    return %arg1, %c0_i32, %c0_i32_0 : i32, i32, i32
  }
  func.func @transform_15(%arg0: i32, %arg1: i32) -> (i32, i32, i32) {
    %c0_i32 = arith.constant 0 : i32
    %c0_i32_0 = arith.constant 0 : i32
    %c0_i32_1 = arith.constant 0 : i32
    return %arg0, %c0_i32, %c0_i32_0 : i32, i32, i32
  }
}

</mosaic_0001>

<llo_original>
// kernel: tpu_custom_call.1
$region0: #{tpu_custom_call.1}
  #allocation0 [shape = 'u32[]', space=smem, size = 0x4, offset = 0x4, fixed_abs, tag = 'smem constant byte address 0x4 - core index']
  #allocation1 [shape = 'u32[144,128]{1,0:T(1,128)}', space=vmem, size = 0x12000, scoped, tag = 'internal scratch']
  #allocation2 [shape = 'f32[16,32]{1,0:T(8,128)}', space=vmem, size = 0x2000, scoped, tag = 'scratch operand']
  %s0 = inlined_call_operand.vmem [shape: f32[2,8,32], index: 0, kind: input, shape index: {}]
  %s1 = inlined_call_operand.vmem [shape: f32[2,1,8], index: 1, kind: input, shape index: {}]
  %s2 = inlined_call_operand.vmem [shape: f32[8,32], index: 2, kind: input, shape index: {}]
  %s3 = inlined_call_operand.vmem [shape: bf16[2,32,96], index: 3, kind: input, shape index: {}]
  %s4 = inlined_call_operand.vmem [shape: f32[2,1,96], index: 4, kind: input, shape index: {}]
  %s5 = inlined_call_operand.vmem [shape: bf16[2,32,32], index: 5, kind: input, shape index: {}]
  %s6 = inlined_call_operand.vmem [shape: f32[2,1,32], index: 6, kind: input, shape index: {}]
  %s7 = inlined_call_operand.vmem [shape: f32[2,1,32], index: 7, kind: input, shape index: {}]
  %s8 = inlined_call_operand.vmem [shape: f32[2,1,32], index: 8, kind: input, shape index: {}]
  %s9 = inlined_call_operand.vmem [shape: bf16[2,32,2048], index: 9, kind: input, shape index: {}]
  %s10 = inlined_call_operand.vmem [shape: f32[2,1,2048], index: 10, kind: input, shape index: {}]
  %s11 = inlined_call_operand.vmem [shape: bf16[2,2048,32], index: 11, kind: input, shape index: {}]
  %s12 = inlined_call_operand.vmem [shape: f32[2,1,32], index: 12, kind: input, shape index: {}]
  %s13 = inlined_call_operand.vmem [shape: f32[2,1,32], index: 13, kind: input, shape index: {}]
  %s14 = inlined_call_operand.vmem [shape: f32[2,1,32], index: 14, kind: input, shape index: {}]
  %s15 = inlined_call_operand.hbm [shape: f32[2,1,32], index: 15, kind: output, shape index: {}]
  %s16 = sld [smem:[#allocation0]]
  $region101: #{tpu_custom_call.1} parent=0
    _
  %s18 = ssub.s32 1, %s16
  %s19 = scalar_select 0, %s18, %s16
  $region1: #{tpu_custom_call.1} parent=0
    #allocation3 [shape = 'u8[1024]{0}', space=vmem, size = 0x400, scoped, tag = 'output window, operand 0, single buffered']
    #allocation4 [shape = 's32[2]{0}', space=sflag, size = 0x8, scoped, tag = 'scoped memory for tpu_custom_call.1']
    %20 = vsyncpa [#allocation4], 0
    loop: start=0, step=1, limit=4
    $region2: #{tpu_custom_call.1} parent=1 // loop_pre_header
      _
    $region3: #{tpu_custom_call.1} parent=1 // loop_header
      %s22 = sphi 0, %s26
      %p23 = scmp.ge.s32.totalorder %s22, 4
      %s29 = sphi 0, %s41
      %s30 = sphi 0, %s37
      %s31 = sphi 0, %s29
      %s32 = sphi 0, %s30
      %s33 = sphi 0, %s31
      %s34 = sphi 0, %s32
      %s44 = sphi 0, %s46
      %s47 = sphi 0, %s44
      %s48 = sphi 0, %s47
      %s64 = sphi 0, %s48
      %s70 = sphi 0, %s72
      %s73 = sphi 0, %s70
      %s74 = sphi 0, %s73
      %s90 = sphi 0, %s74
      %s94 = sphi 0, %s94
      %s96 = sphi 0, %s94
      %s97 = sphi 0, %s96
      %s111 = sphi 0, %s97
      %s117 = sphi 0, %s119
      %s120 = sphi 0, %s117
      %s121 = sphi 0, %s120
      %s137 = sphi 0, %s121
      %s143 = sphi 0, %s145
      %s146 = sphi 0, %s143
      %s147 = sphi 0, %s146
      %s163 = sphi 0, %s147
      %s169 = sphi 0, %s171
      %s172 = sphi 0, %s169
      %s173 = sphi 0, %s172
      %s189 = sphi 0, %s173
      %s195 = sphi 0, %s197
      %s198 = sphi 0, %s195
      %s199 = sphi 0, %s198
      %s215 = sphi 0, %s199
      %s221 = sphi 0, %s223
      %s224 = sphi 0, %s221
      %s225 = sphi 0, %s224
      %s241 = sphi 0, %s225
      %s247 = sphi 0, %s249
      %s250 = sphi 0, %s247
      %s251 = sphi 0, %s250
      %s267 = sphi 0, %s251
      %s273 = sphi 0, %s275
      %s276 = sphi 0, %s273
      %s277 = sphi 0, %s276
      %s293 = sphi 0, %s277
      %s299 = sphi 0, %s301
      %s302 = sphi 0, %s299
      %s303 = sphi 0, %s302
      %s319 = sphi 0, %s303
      %s325 = sphi 0, %s327
      %s328 = sphi 0, %s325
      %s329 = sphi 0, %s328
      %s345 = sphi 0, %s329
      %s351 = sphi 0, %s353
      %s354 = sphi 0, %s351
      %s355 = sphi 0, %s354
      %s371 = sphi 0, %s355
      %s377 = sphi 0, %s379
      %s380 = sphi 0, %s377
      %s381 = sphi 0, %s380
      %s397 = sphi 0, %s381
      %s403 = sphi 0, %s405
      %s406 = sphi 0, %s403
      %s407 = sphi 0, %s406
      %s423 = sphi 0, %s407
      %s429 = sphi 0, %s431
      %s432 = sphi 0, %s429
      %s433 = sphi 0, %s432
      %s449 = sphi 0, %s433
    $region4: #{tpu_custom_call.1} parent=1 // loop_header_branch
      %25 = sbr.rel (%p23) target = $region8
    $region5: #{tpu_custom_call.1} parent=1 // loop_body
      %s27 = ssub.s32 %s22, 1
      %s28 = ssub.s32 %s22, 2
      %s35 = sadd.s32 1, %s30
      %p36 = scmp.ge.s32.totalorder %s35, 2
      %s37 = scalar_select %p36, 0, %s35
      %s38 = sadd.s32 1, %s29
      %s39 = scalar_select %p36, %s38, %s29
      %p40 = scmp.ge.s32.totalorder %s39, 1
      %s41 = scalar_select %p40, 0, %s39
      %s42 = ssub.s32 %s29, %s41
      %p43 = scmp.eq.s32.totalorder %s42, 0
      %s45 = sadd.s32 %s44, 1
      %s46 = scalar_select %p43, %s44, %s45
      %p49 = pneg %p43
      %p50 = scmp.eq.s32.totalorder %s22, 1
      %p51 = por %p49, %p50
      %p52 = scmp.ne.s32.totalorder %s44, %s47
      %p53 = scmp.eq.s32.totalorder %s22, 0
      %p54 = por %p52, %p53
      %p55 = scmp.ne.s32.totalorder %s44, %s47
      %p56 = scmp.eq.s32.totalorder %s27, 1
      %p57 = por %p55, %p56
      %p58 = scmp.ne.s32.totalorder %s47, %s48
      %p59 = scmp.eq.s32.totalorder %s27, 0
      %p60 = por %p58, %p59
      %p61 = scmp.ne.s32.totalorder %s47, %s48
      %p62 = scmp.eq.s32.totalorder %s28, 1
      %p63 = por %p61, %p62
      %p65 = scmp.ne.s32.totalorder %s48, %s64
      %p66 = scmp.eq.s32.totalorder %s28, 0
      %p67 = por %p65, %p66
      %s68 = ssub.s32 %s29, %s41
      %p69 = scmp.eq.s32.totalorder %s68, 0
      %s71 = sadd.s32 %s70, 1
      %s72 = scalar_select %p69, %s70, %s71
      %p75 = pneg %p69
      %p76 = scmp.eq.s32.totalorder %s22, 1
      %p77 = por %p75, %p76
      %p78 = scmp.ne.s32.totalorder %s70, %s73
      %p79 = scmp.eq.s32.totalorder %s22, 0
      %p80 = por %p78, %p79
      %p81 = scmp.ne.s32.totalorder %s70, %s73
      %p82 = scmp.eq.s32.totalorder %s27, 1
      %p83 = por %p81, %p82
      %p84 = scmp.ne.s32.totalorder %s73, %s74
      %p85 = scmp.eq.s32.totalorder %s27, 0
      %p86 = por %p84, %p85
      %p87 = scmp.ne.s32.totalorder %s73, %s74
      %p88 = scmp.eq.s32.totalorder %s28, 1
      %p89 = por %p87, %p88
      %p91 = scmp.ne.s32.totalorder %s74, %s90
      %p92 = scmp.eq.s32.totalorder %s28, 0
      %p93 = por %p91, %p92
      %s95 = sadd.s32 %s94, 1
      %p98 = scmp.eq.s32.totalorder %s22, 1
      %p99 = scmp.ne.s32.totalorder %s94, %s96
      %p100 = scmp.eq.s32.totalorder %s22, 0
      %p101 = por %p99, %p100
      %p102 = scmp.ne.s32.totalorder %s94, %s96
      %p103 = scmp.eq.s32.totalorder %s27, 1
      %p104 = por %p102, %p103
      %p105 = scmp.ne.s32.totalorder %s96, %s97
      %p106 = scmp.eq.s32.totalorder %s27, 0
      %p107 = por %p105, %p106
      %p108 = scmp.ne.s32.totalorder %s96, %s97
      %p109 = scmp.eq.s32.totalorder %s28, 1
      %p110 = por %p108, %p109
      %p112 = scmp.ne.s32.totalorder %s97, %s111
      %p113 = scmp.eq.s32.totalorder %s28, 0
      %p114 = por %p112, %p113
      %s115 = ssub.s32 %s30, %s37
      %p116 = scmp.eq.s32.totalorder %s115, 0
      %s118 = sadd.s32 %s117, 1
      %s119 = scalar_select %p116, %s117, %s118
      %p122 = pneg %p116
      %p123 = scmp.eq.s32.totalorder %s22, 1
      %p124 = por %p122, %p123
      %p125 = scmp.ne.s32.totalorder %s117, %s120
      %p126 = scmp.eq.s32.totalorder %s22, 0
      %p127 = por %p125, %p126
      %p128 = scmp.ne.s32.totalorder %s117, %s120
      %p129 = scmp.eq.s32.totalorder %s27, 1
      %p130 = por %p128, %p129
      %p131 = scmp.ne.s32.totalorder %s120, %s121
      %p132 = scmp.eq.s32.totalorder %s27, 0
      %p133 = por %p131, %p132
      %p134 = scmp.ne.s32.totalorder %s120, %s121
      %p135 = scmp.eq.s32.totalorder %s28, 1
      %p136 = por %p134, %p135
      %p138 = scmp.ne.s32.totalorder %s121, %s137
      %p139 = scmp.eq.s32.totalorder %s28, 0
      %p140 = por %p138, %p139
      %s141 = ssub.s32 %s30, %s37
      %p142 = scmp.eq.s32.totalorder %s141, 0
      %s144 = sadd.s32 %s143, 1
      %s145 = scalar_select %p142, %s143, %s144
      %p148 = pneg %p142
      %p149 = scmp.eq.s32.totalorder %s22, 1
      %p150 = por %p148, %p149
      %p151 = scmp.ne.s32.totalorder %s143, %s146
      %p152 = scmp.eq.s32.totalorder %s22, 0
      %p153 = por %p151, %p152
      %p154 = scmp.ne.s32.totalorder %s143, %s146
      %p155 = scmp.eq.s32.totalorder %s27, 1
      %p156 = por %p154, %p155
      %p157 = scmp.ne.s32.totalorder %s146, %s147
      %p158 = scmp.eq.s32.totalorder %s27, 0
      %p159 = por %p157, %p158
      %p160 = scmp.ne.s32.totalorder %s146, %s147
      %p161 = scmp.eq.s32.totalorder %s28, 1
      %p162 = por %p160, %p161
      %p164 = scmp.ne.s32.totalorder %s147, %s163
      %p165 = scmp.eq.s32.totalorder %s28, 0
      %p166 = por %p164, %p165
      %s167 = ssub.s32 %s30, %s37
      %p168 = scmp.eq.s32.totalorder %s167, 0
      %s170 = sadd.s32 %s169, 1
      %s171 = scalar_select %p168, %s169, %s170
      %p174 = pneg %p168
      %p175 = scmp.eq.s32.totalorder %s22, 1
      %p176 = por %p174, %p175
      %p177 = scmp.ne.s32.totalorder %s169, %s172
      %p178 = scmp.eq.s32.totalorder %s22, 0
      %p179 = por %p177, %p178
      %p180 = scmp.ne.s32.totalorder %s169, %s172
      %p181 = scmp.eq.s32.totalorder %s27, 1
      %p182 = por %p180, %p181
      %p183 = scmp.ne.s32.totalorder %s172, %s173
      %p184 = scmp.eq.s32.totalorder %s27, 0
      %p185 = por %p183, %p184
      %p186 = scmp.ne.s32.totalorder %s172, %s173
      %p187 = scmp.eq.s32.totalorder %s28, 1
      %p188 = por %p186, %p187
      %p190 = scmp.ne.s32.totalorder %s173, %s189
      %p191 = scmp.eq.s32.totalorder %s28, 0
      %p192 = por %p190, %p191
      %s193 = ssub.s32 %s30, %s37
      %p194 = scmp.eq.s32.totalorder %s193, 0
      %s196 = sadd.s32 %s195, 1
      %s197 = scalar_select %p194, %s195, %s196
      %p200 = pneg %p194
      %p201 = scmp.eq.s32.totalorder %s22, 1
      %p202 = por %p200, %p201
      %p203 = scmp.ne.s32.totalorder %s195, %s198
      %p204 = scmp.eq.s32.totalorder %s22, 0
      %p205 = por %p203, %p204
      %p206 = scmp.ne.s32.totalorder %s195, %s198
      %p207 = scmp.eq.s32.totalorder %s27, 1
      %p208 = por %p206, %p207
      %p209 = scmp.ne.s32.totalorder %s198, %s199
      %p210 = scmp.eq.s32.totalorder %s27, 0
      %p211 = por %p209, %p210
      %p212 = scmp.ne.s32.totalorder %s198, %s199
      %p213 = scmp.eq.s32.totalorder %s28, 1
      %p214 = por %p212, %p213
      %p216 = scmp.ne.s32.totalorder %s199, %s215
      %p217 = scmp.eq.s32.totalorder %s28, 0
      %p218 = por %p216, %p217
      %s219 = ssub.s32 %s30, %s37
      %p220 = scmp.eq.s32.totalorder %s219, 0
      %s222 = sadd.s32 %s221, 1
      %s223 = scalar_select %p220, %s221, %s222
      %p226 = pneg %p220
      %p227 = scmp.eq.s32.totalorder %s22, 1
      %p228 = por %p226, %p227
      %p229 = scmp.ne.s32.totalorder %s221, %s224
      %p230 = scmp.eq.s32.totalorder %s22, 0
      %p231 = por %p229, %p230
      %p232 = scmp.ne.s32.totalorder %s221, %s224
      %p233 = scmp.eq.s32.totalorder %s27, 1
      %p234 = por %p232, %p233
      %p235 = scmp.ne.s32.totalorder %s224, %s225
      %p236 = scmp.eq.s32.totalorder %s27, 0
      %p237 = por %p235, %p236
      %p238 = scmp.ne.s32.totalorder %s224, %s225
      %p239 = scmp.eq.s32.totalorder %s28, 1
      %p240 = por %p238, %p239
      %p242 = scmp.ne.s32.totalorder %s225, %s241
      %p243 = scmp.eq.s32.totalorder %s28, 0
      %p244 = por %p242, %p243
      %s245 = ssub.s32 %s30, %s37
      %p246 = scmp.eq.s32.totalorder %s245, 0
      %s248 = sadd.s32 %s247, 1
      %s249 = scalar_select %p246, %s247, %s248
      %p252 = pneg %p246
      %p253 = scmp.eq.s32.totalorder %s22, 1
      %p254 = por %p252, %p253
      %p255 = scmp.ne.s32.totalorder %s247, %s250
      %p256 = scmp.eq.s32.totalorder %s22, 0
      %p257 = por %p255, %p256
      %p258 = scmp.ne.s32.totalorder %s247, %s250
      %p259 = scmp.eq.s32.totalorder %s27, 1
      %p260 = por %p258, %p259
      %p261 = scmp.ne.s32.totalorder %s250, %s251
      %p262 = scmp.eq.s32.totalorder %s27, 0
      %p263 = por %p261, %p262
      %p264 = scmp.ne.s32.totalorder %s250, %s251
      %p265 = scmp.eq.s32.totalorder %s28, 1
      %p266 = por %p264, %p265
      %p268 = scmp.ne.s32.totalorder %s251, %s267
      %p269 = scmp.eq.s32.totalorder %s28, 0
      %p270 = por %p268, %p269
      %s271 = ssub.s32 %s30, %s37
      %p272 = scmp.eq.s32.totalorder %s271, 0
      %s274 = sadd.s32 %s273, 1
      %s275 = scalar_select %p272, %s273, %s274
      %p278 = pneg %p272
      %p279 = scmp.eq.s32.totalorder %s22, 1
      %p280 = por %p278, %p279
      %p281 = scmp.ne.s32.totalorder %s273, %s276
      %p282 = scmp.eq.s32.totalorder %s22, 0
      %p283 = por %p281, %p282
      %p284 = scmp.ne.s32.totalorder %s273, %s276
      %p285 = scmp.eq.s32.totalorder %s27, 1
      %p286 = por %p284, %p285
      %p287 = scmp.ne.s32.totalorder %s276, %s277
      %p288 = scmp.eq.s32.totalorder %s27, 0
      %p289 = por %p287, %p288
      %p290 = scmp.ne.s32.totalorder %s276, %s277
      %p291 = scmp.eq.s32.totalorder %s28, 1
      %p292 = por %p290, %p291
      %p294 = scmp.ne.s32.totalorder %s277, %s293
      %p295 = scmp.eq.s32.totalorder %s28, 0
      %p296 = por %p294, %p295
      %s297 = ssub.s32 %s30, %s37
      %p298 = scmp.eq.s32.totalorder %s297, 0
      %s300 = sadd.s32 %s299, 1
      %s301 = scalar_select %p298, %s299, %s300
      %p304 = pneg %p298
      %p305 = scmp.eq.s32.totalorder %s22, 1
      %p306 = por %p304, %p305
      %p307 = scmp.ne.s32.totalorder %s299, %s302
      %p308 = scmp.eq.s32.totalorder %s22, 0
      %p309 = por %p307, %p308
      %p310 = scmp.ne.s32.totalorder %s299, %s302
      %p311 = scmp.eq.s32.totalorder %s27, 1
      %p312 = por %p310, %p311
      %p313 = scmp.ne.s32.totalorder %s302, %s303
      %p314 = scmp.eq.s32.totalorder %s27, 0
      %p315 = por %p313, %p314
      %p316 = scmp.ne.s32.totalorder %s302, %s303
      %p317 = scmp.eq.s32.totalorder %s28, 1
      %p318 = por %p316, %p317
      %p320 = scmp.ne.s32.totalorder %s303, %s319
      %p321 = scmp.eq.s32.totalorder %s28, 0
      %p322 = por %p320, %p321
      %s323 = ssub.s32 %s30, %s37
      %p324 = scmp.eq.s32.totalorder %s323, 0
      %s326 = sadd.s32 %s325, 1
      %s327 = scalar_select %p324, %s325, %s326
      %p330 = pneg %p324
      %p331 = scmp.eq.s32.totalorder %s22, 1
      %p332 = por %p330, %p331
      %p333 = scmp.ne.s32.totalorder %s325, %s328
      %p334 = scmp.eq.s32.totalorder %s22, 0
      %p335 = por %p333, %p334
      %p336 = scmp.ne.s32.totalorder %s325, %s328
      %p337 = scmp.eq.s32.totalorder %s27, 1
      %p338 = por %p336, %p337
      %p339 = scmp.ne.s32.totalorder %s328, %s329
      %p340 = scmp.eq.s32.totalorder %s27, 0
      %p341 = por %p339, %p340
      %p342 = scmp.ne.s32.totalorder %s328, %s329
      %p343 = scmp.eq.s32.totalorder %s28, 1
      %p344 = por %p342, %p343
      %p346 = scmp.ne.s32.totalorder %s329, %s345
      %p347 = scmp.eq.s32.totalorder %s28, 0
      %p348 = por %p346, %p347
      %s349 = ssub.s32 %s30, %s37
      %p350 = scmp.eq.s32.totalorder %s349, 0
      %s352 = sadd.s32 %s351, 1
      %s353 = scalar_select %p350, %s351, %s352
      %p356 = pneg %p350
      %p357 = scmp.eq.s32.totalorder %s22, 1
      %p358 = por %p356, %p357
      %p359 = scmp.ne.s32.totalorder %s351, %s354
      %p360 = scmp.eq.s32.totalorder %s22, 0
      %p361 = por %p359, %p360
      %p362 = scmp.ne.s32.totalorder %s351, %s354
      %p363 = scmp.eq.s32.totalorder %s27, 1
      %p364 = por %p362, %p363
      %p365 = scmp.ne.s32.totalorder %s354, %s355
      %p366 = scmp.eq.s32.totalorder %s27, 0
      %p367 = por %p365, %p366
      %p368 = scmp.ne.s32.totalorder %s354, %s355
      %p369 = scmp.eq.s32.totalorder %s28, 1
      %p370 = por %p368, %p369
      %p372 = scmp.ne.s32.totalorder %s355, %s371
      %p373 = scmp.eq.s32.totalorder %s28, 0
      %p374 = por %p372, %p373
      %s375 = ssub.s32 %s30, %s37
      %p376 = scmp.eq.s32.totalorder %s375, 0
      %s378 = sadd.s32 %s377, 1
      %s379 = scalar_select %p376, %s377, %s378
      %p382 = pneg %p376
      %p383 = scmp.eq.s32.totalorder %s22, 1
      %p384 = por %p382, %p383
      %p385 = scmp.ne.s32.totalorder %s377, %s380
      %p386 = scmp.eq.s32.totalorder %s22, 0
      %p387 = por %p385, %p386
      %p388 = scmp.ne.s32.totalorder %s377, %s380
      %p389 = scmp.eq.s32.totalorder %s27, 1
      %p390 = por %p388, %p389
      %p391 = scmp.ne.s32.totalorder %s380, %s381
      %p392 = scmp.eq.s32.totalorder %s27, 0
      %p393 = por %p391, %p392
      %p394 = scmp.ne.s32.totalorder %s380, %s381
      %p395 = scmp.eq.s32.totalorder %s28, 1
      %p396 = por %p394, %p395
      %p398 = scmp.ne.s32.totalorder %s381, %s397
      %p399 = scmp.eq.s32.totalorder %s28, 0
      %p400 = por %p398, %p399
      %s401 = ssub.s32 %s30, %s37
      %p402 = scmp.eq.s32.totalorder %s401, 0
      %s404 = sadd.s32 %s403, 1
      %s405 = scalar_select %p402, %s403, %s404
      %p408 = pneg %p402
      %p409 = scmp.eq.s32.totalorder %s22, 1
      %p410 = por %p408, %p409
      %p411 = scmp.ne.s32.totalorder %s403, %s406
      %p412 = scmp.eq.s32.totalorder %s22, 0
      %p413 = por %p411, %p412
      %p414 = scmp.ne.s32.totalorder %s403, %s406
      %p415 = scmp.eq.s32.totalorder %s27, 1
      %p416 = por %p414, %p415
      %p417 = scmp.ne.s32.totalorder %s406, %s407
      %p418 = scmp.eq.s32.totalorder %s27, 0
      %p419 = por %p417, %p418
      %p420 = scmp.ne.s32.totalorder %s406, %s407
      %p421 = scmp.eq.s32.totalorder %s28, 1
      %p422 = por %p420, %p421
      %p424 = scmp.ne.s32.totalorder %s407, %s423
      %p425 = scmp.eq.s32.totalorder %s28, 0
      %p426 = por %p424, %p425
      %s427 = ssub.s32 %s29, %s41
      %p428 = scmp.eq.s32.totalorder %s427, 0
      %s430 = sadd.s32 %s429, 1
      %s431 = scalar_select %p428, %s429, %s430
      %p434 = pneg %p428
      %p435 = scmp.eq.s32.totalorder %s22, 1
      %p436 = por %p434, %p435
      %p437 = scmp.ne.s32.totalorder %s429, %s432
      %p438 = scmp.eq.s32.totalorder %s22, 0
      %p439 = por %p437, %p438
      %p440 = scmp.ne.s32.totalorder %s429, %s432
      %p441 = scmp.eq.s32.totalorder %s27, 1
      %p442 = por %p440, %p441
      %p443 = scmp.ne.s32.totalorder %s432, %s433
      %p444 = scmp.eq.s32.totalorder %s27, 0
      %p445 = por %p443, %p444
      %p446 = scmp.ne.s32.totalorder %s432, %s433
      %p447 = scmp.eq.s32.totalorder %s28, 1
      %p448 = por %p446, %p447
      %p450 = scmp.ne.s32.totalorder %s433, %s449
      %p451 = scmp.eq.s32.totalorder %s28, 0
      %p452 = por %p450, %p451
      %p453 = scmp.le.s32.totalorder 1, %s22
      %p454 = scmp.lt.s32.totalorder %s22, 3
      %p455 = pnand %p453, %p454
      %p456 = pneg %p455
      // Predicated region
      $region9: #{tpu_custom_call.1} parent=5 // pred_check
        _
      $region10: #{tpu_custom_call.1} parent=5 // pred_check_branch
        %458 = sbr.rel (%p455) target = $region12
      $region11: #{tpu_custom_call.1} parent=5 // pred_region
        %s459 = ssub.s32 %s22, 1
        // Predicated region
        $region13: #{tpu_custom_call.1} parent=11 // pred_check
          %p460 = pneg %p60
        $region14: #{tpu_custom_call.1} parent=11 // pred_check_branch
          %462 = sbr.rel (%p460) target = $region16
        $region15: #{tpu_custom_call.1} parent=11 // pred_region
          %s463 = smul.u32 2, %s31
          %p464 = scmp.lt.s32.totalorder %s463, 1
          %s465 = scalar_select %p464, %s463, 1
          %s466 = smul.addr %s465, 8
          %s467 = scalar_lea.vmem %s0, %s466
          %s468 = smul.u32 2, %s31
        $region16: #{tpu_custom_call.1} parent=11 // pred_fallthru
          _
        // Predicated region
        $region17: #{tpu_custom_call.1} parent=11 // pred_check
          %p469 = pneg %p86
        $region18: #{tpu_custom_call.1} parent=11 // pred_check_branch
          %471 = sbr.rel (%p469) target = $region20
        $region19: #{tpu_custom_call.1} parent=11 // pred_region
          %s472 = smul.u32 2, %s31
          %p473 = scmp.lt.s32.totalorder %s472, 1
          %s474 = scalar_select %p473, %s472, 1
          %s475 = scalar_lea.vmem %s1, %s474
          %s476 = smul.u32 2, %s31
        $region20: #{tpu_custom_call.1} parent=11 // pred_fallthru
          _
        // Predicated region
        $region21: #{tpu_custom_call.1} parent=11 // pred_check
          %p477 = pneg %p107
        $region22: #{tpu_custom_call.1} parent=11 // pred_check_branch
          %479 = sbr.rel (%p477) target = $region24
        $region23: #{tpu_custom_call.1} parent=11 // pred_region
          _
        $region24: #{tpu_custom_call.1} parent=11 // pred_fallthru
          _
      $region12: #{tpu_custom_call.1} parent=5 // pred_fallthru
        _
      %p480 = scmp.lt.s32.totalorder %s22, 2
      // Predicated region
      $region25: #{tpu_custom_call.1} parent=5 // pred_check
        %p481 = pneg %p480
      $region26: #{tpu_custom_call.1} parent=5 // pred_check_branch
        %483 = sbr.rel (%p481) target = $region28
      $region27: #{tpu_custom_call.1} parent=5 // pred_region
        // Predicated region
        $region29: #{tpu_custom_call.1} parent=27 // pred_check
          %p484 = pneg %p127
        $region30: #{tpu_custom_call.1} parent=27 // pred_check_branch
          %486 = sbr.rel (%p484) target = $region32
        $region31: #{tpu_custom_call.1} parent=27 // pred_region
          %p487 = scmp.lt.s32.totalorder %s30, 1
          %s488 = scalar_select %p487, %s30, 1
          %s489 = smul.addr %s488, 4
          %s490 = smul.addr %s489, 4
          %s491 = scalar_lea.vmem %s3, %s490
        $region32: #{tpu_custom_call.1} parent=27 // pred_fallthru
          _
        // Predicated region
        $region33: #{tpu_custom_call.1} parent=27 // pred_check
          %p492 = pneg %p153
        $region34: #{tpu_custom_call.1} parent=27 // pred_check_branch
          %494 = sbr.rel (%p492) target = $region36
        $region35: #{tpu_custom_call.1} parent=27 // pred_region
          %p495 = scmp.lt.s32.totalorder %s30, 1
          %s496 = scalar_select %p495, %s30, 1
          %s497 = scalar_lea.vmem %s4, %s496
        $region36: #{tpu_custom_call.1} parent=27 // pred_fallthru
          _
        // Predicated region
        $region37: #{tpu_custom_call.1} parent=27 // pred_check
          %p498 = pneg %p179
        $region38: #{tpu_custom_call.1} parent=27 // pred_check_branch
          %500 = sbr.rel (%p498) target = $region40
        $region39: #{tpu_custom_call.1} parent=27 // pred_region
          %p501 = scmp.lt.s32.totalorder %s30, 1
          %s502 = scalar_select %p501, %s30, 1
          %s503 = smul.addr %s502, 4
          %s504 = smul.addr %s503, 4
          %s505 = scalar_lea.vmem %s5, %s504
        $region40: #{tpu_custom_call.1} parent=27 // pred_fallthru
          _
        // Predicated region
        $region41: #{tpu_custom_call.1} parent=27 // pred_check
          %p506 = pneg %p205
        $region42: #{tpu_custom_call.1} parent=27 // pred_check_branch
          %508 = sbr.rel (%p506) target = $region44
        $region43: #{tpu_custom_call.1} parent=27 // pred_region
          %p509 = scmp.lt.s32.totalorder %s30, 1
          %s510 = scalar_select %p509, %s30, 1
          %s511 = scalar_lea.vmem %s6, %s510
        $region44: #{tpu_custom_call.1} parent=27 // pred_fallthru
          _
        // Predicated region
        $region45: #{tpu_custom_call.1} parent=27 // pred_check
          %p512 = pneg %p231
        $region46: #{tpu_custom_call.1} parent=27 // pred_check_branch
          %514 = sbr.rel (%p512) target = $region48
        $region47: #{tpu_custom_call.1} parent=27 // pred_region
          %p515 = scmp.lt.s32.totalorder %s30, 1
          %s516 = scalar_select %p515, %s30, 1
          %s517 = scalar_lea.vmem %s7, %s516
        $region48: #{tpu_custom_call.1} parent=27 // pred_fallthru
          _
        // Predicated region
        $region49: #{tpu_custom_call.1} parent=27 // pred_check
          %p518 = pneg %p257
        $region50: #{tpu_custom_call.1} parent=27 // pred_check_branch
          %520 = sbr.rel (%p518) target = $region52
        $region51: #{tpu_custom_call.1} parent=27 // pred_region
          %p521 = scmp.lt.s32.totalorder %s30, 1
          %s522 = scalar_select %p521, %s30, 1
          %s523 = scalar_lea.vmem %s8, %s522
        $region52: #{tpu_custom_call.1} parent=27 // pred_fallthru
          _
        // Predicated region
        $region53: #{tpu_custom_call.1} parent=27 // pred_check
          %p524 = pneg %p283
        $region54: #{tpu_custom_call.1} parent=27 // pred_check_branch
          %526 = sbr.rel (%p524) target = $region56
        $region55: #{tpu_custom_call.1} parent=27 // pred_region
          %p527 = scmp.lt.s32.totalorder %s30, 1
          %s528 = scalar_select %p527, %s30, 1
          %s529 = smul.addr %s528, 64
          %s530 = smul.addr %s529, 4
          %s531 = scalar_lea.vmem %s9, %s530
        $region56: #{tpu_custom_call.1} parent=27 // pred_fallthru
          _
        // Predicated region
        $region57: #{tpu_custom_call.1} parent=27 // pred_check
          %p532 = pneg %p309
        $region58: #{tpu_custom_call.1} parent=27 // pred_check_branch
          %534 = sbr.rel (%p532) target = $region60
        $region59: #{tpu_custom_call.1} parent=27 // pred_region
          %p535 = scmp.lt.s32.totalorder %s30, 1
          %s536 = scalar_select %p535, %s30, 1
          %s537 = smul.addr %s536, 16
          %s538 = scalar_lea.vmem %s10, %s537
        $region60: #{tpu_custom_call.1} parent=27 // pred_fallthru
          _
        // Predicated region
        $region61: #{tpu_custom_call.1} parent=27 // pred_check
          %p539 = pneg %p335
        $region62: #{tpu_custom_call.1} parent=27 // pred_check_branch
          %541 = sbr.rel (%p539) target = $region64
        $region63: #{tpu_custom_call.1} parent=27 // pred_region
          %p542 = scmp.lt.s32.totalorder %s30, 1
          %s543 = scalar_select %p542, %s30, 1
          %s544 = smul.addr %s543, 256
          %s545 = smul.addr %s544, 4
          %s546 = scalar_lea.vmem %s11, %s545
        $region64: #{tpu_custom_call.1} parent=27 // pred_fallthru
          _
        // Predicated region
        $region65: #{tpu_custom_call.1} parent=27 // pred_check
          %p547 = pneg %p361
        $region66: #{tpu_custom_call.1} parent=27 // pred_check_branch
          %549 = sbr.rel (%p547) target = $region68
        $region67: #{tpu_custom_call.1} parent=27 // pred_region
          %p550 = scmp.lt.s32.totalorder %s30, 1
          %s551 = scalar_select %p550, %s30, 1
          %s552 = scalar_lea.vmem %s12, %s551
        $region68: #{tpu_custom_call.1} parent=27 // pred_fallthru
          _
        // Predicated region
        $region69: #{tpu_custom_call.1} parent=27 // pred_check
          %p553 = pneg %p387
        $region70: #{tpu_custom_call.1} parent=27 // pred_check_branch
          %555 = sbr.rel (%p553) target = $region72
        $region71: #{tpu_custom_call.1} parent=27 // pred_region
          %p556 = scmp.lt.s32.totalorder %s30, 1
          %s557 = scalar_select %p556, %s30, 1
          %s558 = scalar_lea.vmem %s13, %s557
        $region72: #{tpu_custom_call.1} parent=27 // pred_fallthru
          _
        // Predicated region
        $region73: #{tpu_custom_call.1} parent=27 // pred_check
          %p559 = pneg %p413
        $region74: #{tpu_custom_call.1} parent=27 // pred_check_branch
          %561 = sbr.rel (%p559) target = $region76
        $region75: #{tpu_custom_call.1} parent=27 // pred_region
          %p562 = scmp.lt.s32.totalorder %s30, 1
          %s563 = scalar_select %p562, %s30, 1
          %s564 = scalar_lea.vmem %s14, %s563
        $region76: #{tpu_custom_call.1} parent=27 // pred_fallthru
          _
      $region28: #{tpu_custom_call.1} parent=5 // pred_fallthru
        _
      %p565 = scmp.le.s32.totalorder 1, %s22
      %p566 = scmp.lt.s32.totalorder %s22, 3
      %p567 = pnand %p565, %p566
      %p568 = pneg %p567
      // Predicated region
      $region77: #{tpu_custom_call.1} parent=5 // pred_check
        _
      $region78: #{tpu_custom_call.1} parent=5 // pred_check_branch
        %570 = sbr.rel (%p567) target = $region80
      $region79: #{tpu_custom_call.1} parent=5 // pred_region
        %s571 = ssub.s32 %s22, 1
        %s572 = smul.u32 2, %s31
        %p573 = scmp.lt.s32.totalorder %s572, 1
        %s574 = scalar_select %p573, %s572, 1
        %s575 = smul.addr %s574, 8
        %s576 = scalar_lea.vmem %s0, %s575
        %p577 = pneg %p60
        %p578 = pneg %p57
        %s579 = smul.u32 2, %s31
        %p580 = scmp.lt.s32.totalorder %s579, 1
        %s581 = scalar_select %p580, %s579, 1
        %s582 = scalar_lea.vmem %s1, %s581
        %p583 = pneg %p86
        %p584 = pneg %p83
        %p585 = pneg %p107
        %p586 = pneg %p104
        %p587 = scmp.lt.s32.totalorder %s32, 1
        %s588 = scalar_select %p587, %s32, 1
        %s589 = smul.addr %s588, 4
        %s590 = smul.addr %s589, 4
        %s591 = scalar_lea.vmem %s3, %s590
        %p592 = pneg %p133
        %p593 = pneg %p130
        %p594 = scmp.lt.s32.totalorder %s32, 1
        %s595 = scalar_select %p594, %s32, 1
        %s596 = scalar_lea.vmem %s4, %s595
        %p597 = pneg %p159
        %p598 = pneg %p156
        %p599 = scmp.lt.s32.totalorder %s32, 1
        %s600 = scalar_select %p599, %s32, 1
        %s601 = smul.addr %s600, 4
        %s602 = smul.addr %s601, 4
        %s603 = scalar_lea.vmem %s5, %s602
        %p604 = pneg %p185
        %p605 = pneg %p182
        %p606 = scmp.lt.s32.totalorder %s32, 1
        %s607 = scalar_select %p606, %s32, 1
        %s608 = scalar_lea.vmem %s6, %s607
        %p609 = pneg %p211
        %p610 = pneg %p208
        %p611 = scmp.lt.s32.totalorder %s32, 1
        %s612 = scalar_select %p611, %s32, 1
        %s613 = scalar_lea.vmem %s7, %s612
        %p614 = pneg %p237
        %p615 = pneg %p234
        %p616 = scmp.lt.s32.totalorder %s32, 1
        %s617 = scalar_select %p616, %s32, 1
        %s618 = scalar_lea.vmem %s8, %s617
        %p619 = pneg %p263
        %p620 = pneg %p260
        %p621 = scmp.lt.s32.totalorder %s32, 1
        %s622 = scalar_select %p621, %s32, 1
        %s623 = smul.addr %s622, 64
        %s624 = smul.addr %s623, 4
        %s625 = scalar_lea.vmem %s9, %s624
        %p626 = pneg %p289
        %p627 = pneg %p286
        %p628 = scmp.lt.s32.totalorder %s32, 1
        %s629 = scalar_select %p628, %s32, 1
        %s630 = smul.addr %s629, 16
        %s631 = scalar_lea.vmem %s10, %s630
        %p632 = pneg %p315
        %p633 = pneg %p312
        %p634 = scmp.lt.s32.totalorder %s32, 1
        %s635 = scalar_select %p634, %s32, 1
        %s636 = smul.addr %s635, 256
        %s637 = smul.addr %s636, 4
        %s638 = scalar_lea.vmem %s11, %s637
        %p639 = pneg %p341
        %p640 = pneg %p338
        %p641 = scmp.lt.s32.totalorder %s32, 1
        %s642 = scalar_select %p641, %s32, 1
        %s643 = scalar_lea.vmem %s12, %s642
        %p644 = pneg %p367
        %p645 = pneg %p364
        %p646 = scmp.lt.s32.totalorder %s32, 1
        %s647 = scalar_select %p646, %s32, 1
        %s648 = scalar_lea.vmem %s13, %s647
        %p649 = pneg %p393
        %p650 = pneg %p390
        %p651 = scmp.lt.s32.totalorder %s32, 1
        %s652 = scalar_select %p651, %s32, 1
        %s653 = scalar_lea.vmem %s14, %s652
        %p654 = pneg %p419
        %p655 = pneg %p416
        %p656 = pneg %p445
        %p657 = pneg %p442
        %s658 = smul.u32 2, %s31
        %p659 = scmp.lt.s32.totalorder %s658, 1
        %s660 = scalar_select %p659, %s658, 1
        %s661 = smul.addr %s660, 8
        %s662 = scalar_lea.vmem %s0, %s661
        %s663 = smul.u32 2, %s31
        %s664 = smul.u32 2, %s31
        %p665 = scmp.lt.s32.totalorder %s664, 1
        %s666 = scalar_select %p665, %s664, 1
        %s667 = scalar_lea.vmem %s1, %s666
        %s668 = smul.u32 2, %s31
        %p669 = scmp.lt.s32.totalorder %s32, 1
        %s670 = scalar_select %p669, %s32, 1
        %s671 = smul.addr %s670, 4
        %s672 = smul.addr %s671, 4
        %s673 = scalar_lea.vmem %s3, %s672
        %p674 = scmp.lt.s32.totalorder %s32, 1
        %s675 = scalar_select %p674, %s32, 1
        %s676 = scalar_lea.vmem %s4, %s675
        %p677 = scmp.lt.s32.totalorder %s32, 1
        %s678 = scalar_select %p677, %s32, 1
        %s679 = smul.addr %s678, 4
        %s680 = smul.addr %s679, 4
        %s681 = scalar_lea.vmem %s5, %s680
        %p682 = scmp.lt.s32.totalorder %s32, 1
        %s683 = scalar_select %p682, %s32, 1
        %s684 = scalar_lea.vmem %s6, %s683
        %p685 = scmp.lt.s32.totalorder %s32, 1
        %s686 = scalar_select %p685, %s32, 1
        %s687 = scalar_lea.vmem %s7, %s686
        %p688 = scmp.lt.s32.totalorder %s32, 1
        %s689 = scalar_select %p688, %s32, 1
        %s690 = scalar_lea.vmem %s8, %s689
        %p691 = scmp.lt.s32.totalorder %s32, 1
        %s692 = scalar_select %p691, %s32, 1
        %s693 = smul.addr %s692, 64
        %s694 = smul.addr %s693, 4
        %s695 = scalar_lea.vmem %s9, %s694
        %p696 = scmp.lt.s32.totalorder %s32, 1
        %s697 = scalar_select %p696, %s32, 1
        %s698 = smul.addr %s697, 16
        %s699 = scalar_lea.vmem %s10, %s698
        %p700 = scmp.lt.s32.totalorder %s32, 1
        %s701 = scalar_select %p700, %s32, 1
        %s702 = smul.addr %s701, 256
        %s703 = smul.addr %s702, 4
        %s704 = scalar_lea.vmem %s11, %s703
        %p705 = scmp.lt.s32.totalorder %s32, 1
        %s706 = scalar_select %p705, %s32, 1
        %s707 = scalar_lea.vmem %s12, %s706
        %p708 = scmp.lt.s32.totalorder %s32, 1
        %s709 = scalar_select %p708, %s32, 1
        %s710 = scalar_lea.vmem %s13, %s709
        %p711 = scmp.lt.s32.totalorder %s32, 1
        %s712 = scalar_select %p711, %s32, 1
        %s713 = scalar_lea.vmem %s14, %s712
        %s714 = smul.u32 2, %s31
        %v716 = vld [vmem:[%s667] sm:$0x1]
        %v717 = vld [vmem:[%s667 + $0x1] sm:$0x1]
        %vm718 = vcmp.gt.f32.partialorder %v716, 0.5
        %vm719 = vcmp.gt.f32.partialorder %v717, 0.5
        %v720 = vsel %vm718, 0.0, -1e+30
        %v721 = vsel %vm719, 0.0, -1e+30
        %p722 = scmp.eq.s32.totalorder %s32, 0
        // Predicated region
        $region81: #{tpu_custom_call.1} parent=79 // pred_check
          %p723 = pneg %p722
        $region82: #{tpu_custom_call.1} parent=79 // pred_check_branch
          %725 = sbr.rel (%p723) target = $region84
        $region83: #{tpu_custom_call.1} parent=79 // pred_region
          %v726 = vld [vmem:[%s662] sm:$0xff]
          %v727 = vld [vmem:[%s662 + $0x8] sm:$0xff]
          %v728 = vld [vmem:[%s2] sm:$0xff]
          %v729 = vadd.f32 %v726, %v728
          %v730 = vadd.f32 %v727, %v728
          %vm731 = vcmask 261120
          %732 = vst.msk [vmem:[#allocation2] sm:$0xff] %vm731, %v729
          %733 = vst.msk [vmem:[#allocation2 + $0x8] sm:$0xff] %vm731, %v730
        $region84: #{tpu_custom_call.1} parent=79 // pred_fallthru
          _
        %v734 = vld [vmem:[#allocation2] sm:$0xff]
        %v735 = vld [vmem:[#allocation2 + $0x8] sm:$0xff]
        %v736 = vld [vmem:[%s673] sm:$0xf]
        %v737 = vld [vmem:[%s673 + $0x4] sm:$0xf]
        %v738 = vld [vmem:[%s673 + $0x8] sm:$0xf]
        %v739 = vld [vmem:[%s673 + $0xc] sm:$0xf]
        %v740 = vld [vmem:[%s676] sm:$0x1]
        %v741 = vld [vmem:[%s681] sm:$0xf]
        %v742 = vld [vmem:[%s681 + $0x4] sm:$0xf]
        %v743 = vld [vmem:[%s681 + $0x8] sm:$0xf]
        %v744 = vld [vmem:[%s681 + $0xc] sm:$0xf]
        %v745 = vld [vmem:[%s684] sm:$0x1]
        %v746 = vld [vmem:[%s687] sm:$0x1]
        %v747 = vld [vmem:[%s690] sm:$0x1]
        %v748 = vld [vmem:[%s695] sm:$0xff]
        %v749 = vld [vmem:[%s695 + $0x8] sm:$0xff]
        %v750 = vld [vmem:[%s695 + $0x10] sm:$0xff]
        %v751 = vld [vmem:[%s695 + $0x18] sm:$0xff]
        %v752 = vld [vmem:[%s695 + $0x20] sm:$0xff]
        %v753 = vld [vmem:[%s695 + $0x28] sm:$0xff]
        %v754 = vld [vmem:[%s695 + $0x30] sm:$0xff]
        %v755 = vld [vmem:[%s695 + $0x38] sm:$0xff]
        %v756 = vld [vmem:[%s695 + $0x40] sm:$0xff]
        %v757 = vld [vmem:[%s695 + $0x48] sm:$0xff]
        %v758 = vld [vmem:[%s695 + $0x50] sm:$0xff]
        %v759 = vld [vmem:[%s695 + $0x58] sm:$0xff]
        %v760 = vld [vmem:[%s695 + $0x60] sm:$0xff]
        %v761 = vld [vmem:[%s695 + $0x68] sm:$0xff]
        %v762 = vld [vmem:[%s695 + $0x70] sm:$0xff]
        %v763 = vld [vmem:[%s695 + $0x78] sm:$0xff]
        %v764 = vld [vmem:[%s695 + $0x80] sm:$0xff]
        %v765 = vld [vmem:[%s695 + $0x88] sm:$0xff]
        %v766 = vld [vmem:[%s695 + $0x90] sm:$0xff]
        %v767 = vld [vmem:[%s695 + $0x98] sm:$0xff]
        %v768 = vld [vmem:[%s695 + $0xa0] sm:$0xff]
        %v769 = vld [vmem:[%s695 + $0xa8] sm:$0xff]
        %v770 = vld [vmem:[%s695 + $0xb0] sm:$0xff]
        %v771 = vld [vmem:[%s695 + $0xb8] sm:$0xff]
        %v772 = vld [vmem:[%s695 + $0xc0] sm:$0xff]
        %v773 = vld [vmem:[%s695 + $0xc8] sm:$0xff]
        %v774 = vld [vmem:[%s695 + $0xd0] sm:$0xff]
        %v775 = vld [vmem:[%s695 + $0xd8] sm:$0xff]
        %v776 = vld [vmem:[%s695 + $0xe0] sm:$0xff]
        %v777 = vld [vmem:[%s695 + $0xe8] sm:$0xff]
        %v778 = vld [vmem:[%s695 + $0xf0] sm:$0xff]
        %v779 = vld [vmem:[%s695 + $0xf8] sm:$0xff]
        %v780 = vld [vmem:[%s699] sm:$0xff]
        %v781 = vld [vmem:[%s699 + $0x8] sm:$0xff]
        %v782 = vld [vmem:[%s704] sm:$0xf]
        %v783 = vld [vmem:[%s704 + $0x4] sm:$0xf]
        %v784 = vld [vmem:[%s704 + $0x8] sm:$0xf]
        %v785 = vld [vmem:[%s704 + $0xc] sm:$0xf]
        %v786 = vld [vmem:[%s704 + $0x10] sm:$0xf]
        %v787 = vld [vmem:[%s704 + $0x14] sm:$0xf]
        %v788 = vld [vmem:[%s704 + $0x18] sm:$0xf]
        %v789 = vld [vmem:[%s704 + $0x1c] sm:$0xf]
        %v790 = vld [vmem:[%s704 + $0x20] sm:$0xf]
        %v791 = vld [vmem:[%s704 + $0x24] sm:$0xf]
        %v792 = vld [vmem:[%s704 + $0x28] sm:$0xf]
        %v793 = vld [vmem:[%s704 + $0x2c] sm:$0xf]
        %v794 = vld [vmem:[%s704 + $0x30] sm:$0xf]
        %v795 = vld [vmem:[%s704 + $0x34] sm:$0xf]
        %v796 = vld [vmem:[%s704 + $0x38] sm:$0xf]
        %v797 = vld [vmem:[%s704 + $0x3c] sm:$0xf]
        %v798 = vld [vmem:[%s704 + $0x40] sm:$0xf]
        %v799 = vld [vmem:[%s704 + $0x44] sm:$0xf]
        %v800 = vld [vmem:[%s704 + $0x48] sm:$0xf]
        %v801 = vld [vmem:[%s704 + $0x4c] sm:$0xf]
        %v802 = vld [vmem:[%s704 + $0x50] sm:$0xf]
        %v803 = vld [vmem:[%s704 + $0x54] sm:$0xf]
        %v804 = vld [vmem:[%s704 + $0x58] sm:$0xf]
        %v805 = vld [vmem:[%s704 + $0x5c] sm:$0xf]
        %v806 = vld [vmem:[%s704 + $0x60] sm:$0xf]
        %v807 = vld [vmem:[%s704 + $0x64] sm:$0xf]
        %v808 = vld [vmem:[%s704 + $0x68] sm:$0xf]
        %v809 = vld [vmem:[%s704 + $0x6c] sm:$0xf]
        %v810 = vld [vmem:[%s704 + $0x70] sm:$0xf]
        %v811 = vld [vmem:[%s704 + $0x74] sm:$0xf]
        %v812 = vld [vmem:[%s704 + $0x78] sm:$0xf]
        %v813 = vld [vmem:[%s704 + $0x7c] sm:$0xf]
        %v814 = vld [vmem:[%s704 + $0x80] sm:$0xf]
        %v815 = vld [vmem:[%s704 + $0x84] sm:$0xf]
        %v816 = vld [vmem:[%s704 + $0x88] sm:$0xf]
        %v817 = vld [vmem:[%s704 + $0x8c] sm:$0xf]
        %v818 = vld [vmem:[%s704 + $0x90] sm:$0xf]
        %v819 = vld [vmem:[%s704 + $0x94] sm:$0xf]
        %v820 = vld [vmem:[%s704 + $0x98] sm:$0xf]
        %v821 = vld [vmem:[%s704 + $0x9c] sm:$0xf]
        %v822 = vld [vmem:[%s704 + $0xa0] sm:$0xf]
        %v823 = vld [vmem:[%s704 + $0xa4] sm:$0xf]
        %v824 = vld [vmem:[%s704 + $0xa8] sm:$0xf]
        %v825 = vld [vmem:[%s704 + $0xac] sm:$0xf]
        %v826 = vld [vmem:[%s704 + $0xb0] sm:$0xf]
        %v827 = vld [vmem:[%s704 + $0xb4] sm:$0xf]
        %v828 = vld [vmem:[%s704 + $0xb8] sm:$0xf]
        %v829 = vld [vmem:[%s704 + $0xbc] sm:$0xf]
        %v830 = vld [vmem:[%s704 + $0xc0] sm:$0xf]
        %v831 = vld [vmem:[%s704 + $0xc4] sm:$0xf]
        %v832 = vld [vmem:[%s704 + $0xc8] sm:$0xf]
        %v833 = vld [vmem:[%s704 + $0xcc] sm:$0xf]
        %v834 = vld [vmem:[%s704 + $0xd0] sm:$0xf]
        %v835 = vld [vmem:[%s704 + $0xd4] sm:$0xf]
        %v836 = vld [vmem:[%s704 + $0xd8] sm:$0xf]
        %v837 = vld [vmem:[%s704 + $0xdc] sm:$0xf]
        %v838 = vld [vmem:[%s704 + $0xe0] sm:$0xf]
        %v839 = vld [vmem:[%s704 + $0xe4] sm:$0xf]
        %v840 = vld [vmem:[%s704 + $0xe8] sm:$0xf]
        %v841 = vld [vmem:[%s704 + $0xec] sm:$0xf]
        %v842 = vld [vmem:[%s704 + $0xf0] sm:$0xf]
        %v843 = vld [vmem:[%s704 + $0xf4] sm:$0xf]
        %v844 = vld [vmem:[%s704 + $0xf8] sm:$0xf]
        %v845 = vld [vmem:[%s704 + $0xfc] sm:$0xf]
        %v846 = vld [vmem:[%s704 + $0x100] sm:$0xf]
        %v847 = vld [vmem:[%s704 + $0x104] sm:$0xf]
        %v848 = vld [vmem:[%s704 + $0x108] sm:$0xf]
        %v849 = vld [vmem:[%s704 + $0x10c] sm:$0xf]
        %v850 = vld [vmem:[%s704 + $0x110] sm:$0xf]
        %v851 = vld [vmem:[%s704 + $0x114] sm:$0xf]
        %v852 = vld [vmem:[%s704 + $0x118] sm:$0xf]
        %v853 = vld [vmem:[%s704 + $0x11c] sm:$0xf]
        %v854 = vld [vmem:[%s704 + $0x120] sm:$0xf]
        %v855 = vld [vmem:[%s704 + $0x124] sm:$0xf]
        %v856 = vld [vmem:[%s704 + $0x128] sm:$0xf]
        %v857 = vld [vmem:[%s704 + $0x12c] sm:$0xf]
        %v858 = vld [vmem:[%s704 + $0x130] sm:$0xf]
        %v859 = vld [vmem:[%s704 + $0x134] sm:$0xf]
        %v860 = vld [vmem:[%s704 + $0x138] sm:$0xf]
        %v861 = vld [vmem:[%s704 + $0x13c] sm:$0xf]
        %v862 = vld [vmem:[%s704 + $0x140] sm:$0xf]
        %v863 = vld [vmem:[%s704 + $0x144] sm:$0xf]
        %v864 = vld [vmem:[%s704 + $0x148] sm:$0xf]
        %v865 = vld [vmem:[%s704 + $0x14c] sm:$0xf]
        %v866 = vld [vmem:[%s704 + $0x150] sm:$0xf]
        %v867 = vld [vmem:[%s704 + $0x154] sm:$0xf]
        %v868 = vld [vmem:[%s704 + $0x158] sm:$0xf]
        %v869 = vld [vmem:[%s704 + $0x15c] sm:$0xf]
        %v870 = vld [vmem:[%s704 + $0x160] sm:$0xf]
        %v871 = vld [vmem:[%s704 + $0x164] sm:$0xf]
        %v872 = vld [vmem:[%s704 + $0x168] sm:$0xf]
        %v873 = vld [vmem:[%s704 + $0x16c] sm:$0xf]
        %v874 = vld [vmem:[%s704 + $0x170] sm:$0xf]
        %v875 = vld [vmem:[%s704 + $0x174] sm:$0xf]
        %v876 = vld [vmem:[%s704 + $0x178] sm:$0xf]
        %v877 = vld [vmem:[%s704 + $0x17c] sm:$0xf]
        %v878 = vld [vmem:[%s704 + $0x180] sm:$0xf]
        %v879 = vld [vmem:[%s704 + $0x184] sm:$0xf]
        %v880 = vld [vmem:[%s704 + $0x188] sm:$0xf]
        %v881 = vld [vmem:[%s704 + $0x18c] sm:$0xf]
        %v882 = vld [vmem:[%s704 + $0x190] sm:$0xf]
        %v883 = vld [vmem:[%s704 + $0x194] sm:$0xf]
        %v884 = vld [vmem:[%s704 + $0x198] sm:$0xf]
        %v885 = vld [vmem:[%s704 + $0x19c] sm:$0xf]
        %v886 = vld [vmem:[%s704 + $0x1a0] sm:$0xf]
        %v887 = vld [vmem:[%s704 + $0x1a4] sm:$0xf]
        %v888 = vld [vmem:[%s704 + $0x1a8] sm:$0xf]
        %v889 = vld [vmem:[%s704 + $0x1ac] sm:$0xf]
        %v890 = vld [vmem:[%s704 + $0x1b0] sm:$0xf]
        %v891 = vld [vmem:[%s704 + $0x1b4] sm:$0xf]
        %v892 = vld [vmem:[%s704 + $0x1b8] sm:$0xf]
        %v893 = vld [vmem:[%s704 + $0x1bc] sm:$0xf]
        %v894 = vld [vmem:[%s704 + $0x1c0] sm:$0xf]
        %v895 = vld [vmem:[%s704 + $0x1c4] sm:$0xf]
        %v896 = vld [vmem:[%s704 + $0x1c8] sm:$0xf]
        %v897 = vld [vmem:[%s704 + $0x1cc] sm:$0xf]
        %v898 = vld [vmem:[%s704 + $0x1d0] sm:$0xf]
        %v899 = vld [vmem:[%s704 + $0x1d4] sm:$0xf]
        %v900 = vld [vmem:[%s704 + $0x1d8] sm:$0xf]
        %v901 = vld [vmem:[%s704 + $0x1dc] sm:$0xf]
        %v902 = vld [vmem:[%s704 + $0x1e0] sm:$0xf]
        %v903 = vld [vmem:[%s704 + $0x1e4] sm:$0xf]
        %v904 = vld [vmem:[%s704 + $0x1e8] sm:$0xf]
        %v905 = vld [vmem:[%s704 + $0x1ec] sm:$0xf]
        %v906 = vld [vmem:[%s704 + $0x1f0] sm:$0xf]
        %v907 = vld [vmem:[%s704 + $0x1f4] sm:$0xf]
        %v908 = vld [vmem:[%s704 + $0x1f8] sm:$0xf]
        %v909 = vld [vmem:[%s704 + $0x1fc] sm:$0xf]
        %v910 = vld [vmem:[%s704 + $0x200] sm:$0xf]
        %v911 = vld [vmem:[%s704 + $0x204] sm:$0xf]
        %v912 = vld [vmem:[%s704 + $0x208] sm:$0xf]
        %v913 = vld [vmem:[%s704 + $0x20c] sm:$0xf]
        %v914 = vld [vmem:[%s704 + $0x210] sm:$0xf]
        %v915 = vld [vmem:[%s704 + $0x214] sm:$0xf]
        %v916 = vld [vmem:[%s704 + $0x218] sm:$0xf]
        %v917 = vld [vmem:[%s704 + $0x21c] sm:$0xf]
        %v918 = vld [vmem:[%s704 + $0x220] sm:$0xf]
        %v919 = vld [vmem:[%s704 + $0x224] sm:$0xf]
        %v920 = vld [vmem:[%s704 + $0x228] sm:$0xf]
        %v921 = vld [vmem:[%s704 + $0x22c] sm:$0xf]
        %v922 = vld [vmem:[%s704 + $0x230] sm:$0xf]
        %v923 = vld [vmem:[%s704 + $0x234] sm:$0xf]
        %v924 = vld [vmem:[%s704 + $0x238] sm:$0xf]
        %v925 = vld [vmem:[%s704 + $0x23c] sm:$0xf]
        %v926 = vld [vmem:[%s704 + $0x240] sm:$0xf]
        %v927 = vld [vmem:[%s704 + $0x244] sm:$0xf]
        %v928 = vld [vmem:[%s704 + $0x248] sm:$0xf]
        %v929 = vld [vmem:[%s704 + $0x24c] sm:$0xf]
        %v930 = vld [vmem:[%s704 + $0x250] sm:$0xf]
        %v931 = vld [vmem:[%s704 + $0x254] sm:$0xf]
        %v932 = vld [vmem:[%s704 + $0x258] sm:$0xf]
        %v933 = vld [vmem:[%s704 + $0x25c] sm:$0xf]
        %v934 = vld [vmem:[%s704 + $0x260] sm:$0xf]
        %v935 = vld [vmem:[%s704 + $0x264] sm:$0xf]
        %v936 = vld [vmem:[%s704 + $0x268] sm:$0xf]
        %v937 = vld [vmem:[%s704 + $0x26c] sm:$0xf]
        %v938 = vld [vmem:[%s704 + $0x270] sm:$0xf]
        %v939 = vld [vmem:[%s704 + $0x274] sm:$0xf]
        %v940 = vld [vmem:[%s704 + $0x278] sm:$0xf]
        %v941 = vld [vmem:[%s704 + $0x27c] sm:$0xf]
        %v942 = vld [vmem:[%s704 + $0x280] sm:$0xf]
        %v943 = vld [vmem:[%s704 + $0x284] sm:$0xf]
        %v944 = vld [vmem:[%s704 + $0x288] sm:$0xf]
        %v945 = vld [vmem:[%s704 + $0x28c] sm:$0xf]
        %v946 = vld [vmem:[%s704 + $0x290] sm:$0xf]
        %v947 = vld [vmem:[%s704 + $0x294] sm:$0xf]
        %v948 = vld [vmem:[%s704 + $0x298] sm:$0xf]
        %v949 = vld [vmem:[%s704 + $0x29c] sm:$0xf]
        %v950 = vld [vmem:[%s704 + $0x2a0] sm:$0xf]
        %v951 = vld [vmem:[%s704 + $0x2a4] sm:$0xf]
        %v952 = vld [vmem:[%s704 + $0x2a8] sm:$0xf]
        %v953 = vld [vmem:[%s704 + $0x2ac] sm:$0xf]
        %v954 = vld [vmem:[%s704 + $0x2b0] sm:$0xf]
        %v955 = vld [vmem:[%s704 + $0x2b4] sm:$0xf]
        %v956 = vld [vmem:[%s704 + $0x2b8] sm:$0xf]
        %v957 = vld [vmem:[%s704 + $0x2bc] sm:$0xf]
        %v958 = vld [vmem:[%s704 + $0x2c0] sm:$0xf]
        %v959 = vld [vmem:[%s704 + $0x2c4] sm:$0xf]
        %v960 = vld [vmem:[%s704 + $0x2c8] sm:$0xf]
        %v961 = vld [vmem:[%s704 + $0x2cc] sm:$0xf]
        %v962 = vld [vmem:[%s704 + $0x2d0] sm:$0xf]
        %v963 = vld [vmem:[%s704 + $0x2d4] sm:$0xf]
        %v964 = vld [vmem:[%s704 + $0x2d8] sm:$0xf]
        %v965 = vld [vmem:[%s704 + $0x2dc] sm:$0xf]
        %v966 = vld [vmem:[%s704 + $0x2e0] sm:$0xf]
        %v967 = vld [vmem:[%s704 + $0x2e4] sm:$0xf]
        %v968 = vld [vmem:[%s704 + $0x2e8] sm:$0xf]
        %v969 = vld [vmem:[%s704 + $0x2ec] sm:$0xf]
        %v970 = vld [vmem:[%s704 + $0x2f0] sm:$0xf]
        %v971 = vld [vmem:[%s704 + $0x2f4] sm:$0xf]
        %v972 = vld [vmem:[%s704 + $0x2f8] sm:$0xf]
        %v973 = vld [vmem:[%s704 + $0x2fc] sm:$0xf]
        %v974 = vld [vmem:[%s704 + $0x300] sm:$0xf]
        %v975 = vld [vmem:[%s704 + $0x304] sm:$0xf]
        %v976 = vld [vmem:[%s704 + $0x308] sm:$0xf]
        %v977 = vld [vmem:[%s704 + $0x30c] sm:$0xf]
        %v978 = vld [vmem:[%s704 + $0x310] sm:$0xf]
        %v979 = vld [vmem:[%s704 + $0x314] sm:$0xf]
        %v980 = vld [vmem:[%s704 + $0x318] sm:$0xf]
        %v981 = vld [vmem:[%s704 + $0x31c] sm:$0xf]
        %v982 = vld [vmem:[%s704 + $0x320] sm:$0xf]
        %v983 = vld [vmem:[%s704 + $0x324] sm:$0xf]
        %v984 = vld [vmem:[%s704 + $0x328] sm:$0xf]
        %v985 = vld [vmem:[%s704 + $0x32c] sm:$0xf]
        %v986 = vld [vmem:[%s704 + $0x330] sm:$0xf]
        %v987 = vld [vmem:[%s704 + $0x334] sm:$0xf]
        %v988 = vld [vmem:[%s704 + $0x338] sm:$0xf]
        %v989 = vld [vmem:[%s704 + $0x33c] sm:$0xf]
        %v990 = vld [vmem:[%s704 + $0x340] sm:$0xf]
        %v991 = vld [vmem:[%s704 + $0x344] sm:$0xf]
        %v992 = vld [vmem:[%s704 + $0x348] sm:$0xf]
        %v993 = vld [vmem:[%s704 + $0x34c] sm:$0xf]
        %v994 = vld [vmem:[%s704 + $0x350] sm:$0xf]
        %v995 = vld [vmem:[%s704 + $0x354] sm:$0xf]
        %v996 = vld [vmem:[%s704 + $0x358] sm:$0xf]
        %v997 = vld [vmem:[%s704 + $0x35c] sm:$0xf]
        %v998 = vld [vmem:[%s704 + $0x360] sm:$0xf]
        %v999 = vld [vmem:[%s704 + $0x364] sm:$0xf]
        %v1000 = vld [vmem:[%s704 + $0x368] sm:$0xf]
        %v1001 = vld [vmem:[%s704 + $0x36c] sm:$0xf]
        %v1002 = vld [vmem:[%s704 + $0x370] sm:$0xf]
        %v1003 = vld [vmem:[%s704 + $0x374] sm:$0xf]
        %v1004 = vld [vmem:[%s704 + $0x378] sm:$0xf]
        %v1005 = vld [vmem:[%s704 + $0x37c] sm:$0xf]
        %v1006 = vld [vmem:[%s704 + $0x380] sm:$0xf]
        %v1007 = vld [vmem:[%s704 + $0x384] sm:$0xf]
        %v1008 = vld [vmem:[%s704 + $0x388] sm:$0xf]
        %v1009 = vld [vmem:[%s704 + $0x38c] sm:$0xf]
        %v1010 = vld [vmem:[%s704 + $0x390] sm:$0xf]
        %v1011 = vld [vmem:[%s704 + $0x394] sm:$0xf]
        %v1012 = vld [vmem:[%s704 + $0x398] sm:$0xf]
        %v1013 = vld [vmem:[%s704 + $0x39c] sm:$0xf]
        %v1014 = vld [vmem:[%s704 + $0x3a0] sm:$0xf]
        %v1015 = vld [vmem:[%s704 + $0x3a4] sm:$0xf]
        %v1016 = vld [vmem:[%s704 + $0x3a8] sm:$0xf]
        %v1017 = vld [vmem:[%s704 + $0x3ac] sm:$0xf]
        %v1018 = vld [vmem:[%s704 + $0x3b0] sm:$0xf]
        %v1019 = vld [vmem:[%s704 + $0x3b4] sm:$0xf]
        %v1020 = vld [vmem:[%s704 + $0x3b8] sm:$0xf]
        %v1021 = vld [vmem:[%s704 + $0x3bc] sm:$0xf]
        %v1022 = vld [vmem:[%s704 + $0x3c0] sm:$0xf]
        %v1023 = vld [vmem:[%s704 + $0x3c4] sm:$0xf]
        %v1024 = vld [vmem:[%s704 + $0x3c8] sm:$0xf]
        %v1025 = vld [vmem:[%s704 + $0x3cc] sm:$0xf]
        %v1026 = vld [vmem:[%s704 + $0x3d0] sm:$0xf]
        %v1027 = vld [vmem:[%s704 + $0x3d4] sm:$0xf]
        %v1028 = vld [vmem:[%s704 + $0x3d8] sm:$0xf]
        %v1029 = vld [vmem:[%s704 + $0x3dc] sm:$0xf]
        %v1030 = vld [vmem:[%s704 + $0x3e0] sm:$0xf]
        %v1031 = vld [vmem:[%s704 + $0x3e4] sm:$0xf]
        %v1032 = vld [vmem:[%s704 + $0x3e8] sm:$0xf]
        %v1033 = vld [vmem:[%s704 + $0x3ec] sm:$0xf]
        %v1034 = vld [vmem:[%s704 + $0x3f0] sm:$0xf]
        %v1035 = vld [vmem:[%s704 + $0x3f4] sm:$0xf]
        %v1036 = vld [vmem:[%s704 + $0x3f8] sm:$0xf]
        %v1037 = vld [vmem:[%s704 + $0x3fc] sm:$0xf]
        %v1038 = vld [vmem:[%s707] sm:$0x1]
        %v1039 = vld [vmem:[%s710] sm:$0x1]
        %v1040 = vld [vmem:[%s713] sm:$0x1]
        %v1041 = vpack.c.bf16 %v735, %v734
        %v1043 = vlaneseq
        %v1044 = vshrl.u32 %v1043, 7
        %v1045 = vsub.s32 0, %v1044
        %v1046 = vrot.slane %v740, %v1045
        %v1052 = vunpack.c.l.b16 %v736
        %v1053 = vunpack.c.l.b16 %v737
        %v1054 = vunpack.c.l.b16 %v738
        %v1055 = vunpack.c.l.b16 %v739
        %v1056 = vpack.c.b16 %v1053, %v1052
        %v1057 = vpack.c.b16 %v1055, %v1054
        %vm1060 = vcmask 261120
        %v1062 = vsel %vm1060, %v1041, 0
        %1064 = vmatprep.subr.bf16.mxu0 0
        %1065 = vmatpush1.bf16.msra.mxu0 0
        %1066 = vmatprep.subr.bf16.mxu0 0
        %1067 = vmatpush1.bf16.msra.mxu0 0
        %1068 = vmatprep.subr.bf16.mxu0 0
        %1069 = vmatpush1.bf16.msra.mxu0 0
        %1070 = vmatprep.subr.bf16.mxu0 0
        %1071 = vmatpush1.bf16.msra.mxu0 0
        %1072 = vmatprep.subr.bf16.mxu0 0
        %1073 = vmatpush1.bf16.msra.mxu0 0
        %1074 = vmatprep.subr.bf16.mxu0 0
        %1075 = vmatpush1.bf16.msra.mxu0 0
        %1076 = vmatprep.subr.bf16.mxu0 0
        %1077 = vmatpush1.bf16.msra.mxu0 %v1057
        %1078 = vmatprep.subr.bf16.mxu0 0
        %1079 = vmatpush1.bf16.msra.mxu0 %v1056
        %1080 = vmatprep.subr.bf16.mxu0 0
        %1081 = vmatpush2.bf16.msra.mxu0 0
        %1082 = vmatprep.subr.bf16.mxu0 0
        %1083 = vmatpush2.bf16.msra.mxu0 0
        %1084 = vmatprep.subr.bf16.mxu0 0
        %1085 = vmatpush2.bf16.msra.mxu0 0
        %1086 = vmatprep.subr.bf16.mxu0 0
        %1087 = vmatpush2.bf16.msra.mxu0 0
        %1088 = vmatprep.subr.bf16.mxu0 0
        %1089 = vmatpush2.bf16.msra.mxu0 0
        %1090 = vmatprep.subr.bf16.mxu0 0
        %1091 = vmatpush2.bf16.msra.mxu0 0
        %1092 = vmatprep.subr.bf16.mxu0 0
        %1093 = vmatpush2.bf16.msra.mxu0 0
        %1094 = vmatprep.subr.bf16.mxu0 0
        %1095 = vmatpush2.bf16.msra.mxu0 0
        %1096 = vmatprep.mubr.bf16.mxu0 0
        %1097 = vmatmul.mubr.bf16.gmra.mxu0 %v1062
        %v1098 = vpop.f32.mrf.mxu0
        %v1099 = vadd.f32 %v1046, %v1098
        %v1100 = vpop.f32.mrf.mxu0
        %v1101 = vpop.f32.mrf.mxu0
        %v1102 = vadd.f32 %v1046, %v1101
        %v1103 = vpop.f32.mrf.mxu0
        %1104 = vdwg.mxu0
        %v1105 = vmul.f32 %v1099, 0.35355338
        %v1106 = vmul.f32 %v1102, 0.35355338
        %v1107 = vpack.c.bf16 %v1105, %v1105
        %v1108 = vpack.c.bf16 %v1106, %v1106
        %v1109 = vpack.c.bf16 %v1099, %v1099
        %v1110 = vpack.c.bf16 %v1102, %v1102
        %v1113 = vlaneseq
        %v1114 = vshrl.u32 %v1113, 7
        %v1115 = vsub.s32 0, %v1114
        %v1116 = vrot.slane %v720, %v1115
        %v1117 = vlaneseq
        %v1118 = vshrl.u32 %v1117, 7
        %v1119 = vsub.s32 0, %v1118
        %v1120 = vrot.slane %v721, %v1119
        %1124 = vrot.lane.b32.xlu0 %v1109, 96
        %v1125 = vpop.permute.xlu0 %1124
        %vm1126 = vcmask 64512
        %v1128 = vsel %vm1126, %v1107, 0
        %v1131 = vsel %vm1126, %v1125, 0
        %1133 = vmatprep.subr.bf16.mxu0 0
        %1134 = vmatpush1.bf16.xpose.msra.mxu0 0
        %1135 = vmatprep.subr.bf16.mxu0 0
        %1136 = vmatpush1.bf16.xpose.msra.mxu0 0
        %1137 = vmatprep.subr.bf16.mxu0 0
        %1138 = vmatpush1.bf16.xpose.msra.mxu0 0
        %1139 = vmatprep.subr.bf16.mxu0 0
        %1140 = vmatpush1.bf16.xpose.msra.mxu0 0
        %1141 = vmatprep.subr.bf16.mxu0 0
        %1142 = vmatpush1.bf16.xpose.msra.mxu0 0
        %1143 = vmatprep.subr.bf16.mxu0 0
        %1144 = vmatpush1.bf16.xpose.msra.mxu0 0
        %1145 = vmatprep.subr.bf16.mxu0 0
        %1146 = vmatpush1.bf16.xpose.msra.mxu0 0
        %1147 = vmatprep.subr.bf16.mxu0 0
        %1148 = vmatpush1.bf16.xpose.msra.mxu0 %v1131
        %1149 = vmatprep.subr.bf16.mxu0 0
        %1150 = vmatpush2.bf16.xpose.msra.mxu0 0
        %1151 = vmatprep.subr.bf16.mxu0 0
        %1152 = vmatpush2.bf16.xpose.msra.mxu0 0
        %1153 = vmatprep.subr.bf16.mxu0 0
        %1154 = vmatpush2.bf16.xpose.msra.mxu0 0
        %1155 = vmatprep.subr.bf16.mxu0 0
        %1156 = vmatpush2.bf16.xpose.msra.mxu0 0
        %1157 = vmatprep.subr.bf16.mxu0 0
        %1158 = vmatpush2.bf16.xpose.msra.mxu0 0
        %1159 = vmatprep.subr.bf16.mxu0 0
        %1160 = vmatpush2.bf16.xpose.msra.mxu0 0
        %1161 = vmatprep.subr.bf16.mxu0 0
        %1162 = vmatpush2.bf16.xpose.msra.mxu0 0
        %1163 = vmatprep.subr.bf16.mxu0 0
        %1164 = vmatpush2.bf16.xpose.msra.mxu0 0
        %1165 = vmatprep.mubr.bf16.mxu0 0
        %1166 = vmatmul.mubr.bf16.gmra.mxu0 %v1128
        %v1167 = vpop.f32.mrf.mxu0
        %v1168 = vadd.f32 %v1116, %v1167
        %v1169 = vpop.f32.mrf.mxu0
        %v1170 = vpop.f32.mrf.mxu0
        %v1171 = vpop.f32.mrf.mxu0
        %1172 = vdwg.mxu0
        %1174 = vrot.lane.b32.xlu0 %v1110, 96
        %v1175 = vpop.permute.xlu0 %1174
        %v1177 = vsel %vm1126, %v1108, 0
        %v1180 = vsel %vm1126, %v1175, 0
        %1182 = vmatprep.subr.bf16.mxu0 0
        %1183 = vmatpush1.bf16.xpose.msra.mxu0 0
        %1184 = vmatprep.subr.bf16.mxu0 0
        %1185 = vmatpush1.bf16.xpose.msra.mxu0 0
        %1186 = vmatprep.subr.bf16.mxu0 0
        %1187 = vmatpush1.bf16.xpose.msra.mxu0 0
        %1188 = vmatprep.subr.bf16.mxu0 0
        %1189 = vmatpush1.bf16.xpose.msra.mxu0 0
        %1190 = vmatprep.subr.bf16.mxu0 0
        %1191 = vmatpush1.bf16.xpose.msra.mxu0 0
        %1192 = vmatprep.subr.bf16.mxu0 0
        %1193 = vmatpush1.bf16.xpose.msra.mxu0 0
        %1194 = vmatprep.subr.bf16.mxu0 0
        %1195 = vmatpush1.bf16.xpose.msra.mxu0 0
        %1196 = vmatprep.subr.bf16.mxu0 0
        %1197 = vmatpush1.bf16.xpose.msra.mxu0 %v1180
        %1198 = vmatprep.subr.bf16.mxu0 0
        %1199 = vmatpush2.bf16.xpose.msra.mxu0 0
        %1200 = vmatprep.subr.bf16.mxu0 0
        %1201 = vmatpush2.bf16.xpose.msra.mxu0 0
        %1202 = vmatprep.subr.bf16.mxu0 0
        %1203 = vmatpush2.bf16.xpose.msra.mxu0 0
        %1204 = vmatprep.subr.bf16.mxu0 0
        %1205 = vmatpush2.bf16.xpose.msra.mxu0 0
        %1206 = vmatprep.subr.bf16.mxu0 0
        %1207 = vmatpush2.bf16.xpose.msra.mxu0 0
        %1208 = vmatprep.subr.bf16.mxu0 0
        %1209 = vmatpush2.bf16.xpose.msra.mxu0 0
        %1210 = vmatprep.subr.bf16.mxu0 0
        %1211 = vmatpush2.bf16.xpose.msra.mxu0 0
        %1212 = vmatprep.subr.bf16.mxu0 0
        %1213 = vmatpush2.bf16.xpose.msra.mxu0 0
        %1214 = vmatprep.mubr.bf16.mxu0 0
        %1215 = vmatmul.mubr.bf16.gmra.mxu0 %v1177
        %v1216 = vpop.f32.mrf.mxu0
        %v1217 = vadd.f32 %v1120, %v1216
        %v1218 = vpop.f32.mrf.mxu0
        %v1219 = vpop.f32.mrf.mxu0
        %v1220 = vpop.f32.mrf.mxu0
        %1221 = vdwg.mxu0
        %v1222 = vsel %vm1126, %v1168, -inf
        %1223 = vmax.xlane.f32.xlu0 %v1222
        %v1224 = vpop.xlane.xlu0 %1223
        %v1225 = vsel %vm1126, %v1217, -inf
        %1226 = vmax.xlane.f32.xlu0 %v1225
        %v1227 = vpop.xlane.xlu0 %1226
        %v1228 = vsub.f32 %v1168, %v1224
        %v1229 = vsub.f32 %v1217, %v1227
        %v1230 = vmul.f32 %v1228, 1.442695
        %v1231 = vpow.pop %v1230
        %v1232 = vmul.f32 %v1229, 1.442695
        %v1233 = vpow.pop %v1232
        %v1234 = vsel %vm1126, %v1231, 0.0
        %1235 = vadd.xlane.f32.xlu0 %v1234
        %v1236 = vpop.xlane.xlu0 %1235
        %v1237 = vsel %vm1126, %v1233, 0.0
        %1238 = vadd.xlane.f32.xlu0 %v1237
        %v1239 = vpop.xlane.xlu0 %1238
        %v1240 = vrcp.pop %v1236
        %v1241 = vmul.f32 %v1231, %v1240
        %v1242 = vrcp.pop %v1239
        %v1243 = vmul.f32 %v1233, %v1242
        %v1244 = vpack.c.bf16 %v1241, %v1241
        %v1245 = vpack.c.bf16 %v1243, %v1243
        %1246 = vrot.lane.b32.xlu0 %v1109, 64
        %v1247 = vpop.permute.xlu0 %1246
        %v1249 = vsel %vm1126, %v1244, 0
        %vm1251 = vcmask 1043456
        %v1253 = vsel %vm1251, %v1247, 0
        %1255 = vmatprep.subr.bf16.mxu0 0
        %1256 = vmatpush1.bf16.msra.mxu0 0
        %1257 = vmatprep.subr.bf16.mxu0 0
        %1258 = vmatpush1.bf16.msra.mxu0 0
        %1259 = vmatprep.subr.bf16.mxu0 0
        %1260 = vmatpush1.bf16.msra.mxu0 0
        %1261 = vmatprep.subr.bf16.mxu0 0
        %1262 = vmatpush1.bf16.msra.mxu0 0
        %1263 = vmatprep.subr.bf16.mxu0 0
        %1264 = vmatpush1.bf16.msra.mxu0 0
        %1265 = vmatprep.subr.bf16.mxu0 0
        %1266 = vmatpush1.bf16.msra.mxu0 0
        %1267 = vmatprep.subr.bf16.mxu0 0
        %1268 = vmatpush1.bf16.msra.mxu0 0
        %1269 = vmatprep.subr.bf16.mxu0 0
        %1270 = vmatpush1.bf16.msra.mxu0 %v1253
        %1271 = vmatprep.subr.bf16.mxu0 0
        %1272 = vmatpush2.bf16.msra.mxu0 0
        %1273 = vmatprep.subr.bf16.mxu0 0
        %1274 = vmatpush2.bf16.msra.mxu0 0
        %1275 = vmatprep.subr.bf16.mxu0 0
        %1276 = vmatpush2.bf16.msra.mxu0 0
        %1277 = vmatprep.subr.bf16.mxu0 0
        %1278 = vmatpush2.bf16.msra.mxu0 0
        %1279 = vmatprep.subr.bf16.mxu0 0
        %1280 = vmatpush2.bf16.msra.mxu0 0
        %1281 = vmatprep.subr.bf16.mxu0 0
        %1282 = vmatpush2.bf16.msra.mxu0 0
        %1283 = vmatprep.subr.bf16.mxu0 0
        %1284 = vmatpush2.bf16.msra.mxu0 0
        %1285 = vmatprep.subr.bf16.mxu0 0
        %1286 = vmatpush2.bf16.msra.mxu0 0
        %1287 = vmatprep.mubr.bf16.mxu0 0
        %1288 = vmatmul.mubr.bf16.gmra.mxu0 %v1249
        %v1289 = vpop.f32.mrf.mxu0
        %v1290 = vadd.f32 0.0, %v1289
        %v1291 = vpop.f32.mrf.mxu0
        %v1292 = vpop.f32.mrf.mxu0
        %v1293 = vpop.f32.mrf.mxu0
        %1294 = vdwg.mxu0
        %1295 = vrot.lane.b32.xlu0 %v1110, 64
        %v1296 = vpop.permute.xlu0 %1295
        %v1298 = vsel %vm1126, %v1245, 0
        %v1301 = vsel %vm1251, %v1296, 0
        %1303 = vmatprep.subr.bf16.mxu0 0
        %1304 = vmatpush1.bf16.msra.mxu0 0
        %1305 = vmatprep.subr.bf16.mxu0 0
        %1306 = vmatpush1.bf16.msra.mxu0 0
        %1307 = vmatprep.subr.bf16.mxu0 0
        %1308 = vmatpush1.bf16.msra.mxu0 0
        %1309 = vmatprep.subr.bf16.mxu0 0
        %1310 = vmatpush1.bf16.msra.mxu0 0
        %1311 = vmatprep.subr.bf16.mxu0 0
        %1312 = vmatpush1.bf16.msra.mxu0 0
        %1313 = vmatprep.subr.bf16.mxu0 0
        %1314 = vmatpush1.bf16.msra.mxu0 0
        %1315 = vmatprep.subr.bf16.mxu0 0
        %1316 = vmatpush1.bf16.msra.mxu0 0
        %1317 = vmatprep.subr.bf16.mxu0 0
        %1318 = vmatpush1.bf16.msra.mxu0 %v1301
        %1319 = vmatprep.subr.bf16.mxu0 0
        %1320 = vmatpush2.bf16.msra.mxu0 0
        %1321 = vmatprep.subr.bf16.mxu0 0
        %1322 = vmatpush2.bf16.msra.mxu0 0
        %1323 = vmatprep.subr.bf16.mxu0 0
        %1324 = vmatpush2.bf16.msra.mxu0 0
        %1325 = vmatprep.subr.bf16.mxu0 0
        %1326 = vmatpush2.bf16.msra.mxu0 0
        %1327 = vmatprep.subr.bf16.mxu0 0
        %1328 = vmatpush2.bf16.msra.mxu0 0
        %1329 = vmatprep.subr.bf16.mxu0 0
        %1330 = vmatpush2.bf16.msra.mxu0 0
        %1331 = vmatprep.subr.bf16.mxu0 0
        %1332 = vmatpush2.bf16.msra.mxu0 0
        %1333 = vmatprep.subr.bf16.mxu0 0
        %1334 = vmatpush2.bf16.msra.mxu0 0
        %1335 = vmatprep.mubr.bf16.mxu0 0
        %1336 = vmatmul.mubr.bf16.gmra.mxu0 %v1298
        %v1337 = vpop.f32.mrf.mxu0
        %v1338 = vadd.f32 0.0, %v1337
        %v1339 = vpop.f32.mrf.mxu0
        %v1340 = vpop.f32.mrf.mxu0
        %v1341 = vpop.f32.mrf.mxu0
        %1342 = vdwg.mxu0
        %1344 = vrot.lane.b32.xlu0 %v1107, 120
        %v1345 = vpop.permute.xlu0 %1344
        %1346 = vrot.lane.b32.xlu0 %v1109, 88
        %v1347 = vpop.permute.xlu0 %1346
        %v1349 = vsel %vm1126, %v1345, 0
        %v1352 = vsel %vm1126, %v1347, 0
        %1354 = vmatprep.subr.bf16.mxu0 0
        %1355 = vmatpush1.bf16.xpose.msra.mxu0 0
        %1356 = vmatprep.subr.bf16.mxu0 0
        %1357 = vmatpush1.bf16.xpose.msra.mxu0 0
        %1358 = vmatprep.subr.bf16.mxu0 0
        %1359 = vmatpush1.bf16.xpose.msra.mxu0 0
        %1360 = vmatprep.subr.bf16.mxu0 0
        %1361 = vmatpush1.bf16.xpose.msra.mxu0 0
        %1362 = vmatprep.subr.bf16.mxu0 0
        %1363 = vmatpush1.bf16.xpose.msra.mxu0 0
        %1364 = vmatprep.subr.bf16.mxu0 0
        %1365 = vmatpush1.bf16.xpose.msra.mxu0 0
        %1366 = vmatprep.subr.bf16.mxu0 0
        %1367 = vmatpush1.bf16.xpose.msra.mxu0 0
        %1368 = vmatprep.subr.bf16.mxu0 0
        %1369 = vmatpush1.bf16.xpose.msra.mxu0 %v1352
        %1370 = vmatprep.subr.bf16.mxu0 0
        %1371 = vmatpush2.bf16.xpose.msra.mxu0 0
        %1372 = vmatprep.subr.bf16.mxu0 0
        %1373 = vmatpush2.bf16.xpose.msra.mxu0 0
        %1374 = vmatprep.subr.bf16.mxu0 0
        %1375 = vmatpush2.bf16.xpose.msra.mxu0 0
        %1376 = vmatprep.subr.bf16.mxu0 0
        %1377 = vmatpush2.bf16.xpose.msra.mxu0 0
        %1378 = vmatprep.subr.bf16.mxu0 0
        %1379 = vmatpush2.bf16.xpose.msra.mxu0 0
        %1380 = vmatprep.subr.bf16.mxu0 0
        %1381 = vmatpush2.bf16.xpose.msra.mxu0 0
        %1382 = vmatprep.subr.bf16.mxu0 0
        %1383 = vmatpush2.bf16.xpose.msra.mxu0 0
        %1384 = vmatprep.subr.bf16.mxu0 0
        %1385 = vmatpush2.bf16.xpose.msra.mxu0 0
        %1386 = vmatprep.mubr.bf16.mxu0 0
        %1387 = vmatmul.mubr.bf16.gmra.mxu0 %v1349
        %v1388 = vpop.f32.mrf.mxu0
        %v1389 = vadd.f32 %v1116, %v1388
        %v1390 = vpop.f32.mrf.mxu0
        %v1391 = vpop.f32.mrf.mxu0
        %v1392 = vpop.f32.mrf.mxu0
        %1393 = vdwg.mxu0
        %1395 = vrot.lane.b32.xlu0 %v1108, 120
        %v1396 = vpop.permute.xlu0 %1395
        %1397 = vrot.lane.b32.xlu0 %v1110, 88
        %v1398 = vpop.permute.xlu0 %1397
        %v1400 = vsel %vm1126, %v1396, 0
        %v1403 = vsel %vm1126, %v1398, 0
        %1405 = vmatprep.subr.bf16.mxu0 0
        %1406 = vmatpush1.bf16.xpose.msra.mxu0 0
        %1407 = vmatprep.subr.bf16.mxu0 0
        %1408 = vmatpush1.bf16.xpose.msra.mxu0 0
        %1409 = vmatprep.subr.bf16.mxu0 0
        %1410 = vmatpush1.bf16.xpose.msra.mxu0 0
        %1411 = vmatprep.subr.bf16.mxu0 0
        %1412 = vmatpush1.bf16.xpose.msra.mxu0 0
        %1413 = vmatprep.subr.bf16.mxu0 0
        %1414 = vmatpush1.bf16.xpose.msra.mxu0 0
        %1415 = vmatprep.subr.bf16.mxu0 0
        %1416 = vmatpush1.bf16.xpose.msra.mxu0 0
        %1417 = vmatprep.subr.bf16.mxu0 0
        %1418 = vmatpush1.bf16.xpose.msra.mxu0 0
        %1419 = vmatprep.subr.bf16.mxu0 0
        %1420 = vmatpush1.bf16.xpose.msra.mxu0 %v1403
        %1421 = vmatprep.subr.bf16.mxu0 0
        %1422 = vmatpush2.bf16.xpose.msra.mxu0 0
        %1423 = vmatprep.subr.bf16.mxu0 0
        %1424 = vmatpush2.bf16.xpose.msra.mxu0 0
        %1425 = vmatprep.subr.bf16.mxu0 0
        %1426 = vmatpush2.bf16.xpose.msra.mxu0 0
        %1427 = vmatprep.subr.bf16.mxu0 0
        %1428 = vmatpush2.bf16.xpose.msra.mxu0 0
        %1429 = vmatprep.subr.bf16.mxu0 0
        %1430 = vmatpush2.bf16.xpose.msra.mxu0 0
        %1431 = vmatprep.subr.bf16.mxu0 0
        %1432 = vmatpush2.bf16.xpose.msra.mxu0 0
        %1433 = vmatprep.subr.bf16.mxu0 0
        %1434 = vmatpush2.bf16.xpose.msra.mxu0 0
        %1435 = vmatprep.subr.bf16.mxu0 0
        %1436 = vmatpush2.bf16.xpose.msra.mxu0 0
        %1437 = vmatprep.mubr.bf16.mxu0 0
        %1438 = vmatmul.mubr.bf16.gmra.mxu0 %v1400
        %v1439 = vpop.f32.mrf.mxu0
        %v1440 = vadd.f32 %v1120, %v1439
        %v1441 = vpop.f32.mrf.mxu0
        %v1442 = vpop.f32.mrf.mxu0
        %v1443 = vpop.f32.mrf.mxu0
        %1444 = vdwg.mxu0
        %v1445 = vsel %vm1126, %v1389, -inf
        %1446 = vmax.xlane.f32.xlu0 %v1445
        %v1447 = vpop.xlane.xlu0 %1446
        %v1448 = vsel %vm1126, %v1440, -inf
        %1449 = vmax.xlane.f32.xlu0 %v1448
        %v1450 = vpop.xlane.xlu0 %1449
        %v1451 = vsub.f32 %v1389, %v1447
        %v1452 = vsub.f32 %v1440, %v1450
        %v1453 = vmul.f32 %v1451, 1.442695
        %v1454 = vpow.pop %v1453
        %v1455 = vmul.f32 %v1452, 1.442695
        %v1456 = vpow.pop %v1455
        %v1457 = vsel %vm1126, %v1454, 0.0
        %1458 = vadd.xlane.f32.xlu0 %v1457
        %v1459 = vpop.xlane.xlu0 %1458
        %v1460 = vsel %vm1126, %v1456, 0.0
        %1461 = vadd.xlane.f32.xlu0 %v1460
        %v1462 = vpop.xlane.xlu0 %1461
        %v1463 = vrcp.pop %v1459
        %v1464 = vmul.f32 %v1454, %v1463
        %v1465 = vrcp.pop %v1462
        %v1466 = vmul.f32 %v1456, %v1465
        %v1467 = vpack.c.bf16 %v1464, %v1464
        %v1468 = vpack.c.bf16 %v1466, %v1466
        %1469 = vrot.lane.b32.xlu0 %v1109, 56
        %v1470 = vpop.permute.xlu0 %1469
        %v1472 = vsel %vm1126, %v1467, 0
        %v1475 = vsel %vm1251, %v1470, 0
        %1477 = vmatprep.subr.bf16.mxu0 0
        %1478 = vmatpush1.bf16.msra.mxu0 0
        %1479 = vmatprep.subr.bf16.mxu0 0
        %1480 = vmatpush1.bf16.msra.mxu0 0
        %1481 = vmatprep.subr.bf16.mxu0 0
        %1482 = vmatpush1.bf16.msra.mxu0 0
        %1483 = vmatprep.subr.bf16.mxu0 0
        %1484 = vmatpush1.bf16.msra.mxu0 0
        %1485 = vmatprep.subr.bf16.mxu0 0
        %1486 = vmatpush1.bf16.msra.mxu0 0
        %1487 = vmatprep.subr.bf16.mxu0 0
        %1488 = vmatpush1.bf16.msra.mxu0 0
        %1489 = vmatprep.subr.bf16.mxu0 0
        %1490 = vmatpush1.bf16.msra.mxu0 0
        %1491 = vmatprep.subr.bf16.mxu0 0
        %1492 = vmatpush1.bf16.msra.mxu0 %v1475
        %1493 = vmatprep.subr.bf16.mxu0 0
        %1494 = vmatpush2.bf16.msra.mxu0 0
        %1495 = vmatprep.subr.bf16.mxu0 0
        %1496 = vmatpush2.bf16.msra.mxu0 0
        %1497 = vmatprep.subr.bf16.mxu0 0
        %1498 = vmatpush2.bf16.msra.mxu0 0
        %1499 = vmatprep.subr.bf16.mxu0 0
        %1500 = vmatpush2.bf16.msra.mxu0 0
        %1501 = vmatprep.subr.bf16.mxu0 0
        %1502 = vmatpush2.bf16.msra.mxu0 0
        %1503 = vmatprep.subr.bf16.mxu0 0
        %1504 = vmatpush2.bf16.msra.mxu0 0
        %1505 = vmatprep.subr.bf16.mxu0 0
        %1506 = vmatpush2.bf16.msra.mxu0 0
        %1507 = vmatprep.subr.bf16.mxu0 0
        %1508 = vmatpush2.bf16.msra.mxu0 0
        %1509 = vmatprep.mubr.bf16.mxu0 0
        %1510 = vmatmul.mubr.bf16.gmra.mxu0 %v1472
        %v1511 = vpop.f32.mrf.mxu0
        %v1512 = vadd.f32 0.0, %v1511
        %v1513 = vpop.f32.mrf.mxu0
        %v1514 = vpop.f32.mrf.mxu0
        %v1515 = vpop.f32.mrf.mxu0
        %1516 = vdwg.mxu0
        %1517 = vrot.lane.b32.xlu0 %v1110, 56
        %v1518 = vpop.permute.xlu0 %1517
        %v1520 = vsel %vm1126, %v1468, 0
        %v1523 = vsel %vm1251, %v1518, 0
        %1525 = vmatprep.subr.bf16.mxu0 0
        %1526 = vmatpush1.bf16.msra.mxu0 0
        %1527 = vmatprep.subr.bf16.mxu0 0
        %1528 = vmatpush1.bf16.msra.mxu0 0
        %1529 = vmatprep.subr.bf16.mxu0 0
        %1530 = vmatpush1.bf16.msra.mxu0 0
        %1531 = vmatprep.subr.bf16.mxu0 0
        %1532 = vmatpush1.bf16.msra.mxu0 0
        %1533 = vmatprep.subr.bf16.mxu0 0
        %1534 = vmatpush1.bf16.msra.mxu0 0
        %1535 = vmatprep.subr.bf16.mxu0 0
        %1536 = vmatpush1.bf16.msra.mxu0 0
        %1537 = vmatprep.subr.bf16.mxu0 0
        %1538 = vmatpush1.bf16.msra.mxu0 0
        %1539 = vmatprep.subr.bf16.mxu0 0
        %1540 = vmatpush1.bf16.msra.mxu0 %v1523
        %1541 = vmatprep.subr.bf16.mxu0 0
        %1542 = vmatpush2.bf16.msra.mxu0 0
        %1543 = vmatprep.subr.bf16.mxu0 0
        %1544 = vmatpush2.bf16.msra.mxu0 0
        %1545 = vmatprep.subr.bf16.mxu0 0
        %1546 = vmatpush2.bf16.msra.mxu0 0
        %1547 = vmatprep.subr.bf16.mxu0 0
        %1548 = vmatpush2.bf16.msra.mxu0 0
        %1549 = vmatprep.subr.bf16.mxu0 0
        %1550 = vmatpush2.bf16.msra.mxu0 0
        %1551 = vmatprep.subr.bf16.mxu0 0
        %1552 = vmatpush2.bf16.msra.mxu0 0
        %1553 = vmatprep.subr.bf16.mxu0 0
        %1554 = vmatpush2.bf16.msra.mxu0 0
        %1555 = vmatprep.subr.bf16.mxu0 0
        %1556 = vmatpush2.bf16.msra.mxu0 0
        %1557 = vmatprep.mubr.bf16.mxu0 0
        %1558 = vmatmul.mubr.bf16.gmra.mxu0 %v1520
        %v1559 = vpop.f32.mrf.mxu0
        %v1560 = vadd.f32 0.0, %v1559
        %v1561 = vpop.f32.mrf.mxu0
        %v1562 = vpop.f32.mrf.mxu0
        %v1563 = vpop.f32.mrf.mxu0
        %1564 = vdwg.mxu0
        %1565 = vrot.lane.b32.xlu0 %v1107, 112
        %v1566 = vpop.permute.xlu0 %1565
        %1567 = vrot.lane.b32.xlu0 %v1109, 80
        %v1568 = vpop.permute.xlu0 %1567
        %v1570 = vsel %vm1126, %v1566, 0
        %v1573 = vsel %vm1126, %v1568, 0
        %1575 = vmatprep.subr.bf16.mxu0 0
        %1576 = vmatpush1.bf16.xpose.msra.mxu0 0
        %1577 = vmatprep.subr.bf16.mxu0 0
        %1578 = vmatpush1.bf16.xpose.msra.mxu0 0
        %1579 = vmatprep.subr.bf16.mxu0 0
        %1580 = vmatpush1.bf16.xpose.msra.mxu0 0
        %1581 = vmatprep.subr.bf16.mxu0 0
        %1582 = vmatpush1.bf16.xpose.msra.mxu0 0
        %1583 = vmatprep.subr.bf16.mxu0 0
        %1584 = vmatpush1.bf16.xpose.msra.mxu0 0
        %1585 = vmatprep.subr.bf16.mxu0 0
        %1586 = vmatpush1.bf16.xpose.msra.mxu0 0
        %1587 = vmatprep.subr.bf16.mxu0 0
        %1588 = vmatpush1.bf16.xpose.msra.mxu0 0
        %1589 = vmatprep.subr.bf16.mxu0 0
        %1590 = vmatpush1.bf16.xpose.msra.mxu0 %v1573
        %1591 = vmatprep.subr.bf16.mxu0 0
        %1592 = vmatpush2.bf16.xpose.msra.mxu0 0
        %1593 = vmatprep.subr.bf16.mxu0 0
        %1594 = vmatpush2.bf16.xpose.msra.mxu0 0
        %1595 = vmatprep.subr.bf16.mxu0 0
        %1596 = vmatpush2.bf16.xpose.msra.mxu0 0
        %1597 = vmatprep.subr.bf16.mxu0 0
        %1598 = vmatpush2.bf16.xpose.msra.mxu0 0
        %1599 = vmatprep.subr.bf16.mxu0 0
        %1600 = vmatpush2.bf16.xpose.msra.mxu0 0
        %1601 = vmatprep.subr.bf16.mxu0 0
        %1602 = vmatpush2.bf16.xpose.msra.mxu0 0
        %1603 = vmatprep.subr.bf16.mxu0 0
        %1604 = vmatpush2.bf16.xpose.msra.mxu0 0
        %1605 = vmatprep.subr.bf16.mxu0 0
        %1606 = vmatpush2.bf16.xpose.msra.mxu0 0
        %1607 = vmatprep.mubr.bf16.mxu0 0
        %1608 = vmatmul.mubr.bf16.gmra.mxu0 %v1570
        %v1609 = vpop.f32.mrf.mxu0
        %v1610 = vadd.f32 %v1116, %v1609
        %v1611 = vpop.f32.mrf.mxu0
        %v1612 = vpop.f32.mrf.mxu0
        %v1613 = vpop.f32.mrf.mxu0
        %1614 = vdwg.mxu0
        %1615 = vrot.lane.b32.xlu0 %v1108, 112
        %v1616 = vpop.permute.xlu0 %1615
        %1617 = vrot.lane.b32.xlu0 %v1110, 80
        %v1618 = vpop.permute.xlu0 %1617
        %v1620 = vsel %vm1126, %v1616, 0
        %v1623 = vsel %vm1126, %v1618, 0
        %1625 = vmatprep.subr.bf16.mxu0 0
        %1626 = vmatpush1.bf16.xpose.msra.mxu0 0
        %1627 = vmatprep.subr.bf16.mxu0 0
        %1628 = vmatpush1.bf16.xpose.msra.mxu0 0
        %1629 = vmatprep.subr.bf16.mxu0 0
        %1630 = vmatpush1.bf16.xpose.msra.mxu0 0
        %1631 = vmatprep.subr.bf16.mxu0 0
        %1632 = vmatpush1.bf16.xpose.msra.mxu0 0
        %1633 = vmatprep.subr.bf16.mxu0 0
        %1634 = vmatpush1.bf16.xpose.msra.mxu0 0
        %1635 = vmatprep.subr.bf16.mxu0 0
        %1636 = vmatpush1.bf16.xpose.msra.mxu0 0
        %1637 = vmatprep.subr.bf16.mxu0 0
        %1638 = vmatpush1.bf16.xpose.msra.mxu0 0
        %1639 = vmatprep.subr.bf16.mxu0 0
        %1640 = vmatpush1.bf16.xpose.msra.mxu0 %v1623
        %1641 = vmatprep.subr.bf16.mxu0 0
        %1642 = vmatpush2.bf16.xpose.msra.mxu0 0
        %1643 = vmatprep.subr.bf16.mxu0 0
        %1644 = vmatpush2.bf16.xpose.msra.mxu0 0
        %1645 = vmatprep.subr.bf16.mxu0 0
        %1646 = vmatpush2.bf16.xpose.msra.mxu0 0
        %1647 = vmatprep.subr.bf16.mxu0 0
        %1648 = vmatpush2.bf16.xpose.msra.mxu0 0
        %1649 = vmatprep.subr.bf16.mxu0 0
        %1650 = vmatpush2.bf16.xpose.msra.mxu0 0
        %1651 = vmatprep.subr.bf16.mxu0 0
        %1652 = vmatpush2.bf16.xpose.msra.mxu0 0
        %1653 = vmatprep.subr.bf16.mxu0 0
        %1654 = vmatpush2.bf16.xpose.msra.mxu0 0
        %1655 = vmatprep.subr.bf16.mxu0 0
        %1656 = vmatpush2.bf16.xpose.msra.mxu0 0
        %1657 = vmatprep.mubr.bf16.mxu0 0
        %1658 = vmatmul.mubr.bf16.gmra.mxu0 %v1620
        %v1659 = vpop.f32.mrf.mxu0
        %v1660 = vadd.f32 %v1120, %v1659
        %v1661 = vpop.f32.mrf.mxu0
        %v1662 = vpop.f32.mrf.mxu0
        %v1663 = vpop.f32.mrf.mxu0
        %1664 = vdwg.mxu0
        %v1665 = vsel %vm1126, %v1610, -inf
        %1666 = vmax.xlane.f32.xlu0 %v1665
        %v1667 = vpop.xlane.xlu0 %1666
        %v1668 = vsel %vm1126, %v1660, -inf
        %1669 = vmax.xlane.f32.xlu0 %v1668
        %v1670 = vpop.xlane.xlu0 %1669
        %v1671 = vsub.f32 %v1610, %v1667
        %v1672 = vsub.f32 %v1660, %v1670
        %v1673 = vmul.f32 %v1671, 1.442695
        %v1674 = vpow.pop %v1673
        %v1675 = vmul.f32 %v1672, 1.442695
        %v1676 = vpow.pop %v1675
        %v1677 = vsel %vm1126, %v1674, 0.0
        %1678 = vadd.xlane.f32.xlu0 %v1677
        %v1679 = vpop.xlane.xlu0 %1678
        %v1680 = vsel %vm1126, %v1676, 0.0
        %1681 = vadd.xlane.f32.xlu0 %v1680
        %v1682 = vpop.xlane.xlu0 %1681
        %v1683 = vrcp.pop %v1679
        %v1684 = vmul.f32 %v1674, %v1683
        %v1685 = vrcp.pop %v1682
        %v1686 = vmul.f32 %v1676, %v1685
        %v1687 = vpack.c.bf16 %v1684, %v1684
        %v1688 = vpack.c.bf16 %v1686, %v1686
        %1689 = vrot.lane.b32.xlu0 %v1109, 48
        %v1690 = vpop.permute.xlu0 %1689
        %v1692 = vsel %vm1126, %v1687, 0
        %v1695 = vsel %vm1251, %v1690, 0
        %1697 = vmatprep.subr.bf16.mxu0 0
        %1698 = vmatpush1.bf16.msra.mxu0 0
        %1699 = vmatprep.subr.bf16.mxu0 0
        %1700 = vmatpush1.bf16.msra.mxu0 0
        %1701 = vmatprep.subr.bf16.mxu0 0
        %1702 = vmatpush1.bf16.msra.mxu0 0
        %1703 = vmatprep.subr.bf16.mxu0 0
        %1704 = vmatpush1.bf16.msra.mxu0 0
        %1705 = vmatprep.subr.bf16.mxu0 0
        %1706 = vmatpush1.bf16.msra.mxu0 0
        %1707 = vmatprep.subr.bf16.mxu0 0
        %1708 = vmatpush1.bf16.msra.mxu0 0
        %1709 = vmatprep.subr.bf16.mxu0 0
        %1710 = vmatpush1.bf16.msra.mxu0 0
        %1711 = vmatprep.subr.bf16.mxu0 0
        %1712 = vmatpush1.bf16.msra.mxu0 %v1695
        %1713 = vmatprep.subr.bf16.mxu0 0
        %1714 = vmatpush2.bf16.msra.mxu0 0
        %1715 = vmatprep.subr.bf16.mxu0 0
        %1716 = vmatpush2.bf16.msra.mxu0 0
        %1717 = vmatprep.subr.bf16.mxu0 0
        %1718 = vmatpush2.bf16.msra.mxu0 0
        %1719 = vmatprep.subr.bf16.mxu0 0
        %1720 = vmatpush2.bf16.msra.mxu0 0
        %1721 = vmatprep.subr.bf16.mxu0 0
        %1722 = vmatpush2.bf16.msra.mxu0 0
        %1723 = vmatprep.subr.bf16.mxu0 0
        %1724 = vmatpush2.bf16.msra.mxu0 0
        %1725 = vmatprep.subr.bf16.mxu0 0
        %1726 = vmatpush2.bf16.msra.mxu0 0
        %1727 = vmatprep.subr.bf16.mxu0 0
        %1728 = vmatpush2.bf16.msra.mxu0 0
        %1729 = vmatprep.mubr.bf16.mxu0 0
        %1730 = vmatmul.mubr.bf16.gmra.mxu0 %v1692
        %v1731 = vpop.f32.mrf.mxu0
        %v1732 = vadd.f32 0.0, %v1731
        %v1733 = vpop.f32.mrf.mxu0
        %v1734 = vpop.f32.mrf.mxu0
        %v1735 = vpop.f32.mrf.mxu0
        %1736 = vdwg.mxu0
        %1737 = vrot.lane.b32.xlu0 %v1110, 48
        %v1738 = vpop.permute.xlu0 %1737
        %v1740 = vsel %vm1126, %v1688, 0
        %v1743 = vsel %vm1251, %v1738, 0
        %1745 = vmatprep.subr.bf16.mxu0 0
        %1746 = vmatpush1.bf16.msra.mxu0 0
        %1747 = vmatprep.subr.bf16.mxu0 0
        %1748 = vmatpush1.bf16.msra.mxu0 0
        %1749 = vmatprep.subr.bf16.mxu0 0
        %1750 = vmatpush1.bf16.msra.mxu0 0
        %1751 = vmatprep.subr.bf16.mxu0 0
        %1752 = vmatpush1.bf16.msra.mxu0 0
        %1753 = vmatprep.subr.bf16.mxu0 0
        %1754 = vmatpush1.bf16.msra.mxu0 0
        %1755 = vmatprep.subr.bf16.mxu0 0
        %1756 = vmatpush1.bf16.msra.mxu0 0
        %1757 = vmatprep.subr.bf16.mxu0 0
        %1758 = vmatpush1.bf16.msra.mxu0 0
        %1759 = vmatprep.subr.bf16.mxu0 0
        %1760 = vmatpush1.bf16.msra.mxu0 %v1743
        %1761 = vmatprep.subr.bf16.mxu0 0
        %1762 = vmatpush2.bf16.msra.mxu0 0
        %1763 = vmatprep.subr.bf16.mxu0 0
        %1764 = vmatpush2.bf16.msra.mxu0 0
        %1765 = vmatprep.subr.bf16.mxu0 0
        %1766 = vmatpush2.bf16.msra.mxu0 0
        %1767 = vmatprep.subr.bf16.mxu0 0
        %1768 = vmatpush2.bf16.msra.mxu0 0
        %1769 = vmatprep.subr.bf16.mxu0 0
        %1770 = vmatpush2.bf16.msra.mxu0 0
        %1771 = vmatprep.subr.bf16.mxu0 0
        %1772 = vmatpush2.bf16.msra.mxu0 0
        %1773 = vmatprep.subr.bf16.mxu0 0
        %1774 = vmatpush2.bf16.msra.mxu0 0
        %1775 = vmatprep.subr.bf16.mxu0 0
        %1776 = vmatpush2.bf16.msra.mxu0 0
        %1777 = vmatprep.mubr.bf16.mxu0 0
        %1778 = vmatmul.mubr.bf16.gmra.mxu0 %v1740
        %v1779 = vpop.f32.mrf.mxu0
        %v1780 = vadd.f32 0.0, %v1779
        %v1781 = vpop.f32.mrf.mxu0
        %v1782 = vpop.f32.mrf.mxu0
        %v1783 = vpop.f32.mrf.mxu0
        %1784 = vdwg.mxu0
        %1785 = vrot.lane.b32.xlu0 %v1107, 104
        %v1786 = vpop.permute.xlu0 %1785
        %1787 = vrot.lane.b32.xlu0 %v1109, 72
        %v1788 = vpop.permute.xlu0 %1787
        %v1790 = vsel %vm1126, %v1786, 0
        %v1793 = vsel %vm1126, %v1788, 0
        %1795 = vmatprep.subr.bf16.mxu0 0
        %1796 = vmatpush1.bf16.xpose.msra.mxu0 0
        %1797 = vmatprep.subr.bf16.mxu0 0
        %1798 = vmatpush1.bf16.xpose.msra.mxu0 0
        %1799 = vmatprep.subr.bf16.mxu0 0
        %1800 = vmatpush1.bf16.xpose.msra.mxu0 0
        %1801 = vmatprep.subr.bf16.mxu0 0
        %1802 = vmatpush1.bf16.xpose.msra.mxu0 0
        %1803 = vmatprep.subr.bf16.mxu0 0
        %1804 = vmatpush1.bf16.xpose.msra.mxu0 0
        %1805 = vmatprep.subr.bf16.mxu0 0
        %1806 = vmatpush1.bf16.xpose.msra.mxu0 0
        %1807 = vmatprep.subr.bf16.mxu0 0
        %1808 = vmatpush1.bf16.xpose.msra.mxu0 0
        %1809 = vmatprep.subr.bf16.mxu0 0
        %1810 = vmatpush1.bf16.xpose.msra.mxu0 %v1793
        %1811 = vmatprep.subr.bf16.mxu0 0
        %1812 = vmatpush2.bf16.xpose.msra.mxu0 0
        %1813 = vmatprep.subr.bf16.mxu0 0
        %1814 = vmatpush2.bf16.xpose.msra.mxu0 0
        %1815 = vmatprep.subr.bf16.mxu0 0
        %1816 = vmatpush2.bf16.xpose.msra.mxu0 0
        %1817 = vmatprep.subr.bf16.mxu0 0
        %1818 = vmatpush2.bf16.xpose.msra.mxu0 0
        %1819 = vmatprep.subr.bf16.mxu0 0
        %1820 = vmatpush2.bf16.xpose.msra.mxu0 0
        %1821 = vmatprep.subr.bf16.mxu0 0
        %1822 = vmatpush2.bf16.xpose.msra.mxu0 0
        %1823 = vmatprep.subr.bf16.mxu0 0
        %1824 = vmatpush2.bf16.xpose.msra.mxu0 0
        %1825 = vmatprep.subr.bf16.mxu0 0
        %1826 = vmatpush2.bf16.xpose.msra.mxu0 0
        %1827 = vmatprep.mubr.bf16.mxu0 0
        %1828 = vmatmul.mubr.bf16.gmra.mxu0 %v1790
        %v1829 = vpop.f32.mrf.mxu0
        %v1830 = vadd.f32 %v1116, %v1829
        %v1831 = vpop.f32.mrf.mxu0
        %v1832 = vpop.f32.mrf.mxu0
        %v1833 = vpop.f32.mrf.mxu0
        %1834 = vdwg.mxu0
        %1835 = vrot.lane.b32.xlu0 %v1108, 104
        %v1836 = vpop.permute.xlu0 %1835
        %1837 = vrot.lane.b32.xlu0 %v1110, 72
        %v1838 = vpop.permute.xlu0 %1837
        %v1840 = vsel %vm1126, %v1836, 0
        %v1843 = vsel %vm1126, %v1838, 0
        %1845 = vmatprep.subr.bf16.mxu0 0
        %1846 = vmatpush1.bf16.xpose.msra.mxu0 0
        %1847 = vmatprep.subr.bf16.mxu0 0
        %1848 = vmatpush1.bf16.xpose.msra.mxu0 0
        %1849 = vmatprep.subr.bf16.mxu0 0
        %1850 = vmatpush1.bf16.xpose.msra.mxu0 0
        %1851 = vmatprep.subr.bf16.mxu0 0
        %1852 = vmatpush1.bf16.xpose.msra.mxu0 0
        %1853 = vmatprep.subr.bf16.mxu0 0
        %1854 = vmatpush1.bf16.xpose.msra.mxu0 0
        %1855 = vmatprep.subr.bf16.mxu0 0
        %1856 = vmatpush1.bf16.xpose.msra.mxu0 0
        %1857 = vmatprep.subr.bf16.mxu0 0
        %1858 = vmatpush1.bf16.xpose.msra.mxu0 0
        %1859 = vmatprep.subr.bf16.mxu0 0
        %1860 = vmatpush1.bf16.xpose.msra.mxu0 %v1843
        %1861 = vmatprep.subr.bf16.mxu0 0
        %1862 = vmatpush2.bf16.xpose.msra.mxu0 0
        %1863 = vmatprep.subr.bf16.mxu0 0
        %1864 = vmatpush2.bf16.xpose.msra.mxu0 0
        %1865 = vmatprep.subr.bf16.mxu0 0
        %1866 = vmatpush2.bf16.xpose.msra.mxu0 0
        %1867 = vmatprep.subr.bf16.mxu0 0
        %1868 = vmatpush2.bf16.xpose.msra.mxu0 0
        %1869 = vmatprep.subr.bf16.mxu0 0
        %1870 = vmatpush2.bf16.xpose.msra.mxu0 0
        %1871 = vmatprep.subr.bf16.mxu0 0
        %1872 = vmatpush2.bf16.xpose.msra.mxu0 0
        %1873 = vmatprep.subr.bf16.mxu0 0
        %1874 = vmatpush2.bf16.xpose.msra.mxu0 0
        %1875 = vmatprep.subr.bf16.mxu0 0
        %1876 = vmatpush2.bf16.xpose.msra.mxu0 0
        %1877 = vmatprep.mubr.bf16.mxu0 0
        %1878 = vmatmul.mubr.bf16.gmra.mxu0 %v1840
        %v1879 = vpop.f32.mrf.mxu0
        %v1880 = vadd.f32 %v1120, %v1879
        %v1881 = vpop.f32.mrf.mxu0
        %v1882 = vpop.f32.mrf.mxu0
        %v1883 = vpop.f32.mrf.mxu0
        %1884 = vdwg.mxu0
        %v1885 = vsel %vm1126, %v1830, -inf
        %1886 = vmax.xlane.f32.xlu0 %v1885
        %v1887 = vpop.xlane.xlu0 %1886
        %v1888 = vsel %vm1126, %v1880, -inf
        %1889 = vmax.xlane.f32.xlu0 %v1888
        %v1890 = vpop.xlane.xlu0 %1889
        %v1891 = vsub.f32 %v1830, %v1887
        %v1892 = vsub.f32 %v1880, %v1890
        %v1893 = vmul.f32 %v1891, 1.442695
        %v1894 = vpow.pop %v1893
        %v1895 = vmul.f32 %v1892, 1.442695
        %v1896 = vpow.pop %v1895
        %v1897 = vsel %vm1126, %v1894, 0.0
        %1898 = vadd.xlane.f32.xlu0 %v1897
        %v1899 = vpop.xlane.xlu0 %1898
        %v1900 = vsel %vm1126, %v1896, 0.0
        %1901 = vadd.xlane.f32.xlu0 %v1900
        %v1902 = vpop.xlane.xlu0 %1901
        %v1903 = vrcp.pop %v1899
        %v1904 = vmul.f32 %v1894, %v1903
        %v1905 = vrcp.pop %v1902
        %v1906 = vmul.f32 %v1896, %v1905
        %v1907 = vpack.c.bf16 %v1904, %v1904
        %v1908 = vpack.c.bf16 %v1906, %v1906
        %1909 = vrot.lane.b32.xlu0 %v1109, 40
        %v1910 = vpop.permute.xlu0 %1909
        %v1912 = vsel %vm1126, %v1907, 0
        %v1915 = vsel %vm1251, %v1910, 0
        %1917 = vmatprep.subr.bf16.mxu0 0
        %1918 = vmatpush1.bf16.msra.mxu0 0
        %1919 = vmatprep.subr.bf16.mxu0 0
        %1920 = vmatpush1.bf16.msra.mxu0 0
        %1921 = vmatprep.subr.bf16.mxu0 0
        %1922 = vmatpush1.bf16.msra.mxu0 0
        %1923 = vmatprep.subr.bf16.mxu0 0
        %1924 = vmatpush1.bf16.msra.mxu0 0
        %1925 = vmatprep.subr.bf16.mxu0 0
        %1926 = vmatpush1.bf16.msra.mxu0 0
        %1927 = vmatprep.subr.bf16.mxu0 0
        %1928 = vmatpush1.bf16.msra.mxu0 0
        %1929 = vmatprep.subr.bf16.mxu0 0
        %1930 = vmatpush1.bf16.msra.mxu0 0
        %1931 = vmatprep.subr.bf16.mxu0 0
        %1932 = vmatpush1.bf16.msra.mxu0 %v1915
        %1933 = vmatprep.subr.bf16.mxu0 0
        %1934 = vmatpush2.bf16.msra.mxu0 0
        %1935 = vmatprep.subr.bf16.mxu0 0
        %1936 = vmatpush2.bf16.msra.mxu0 0
        %1937 = vmatprep.subr.bf16.mxu0 0
        %1938 = vmatpush2.bf16.msra.mxu0 0
        %1939 = vmatprep.subr.bf16.mxu0 0
        %1940 = vmatpush2.bf16.msra.mxu0 0
        %1941 = vmatprep.subr.bf16.mxu0 0
        %1942 = vmatpush2.bf16.msra.mxu0 0
        %1943 = vmatprep.subr.bf16.mxu0 0
        %1944 = vmatpush2.bf16.msra.mxu0 0
        %1945 = vmatprep.subr.bf16.mxu0 0
        %1946 = vmatpush2.bf16.msra.mxu0 0
        %1947 = vmatprep.subr.bf16.mxu0 0
        %1948 = vmatpush2.bf16.msra.mxu0 0
        %1949 = vmatprep.mubr.bf16.mxu0 0
        %1950 = vmatmul.mubr.bf16.gmra.mxu0 %v1912
        %v1951 = vpop.f32.mrf.mxu0
        %v1952 = vadd.f32 0.0, %v1951
        %v1953 = vpop.f32.mrf.mxu0
        %v1954 = vpop.f32.mrf.mxu0
        %v1955 = vpop.f32.mrf.mxu0
        %1956 = vdwg.mxu0
        %1957 = vrot.lane.b32.xlu0 %v1110, 40
        %v1958 = vpop.permute.xlu0 %1957
        %v1960 = vsel %vm1126, %v1908, 0
        %v1963 = vsel %vm1251, %v1958, 0
        %1965 = vmatprep.subr.bf16.mxu0 0
        %1966 = vmatpush1.bf16.msra.mxu0 0
        %1967 = vmatprep.subr.bf16.mxu0 0
        %1968 = vmatpush1.bf16.msra.mxu0 0
        %1969 = vmatprep.subr.bf16.mxu0 0
        %1970 = vmatpush1.bf16.msra.mxu0 0
        %1971 = vmatprep.subr.bf16.mxu0 0
        %1972 = vmatpush1.bf16.msra.mxu0 0
        %1973 = vmatprep.subr.bf16.mxu0 0
        %1974 = vmatpush1.bf16.msra.mxu0 0
        %1975 = vmatprep.subr.bf16.mxu0 0
        %1976 = vmatpush1.bf16.msra.mxu0 0
        %1977 = vmatprep.subr.bf16.mxu0 0
        %1978 = vmatpush1.bf16.msra.mxu0 0
        %1979 = vmatprep.subr.bf16.mxu0 0
        %1980 = vmatpush1.bf16.msra.mxu0 %v1963
        %1981 = vmatprep.subr.bf16.mxu0 0
        %1982 = vmatpush2.bf16.msra.mxu0 0
        %1983 = vmatprep.subr.bf16.mxu0 0
        %1984 = vmatpush2.bf16.msra.mxu0 0
        %1985 = vmatprep.subr.bf16.mxu0 0
        %1986 = vmatpush2.bf16.msra.mxu0 0
        %1987 = vmatprep.subr.bf16.mxu0 0
        %1988 = vmatpush2.bf16.msra.mxu0 0
        %1989 = vmatprep.subr.bf16.mxu0 0
        %1990 = vmatpush2.bf16.msra.mxu0 0
        %1991 = vmatprep.subr.bf16.mxu0 0
        %1992 = vmatpush2.bf16.msra.mxu0 0
        %1993 = vmatprep.subr.bf16.mxu0 0
        %1994 = vmatpush2.bf16.msra.mxu0 0
        %1995 = vmatprep.subr.bf16.mxu0 0
        %1996 = vmatpush2.bf16.msra.mxu0 0
        %1997 = vmatprep.mubr.bf16.mxu0 0
        %1998 = vmatmul.mubr.bf16.gmra.mxu0 %v1960
        %v1999 = vpop.f32.mrf.mxu0
        %v2000 = vadd.f32 0.0, %v1999
        %v2001 = vpop.f32.mrf.mxu0
        %v2002 = vpop.f32.mrf.mxu0
        %v2003 = vpop.f32.mrf.mxu0
        %2004 = vdwg.mxu0
        %2007 = vrot.lane.b32.xlu0 %v1512, 8
        %v2008 = vpop.permute.xlu0 %2007
        %2009 = vrot.lane.b32.xlu0 %v1560, 8
        %v2010 = vpop.permute.xlu0 %2009
        %2015 = vrot.lane.b32.xlu0 %v1732, 16
        %v2016 = vpop.permute.xlu0 %2015
        %2017 = vrot.lane.b32.xlu0 %v1780, 16
        %v2018 = vpop.permute.xlu0 %2017
        %2023 = vrot.lane.b32.xlu0 %v1952, 24
        %v2024 = vpop.permute.xlu0 %2023
        %2025 = vrot.lane.b32.xlu0 %v2000, 24
        %v2026 = vpop.permute.xlu0 %2025
        %v2029 = vsel %vm1126, %v1290, %v2008
        %v2030 = vsel %vm1126, %v1338, %v2010
        %vm2031 = vcmask 130048
        %v2032 = vsel %vm2031, %v2029, %v2016
        %v2033 = vsel %vm2031, %v2030, %v2018
        %vm2034 = vcmask 195584
        %v2035 = vsel %vm2034, %v2032, %v2024
        %v2036 = vsel %vm2034, %v2033, %v2026
        %v2037 = vpack.c.bf16 %v2036, %v2035
        %v2039 = vlaneseq
        %v2040 = vshrl.u32 %v2039, 7
        %v2041 = vsub.s32 0, %v2040
        %v2042 = vrot.slane %v745, %v2041
        %v2048 = vunpack.c.l.b16 %v741
        %v2049 = vunpack.c.l.b16 %v742
        %v2050 = vunpack.c.l.b16 %v743
        %v2051 = vunpack.c.l.b16 %v744
        %v2052 = vpack.c.b16 %v2049, %v2048
        %v2053 = vpack.c.b16 %v2051, %v2050
        %v2057 = vsel %vm1060, %v2037, 0
        %2059 = vmatprep.subr.bf16.mxu0 0
        %2060 = vmatpush1.bf16.msra.mxu0 0
        %2061 = vmatprep.subr.bf16.mxu0 0
        %2062 = vmatpush1.bf16.msra.mxu0 0
        %2063 = vmatprep.subr.bf16.mxu0 0
        %2064 = vmatpush1.bf16.msra.mxu0 0
        %2065 = vmatprep.subr.bf16.mxu0 0
        %2066 = vmatpush1.bf16.msra.mxu0 0
        %2067 = vmatprep.subr.bf16.mxu0 0
        %2068 = vmatpush1.bf16.msra.mxu0 0
        %2069 = vmatprep.subr.bf16.mxu0 0
        %2070 = vmatpush1.bf16.msra.mxu0 0
        %2071 = vmatprep.subr.bf16.mxu0 0
        %2072 = vmatpush1.bf16.msra.mxu0 %v2053
        %2073 = vmatprep.subr.bf16.mxu0 0
        %2074 = vmatpush1.bf16.msra.mxu0 %v2052
        %2075 = vmatprep.subr.bf16.mxu0 0
        %2076 = vmatpush2.bf16.msra.mxu0 0
        %2077 = vmatprep.subr.bf16.mxu0 0
        %2078 = vmatpush2.bf16.msra.mxu0 0
        %2079 = vmatprep.subr.bf16.mxu0 0
        %2080 = vmatpush2.bf16.msra.mxu0 0
        %2081 = vmatprep.subr.bf16.mxu0 0
        %2082 = vmatpush2.bf16.msra.mxu0 0
        %2083 = vmatprep.subr.bf16.mxu0 0
        %2084 = vmatpush2.bf16.msra.mxu0 0
        %2085 = vmatprep.subr.bf16.mxu0 0
        %2086 = vmatpush2.bf16.msra.mxu0 0
        %2087 = vmatprep.subr.bf16.mxu0 0
        %2088 = vmatpush2.bf16.msra.mxu0 0
        %2089 = vmatprep.subr.bf16.mxu0 0
        %2090 = vmatpush2.bf16.msra.mxu0 0
        %2091 = vmatprep.mubr.bf16.mxu0 0
        %2092 = vmatmul.mubr.bf16.gmra.mxu0 %v2057
        %v2093 = vpop.f32.mrf.mxu0
        %v2094 = vadd.f32 %v2042, %v2093
        %v2095 = vpop.f32.mrf.mxu0
        %v2096 = vpop.f32.mrf.mxu0
        %v2097 = vadd.f32 %v2042, %v2096
        %v2098 = vpop.f32.mrf.mxu0
        %2099 = vdwg.mxu0
        %v2100 = vadd.f32 %v734, %v2094
        %v2101 = vadd.f32 %v735, %v2097
        %v2102 = vsel %vm1060, %v2100, 0.0
        %2103 = vadd.xlane.f32.xlu0 %v2102
        %v2104 = vpop.xlane.xlu0 %2103
        %v2105 = vsel %vm1060, %v2101, 0.0
        %2106 = vadd.xlane.f32.xlu0 %v2105
        %v2107 = vpop.xlane.xlu0 %2106
        %v2108 = vrcp.pop 32.0
        %v2109 = vmul.f32 %v2104, %v2108
        %v2110 = vmul.f32 %v2107, %v2108
        %v2111 = vsub.f32 %v2100, %v2109
        %v2112 = vsub.f32 %v2101, %v2110
        %v2113 = vmul.f32 %v2111, %v2111
        %v2114 = vmul.f32 %v2112, %v2112
        %v2115 = vsel %vm1060, %v2113, 0.0
        %2116 = vadd.xlane.f32.xlu0 %v2115
        %v2117 = vpop.xlane.xlu0 %2116
        %v2118 = vsel %vm1060, %v2114, 0.0
        %2119 = vadd.xlane.f32.xlu0 %v2118
        %v2120 = vpop.xlane.xlu0 %2119
        %v2121 = vmul.f32 %v2117, %v2108
        %v2122 = vmul.f32 %v2120, %v2108
        %v2123 = vadd.f32 %v2121, 1e-05
        %v2124 = vadd.f32 %v2122, 1e-05
        %v2125 = vrsqrt.pop %v2123
        %v2126 = vrsqrt.pop %v2124
        %v2127 = vmul.f32 %v2111, %v2125
        %v2128 = vmul.f32 %v2112, %v2126
        %v2130 = vlaneseq
        %v2131 = vshrl.u32 %v2130, 7
        %v2132 = vsub.s32 0, %v2131
        %v2133 = vrot.slane %v746, %v2132
        %v2135 = vmul.f32 %v2127, %v2133
        %v2136 = vmul.f32 %v2128, %v2133
        %v2138 = vlaneseq
        %v2139 = vshrl.u32 %v2138, 7
        %v2140 = vsub.s32 0, %v2139
        %v2141 = vrot.slane %v747, %v2140
        %v2143 = vadd.f32 %v2135, %v2141
        %v2144 = vadd.f32 %v2136, %v2141
        %v2145 = vpack.c.bf16 %v2144, %v2143
        %v2148 = vlaneseq
        %v2149 = vshrl.u32 %v2148, 7
        %v2150 = vsub.s32 0, %v2149
        %v2151 = vrot.slane %v780, %v2150
        %v2152 = vlaneseq
        %v2153 = vshrl.u32 %v2152, 7
        %v2154 = vsub.s32 1, %v2153
        %v2155 = vrot.slane %v780, %v2154
        %v2156 = vlaneseq
        %v2157 = vshrl.u32 %v2156, 7
        %v2158 = vsub.s32 2, %v2157
        %v2159 = vrot.slane %v780, %v2158
        %v2160 = vlaneseq
        %v2161 = vshrl.u32 %v2160, 7
        %v2162 = vsub.s32 3, %v2161
        %v2163 = vrot.slane %v780, %v2162
        %v2164 = vlaneseq
        %v2165 = vshrl.u32 %v2164, 7
        %v2166 = vsub.s32 4, %v2165
        %v2167 = vrot.slane %v780, %v2166
        %v2168 = vlaneseq
        %v2169 = vshrl.u32 %v2168, 7
        %v2170 = vsub.s32 5, %v2169
        %v2171 = vrot.slane %v780, %v2170
        %v2172 = vlaneseq
        %v2173 = vshrl.u32 %v2172, 7
        %v2174 = vsub.s32 6, %v2173
        %v2175 = vrot.slane %v780, %v2174
        %v2176 = vlaneseq
        %v2177 = vshrl.u32 %v2176, 7
        %v2178 = vsub.s32 7, %v2177
        %v2179 = vrot.slane %v780, %v2178
        %v2180 = vlaneseq
        %v2181 = vshrl.u32 %v2180, 7
        %v2182 = vsub.s32 0, %v2181
        %v2183 = vrot.slane %v781, %v2182
        %v2184 = vlaneseq
        %v2185 = vshrl.u32 %v2184, 7
        %v2186 = vsub.s32 1, %v2185
        %v2187 = vrot.slane %v781, %v2186
        %v2188 = vlaneseq
        %v2189 = vshrl.u32 %v2188, 7
        %v2190 = vsub.s32 2, %v2189
        %v2191 = vrot.slane %v781, %v2190
        %v2192 = vlaneseq
        %v2193 = vshrl.u32 %v2192, 7
        %v2194 = vsub.s32 3, %v2193
        %v2195 = vrot.slane %v781, %v2194
        %v2196 = vlaneseq
        %v2197 = vshrl.u32 %v2196, 7
        %v2198 = vsub.s32 4, %v2197
        %v2199 = vrot.slane %v781, %v2198
        %v2200 = vlaneseq
        %v2201 = vshrl.u32 %v2200, 7
        %v2202 = vsub.s32 5, %v2201
        %v2203 = vrot.slane %v781, %v2202
        %v2204 = vlaneseq
        %v2205 = vshrl.u32 %v2204, 7
        %v2206 = vsub.s32 6, %v2205
        %v2207 = vrot.slane %v781, %v2206
        %v2208 = vlaneseq
        %v2209 = vshrl.u32 %v2208, 7
        %v2210 = vsub.s32 7, %v2209
        %v2211 = vrot.slane %v781, %v2210
        %v2260 = vunpack.c.l.b16 %v748
        %v2261 = vunpack.c.h.b16 %v748
        %v2262 = vunpack.c.l.b16 %v749
        %v2263 = vunpack.c.h.b16 %v749
        %v2264 = vunpack.c.l.b16 %v750
        %v2265 = vunpack.c.h.b16 %v750
        %v2266 = vunpack.c.l.b16 %v751
        %v2267 = vunpack.c.h.b16 %v751
        %v2268 = vunpack.c.l.b16 %v752
        %v2269 = vunpack.c.h.b16 %v752
        %v2270 = vunpack.c.l.b16 %v753
        %v2271 = vunpack.c.h.b16 %v753
        %v2272 = vunpack.c.l.b16 %v754
        %v2273 = vunpack.c.h.b16 %v754
        %v2274 = vunpack.c.l.b16 %v755
        %v2275 = vunpack.c.h.b16 %v755
        %v2276 = vunpack.c.l.b16 %v756
        %v2277 = vunpack.c.h.b16 %v756
        %v2278 = vunpack.c.l.b16 %v757
        %v2279 = vunpack.c.h.b16 %v757
        %v2280 = vunpack.c.l.b16 %v758
        %v2281 = vunpack.c.h.b16 %v758
        %v2282 = vunpack.c.l.b16 %v759
        %v2283 = vunpack.c.h.b16 %v759
        %v2284 = vunpack.c.l.b16 %v760
        %v2285 = vunpack.c.h.b16 %v760
        %v2286 = vunpack.c.l.b16 %v761
        %v2287 = vunpack.c.h.b16 %v761
        %v2288 = vunpack.c.l.b16 %v762
        %v2289 = vunpack.c.h.b16 %v762
        %v2290 = vunpack.c.l.b16 %v763
        %v2291 = vunpack.c.h.b16 %v763
        %v2292 = vunpack.c.l.b16 %v764
        %v2293 = vunpack.c.h.b16 %v764
        %v2294 = vunpack.c.l.b16 %v765
        %v2295 = vunpack.c.h.b16 %v765
        %v2296 = vunpack.c.l.b16 %v766
        %v2297 = vunpack.c.h.b16 %v766
        %v2298 = vunpack.c.l.b16 %v767
        %v2299 = vunpack.c.h.b16 %v767
        %v2300 = vunpack.c.l.b16 %v768
        %v2301 = vunpack.c.h.b16 %v768
        %v2302 = vunpack.c.l.b16 %v769
        %v2303 = vunpack.c.h.b16 %v769
        %v2304 = vunpack.c.l.b16 %v770
        %v2305 = vunpack.c.h.b16 %v770
        %v2306 = vunpack.c.l.b16 %v771
        %v2307 = vunpack.c.h.b16 %v771
        %v2308 = vunpack.c.l.b16 %v772
        %v2309 = vunpack.c.h.b16 %v772
        %v2310 = vunpack.c.l.b16 %v773
        %v2311 = vunpack.c.h.b16 %v773
        %v2312 = vunpack.c.l.b16 %v774
        %v2313 = vunpack.c.h.b16 %v774
        %v2314 = vunpack.c.l.b16 %v775
        %v2315 = vunpack.c.h.b16 %v775
        %v2316 = vunpack.c.l.b16 %v776
        %v2317 = vunpack.c.h.b16 %v776
        %v2318 = vunpack.c.l.b16 %v777
        %v2319 = vunpack.c.h.b16 %v777
        %v2320 = vunpack.c.l.b16 %v778
        %v2321 = vunpack.c.h.b16 %v778
        %v2322 = vunpack.c.l.b16 %v779
        %v2323 = vunpack.c.h.b16 %v779
        %v2324 = vpack.c.b16 %v2276, %v2260
        %v2325 = vpack.c.b16 %v2277, %v2261
        %v2326 = vpack.c.b16 %v2278, %v2262
        %v2327 = vpack.c.b16 %v2279, %v2263
        %v2328 = vpack.c.b16 %v2280, %v2264
        %v2329 = vpack.c.b16 %v2281, %v2265
        %v2330 = vpack.c.b16 %v2282, %v2266
        %v2331 = vpack.c.b16 %v2283, %v2267
        %v2332 = vpack.c.b16 %v2284, %v2268
        %v2333 = vpack.c.b16 %v2285, %v2269
        %v2334 = vpack.c.b16 %v2286, %v2270
        %v2335 = vpack.c.b16 %v2287, %v2271
        %v2336 = vpack.c.b16 %v2288, %v2272
        %v2337 = vpack.c.b16 %v2289, %v2273
        %v2338 = vpack.c.b16 %v2290, %v2274
        %v2339 = vpack.c.b16 %v2291, %v2275
        %v2340 = vpack.c.b16 %v2308, %v2292
        %v2341 = vpack.c.b16 %v2309, %v2293
        %v2342 = vpack.c.b16 %v2310, %v2294
        %v2343 = vpack.c.b16 %v2311, %v2295
        %v2344 = vpack.c.b16 %v2312, %v2296
        %v2345 = vpack.c.b16 %v2313, %v2297
        %v2346 = vpack.c.b16 %v2314, %v2298
        %v2347 = vpack.c.b16 %v2315, %v2299
        %v2348 = vpack.c.b16 %v2316, %v2300
        %v2349 = vpack.c.b16 %v2317, %v2301
        %v2350 = vpack.c.b16 %v2318, %v2302
        %v2351 = vpack.c.b16 %v2319, %v2303
        %v2352 = vpack.c.b16 %v2320, %v2304
        %v2353 = vpack.c.b16 %v2321, %v2305
        %v2354 = vpack.c.b16 %v2322, %v2306
        %v2355 = vpack.c.b16 %v2323, %v2307
        %v2389 = vsel %vm1060, %v2145, 0
        %2391 = vmatprep.subr.bf16.mxu0 0
        %2392 = vmatpush1.bf16.msra.mxu0 0
        %2393 = vmatprep.subr.bf16.mxu0 0
        %2394 = vmatpush1.bf16.msra.mxu0 0
        %2395 = vmatprep.subr.bf16.mxu0 0
        %2396 = vmatpush1.bf16.msra.mxu0 0
        %2397 = vmatprep.subr.bf16.mxu0 0
        %2398 = vmatpush1.bf16.msra.mxu0 0
        %2399 = vmatprep.subr.bf16.mxu0 0
        %2400 = vmatpush1.bf16.msra.mxu0 0
        %2401 = vmatprep.subr.bf16.mxu0 0
        %2402 = vmatpush1.bf16.msra.mxu0 0
        %2403 = vmatprep.subr.bf16.mxu0 %v2341
        %2404 = vmatpush1.bf16.msra.mxu0 %v2340
        %2405 = vmatprep.subr.bf16.mxu0 %v2325
        %2406 = vmatpush1.bf16.msra.mxu0 %v2324
        %2407 = vmatprep.subr.bf16.mxu0 0
        %2408 = vmatpush2.bf16.msra.mxu0 0
        %2409 = vmatprep.subr.bf16.mxu0 0
        %2410 = vmatpush2.bf16.msra.mxu0 0
        %2411 = vmatprep.subr.bf16.mxu0 0
        %2412 = vmatpush2.bf16.msra.mxu0 0
        %2413 = vmatprep.subr.bf16.mxu0 0
        %2414 = vmatpush2.bf16.msra.mxu0 0
        %2415 = vmatprep.subr.bf16.mxu0 0
        %2416 = vmatpush2.bf16.msra.mxu0 0
        %2417 = vmatprep.subr.bf16.mxu0 0
        %2418 = vmatpush2.bf16.msra.mxu0 0
        %2419 = vmatprep.subr.bf16.mxu0 0
        %2420 = vmatpush2.bf16.msra.mxu0 0
        %2421 = vmatprep.subr.bf16.mxu0 0
        %2422 = vmatpush2.bf16.msra.mxu0 0
        %2423 = vmatprep.mubr.bf16.mxu0 0
        %2424 = vmatmul.mubr.bf16.gmra.mxu0 %v2389
        %v2425 = vpop.f32.mrf.mxu0
        %v2426 = vadd.f32 %v2151, %v2425
        %v2427 = vpop.f32.mrf.mxu0
        %v2428 = vadd.f32 %v2155, %v2427
        %v2429 = vpop.f32.mrf.mxu0
        %v2430 = vadd.f32 %v2151, %v2429
        %v2431 = vpop.f32.mrf.mxu0
        %v2432 = vadd.f32 %v2155, %v2431
        %2433 = vdwg.mxu0
        %2434 = vmatprep.subr.bf16.mxu0 0
        %2435 = vmatpush1.bf16.msra.mxu0 0
        %2436 = vmatprep.subr.bf16.mxu0 0
        %2437 = vmatpush1.bf16.msra.mxu0 0
        %2438 = vmatprep.subr.bf16.mxu0 0
        %2439 = vmatpush1.bf16.msra.mxu0 0
        %2440 = vmatprep.subr.bf16.mxu0 0
        %2441 = vmatpush1.bf16.msra.mxu0 0
        %2442 = vmatprep.subr.bf16.mxu0 0
        %2443 = vmatpush1.bf16.msra.mxu0 0
        %2444 = vmatprep.subr.bf16.mxu0 0
        %2445 = vmatpush1.bf16.msra.mxu0 0
        %2446 = vmatprep.subr.bf16.mxu0 %v2343
        %2447 = vmatpush1.bf16.msra.mxu0 %v2342
        %2448 = vmatprep.subr.bf16.mxu0 %v2327
        %2449 = vmatpush1.bf16.msra.mxu0 %v2326
        %2450 = vmatprep.subr.bf16.mxu0 0
        %2451 = vmatpush2.bf16.msra.mxu0 0
        %2452 = vmatprep.subr.bf16.mxu0 0
        %2453 = vmatpush2.bf16.msra.mxu0 0
        %2454 = vmatprep.subr.bf16.mxu0 0
        %2455 = vmatpush2.bf16.msra.mxu0 0
        %2456 = vmatprep.subr.bf16.mxu0 0
        %2457 = vmatpush2.bf16.msra.mxu0 0
        %2458 = vmatprep.subr.bf16.mxu0 0
        %2459 = vmatpush2.bf16.msra.mxu0 0
        %2460 = vmatprep.subr.bf16.mxu0 0
        %2461 = vmatpush2.bf16.msra.mxu0 0
        %2462 = vmatprep.subr.bf16.mxu0 0
        %2463 = vmatpush2.bf16.msra.mxu0 0
        %2464 = vmatprep.subr.bf16.mxu0 0
        %2465 = vmatpush2.bf16.msra.mxu0 0
        %2466 = vmatprep.mubr.bf16.mxu0 0
        %2467 = vmatmul.mubr.bf16.gmra.mxu0 %v2389
        %v2468 = vpop.f32.mrf.mxu0
        %v2469 = vadd.f32 %v2159, %v2468
        %v2470 = vpop.f32.mrf.mxu0
        %v2471 = vadd.f32 %v2163, %v2470
        %v2472 = vpop.f32.mrf.mxu0
        %v2473 = vadd.f32 %v2159, %v2472
        %v2474 = vpop.f32.mrf.mxu0
        %v2475 = vadd.f32 %v2163, %v2474
        %2476 = vdwg.mxu0
        %2477 = vmatprep.subr.bf16.mxu0 0
        %2478 = vmatpush1.bf16.msra.mxu0 0
        %2479 = vmatprep.subr.bf16.mxu0 0
        %2480 = vmatpush1.bf16.msra.mxu0 0
        %2481 = vmatprep.subr.bf16.mxu0 0
        %2482 = vmatpush1.bf16.msra.mxu0 0
        %2483 = vmatprep.subr.bf16.mxu0 0
        %2484 = vmatpush1.bf16.msra.mxu0 0
        %2485 = vmatprep.subr.bf16.mxu0 0
        %2486 = vmatpush1.bf16.msra.mxu0 0
        %2487 = vmatprep.subr.bf16.mxu0 0
        %2488 = vmatpush1.bf16.msra.mxu0 0
        %2489 = vmatprep.subr.bf16.mxu0 %v2345
        %2490 = vmatpush1.bf16.msra.mxu0 %v2344
        %2491 = vmatprep.subr.bf16.mxu0 %v2329
        %2492 = vmatpush1.bf16.msra.mxu0 %v2328
        %2493 = vmatprep.subr.bf16.mxu0 0
        %2494 = vmatpush2.bf16.msra.mxu0 0
        %2495 = vmatprep.subr.bf16.mxu0 0
        %2496 = vmatpush2.bf16.msra.mxu0 0
        %2497 = vmatprep.subr.bf16.mxu0 0
        %2498 = vmatpush2.bf16.msra.mxu0 0
        %2499 = vmatprep.subr.bf16.mxu0 0
        %2500 = vmatpush2.bf16.msra.mxu0 0
        %2501 = vmatprep.subr.bf16.mxu0 0
        %2502 = vmatpush2.bf16.msra.mxu0 0
        %2503 = vmatprep.subr.bf16.mxu0 0
        %2504 = vmatpush2.bf16.msra.mxu0 0
        %2505 = vmatprep.subr.bf16.mxu0 0
        %2506 = vmatpush2.bf16.msra.mxu0 0
        %2507 = vmatprep.subr.bf16.mxu0 0
        %2508 = vmatpush2.bf16.msra.mxu0 0
        %2509 = vmatprep.mubr.bf16.mxu0 0
        %2510 = vmatmul.mubr.bf16.gmra.mxu0 %v2389
        %v2511 = vpop.f32.mrf.mxu0
        %v2512 = vadd.f32 %v2167, %v2511
        %v2513 = vpop.f32.mrf.mxu0
        %v2514 = vadd.f32 %v2171, %v2513
        %v2515 = vpop.f32.mrf.mxu0
        %v2516 = vadd.f32 %v2167, %v2515
        %v2517 = vpop.f32.mrf.mxu0
        %v2518 = vadd.f32 %v2171, %v2517
        %2519 = vdwg.mxu0
        %2520 = vmatprep.subr.bf16.mxu0 0
        %2521 = vmatpush1.bf16.msra.mxu0 0
        %2522 = vmatprep.subr.bf16.mxu0 0
        %2523 = vmatpush1.bf16.msra.mxu0 0
        %2524 = vmatprep.subr.bf16.mxu0 0
        %2525 = vmatpush1.bf16.msra.mxu0 0
        %2526 = vmatprep.subr.bf16.mxu0 0
        %2527 = vmatpush1.bf16.msra.mxu0 0
        %2528 = vmatprep.subr.bf16.mxu0 0
        %2529 = vmatpush1.bf16.msra.mxu0 0
        %2530 = vmatprep.subr.bf16.mxu0 0
        %2531 = vmatpush1.bf16.msra.mxu0 0
        %2532 = vmatprep.subr.bf16.mxu0 %v2347
        %2533 = vmatpush1.bf16.msra.mxu0 %v2346
        %2534 = vmatprep.subr.bf16.mxu0 %v2331
        %2535 = vmatpush1.bf16.msra.mxu0 %v2330
        %2536 = vmatprep.subr.bf16.mxu0 0
        %2537 = vmatpush2.bf16.msra.mxu0 0
        %2538 = vmatprep.subr.bf16.mxu0 0
        %2539 = vmatpush2.bf16.msra.mxu0 0
        %2540 = vmatprep.subr.bf16.mxu0 0
        %2541 = vmatpush2.bf16.msra.mxu0 0
        %2542 = vmatprep.subr.bf16.mxu0 0
        %2543 = vmatpush2.bf16.msra.mxu0 0
        %2544 = vmatprep.subr.bf16.mxu0 0
        %2545 = vmatpush2.bf16.msra.mxu0 0
        %2546 = vmatprep.subr.bf16.mxu0 0
        %2547 = vmatpush2.bf16.msra.mxu0 0
        %2548 = vmatprep.subr.bf16.mxu0 0
        %2549 = vmatpush2.bf16.msra.mxu0 0
        %2550 = vmatprep.subr.bf16.mxu0 0
        %2551 = vmatpush2.bf16.msra.mxu0 0
        %2552 = vmatprep.mubr.bf16.mxu0 0
        %2553 = vmatmul.mubr.bf16.gmra.mxu0 %v2389
        %v2554 = vpop.f32.mrf.mxu0
        %v2555 = vadd.f32 %v2175, %v2554
        %v2556 = vpop.f32.mrf.mxu0
        %v2557 = vadd.f32 %v2179, %v2556
        %v2558 = vpop.f32.mrf.mxu0
        %v2559 = vadd.f32 %v2175, %v2558
        %v2560 = vpop.f32.mrf.mxu0
        %v2561 = vadd.f32 %v2179, %v2560
        %2562 = vdwg.mxu0
        %2563 = vmatprep.subr.bf16.mxu0 0
        %2564 = vmatpush1.bf16.msra.mxu0 0
        %2565 = vmatprep.subr.bf16.mxu0 0
        %2566 = vmatpush1.bf16.msra.mxu0 0
        %2567 = vmatprep.subr.bf16.mxu0 0
        %2568 = vmatpush1.bf16.msra.mxu0 0
        %2569 = vmatprep.subr.bf16.mxu0 0
        %2570 = vmatpush1.bf16.msra.mxu0 0
        %2571 = vmatprep.subr.bf16.mxu0 0
        %2572 = vmatpush1.bf16.msra.mxu0 0
        %2573 = vmatprep.subr.bf16.mxu0 0
        %2574 = vmatpush1.bf16.msra.mxu0 0
        %2575 = vmatprep.subr.bf16.mxu0 %v2349
        %2576 = vmatpush1.bf16.msra.mxu0 %v2348
        %2577 = vmatprep.subr.bf16.mxu0 %v2333
        %2578 = vmatpush1.bf16.msra.mxu0 %v2332
        %2579 = vmatprep.subr.bf16.mxu0 0
        %2580 = vmatpush2.bf16.msra.mxu0 0
        %2581 = vmatprep.subr.bf16.mxu0 0
        %2582 = vmatpush2.bf16.msra.mxu0 0
        %2583 = vmatprep.subr.bf16.mxu0 0
        %2584 = vmatpush2.bf16.msra.mxu0 0
        %2585 = vmatprep.subr.bf16.mxu0 0
        %2586 = vmatpush2.bf16.msra.mxu0 0
        %2587 = vmatprep.subr.bf16.mxu0 0
        %2588 = vmatpush2.bf16.msra.mxu0 0
        %2589 = vmatprep.subr.bf16.mxu0 0
        %2590 = vmatpush2.bf16.msra.mxu0 0
        %2591 = vmatprep.subr.bf16.mxu0 0
        %2592 = vmatpush2.bf16.msra.mxu0 0
        %2593 = vmatprep.subr.bf16.mxu0 0
        %2594 = vmatpush2.bf16.msra.mxu0 0
        %2595 = vmatprep.mubr.bf16.mxu0 0
        %2596 = vmatmul.mubr.bf16.gmra.mxu0 %v2389
        %v2597 = vpop.f32.mrf.mxu0
        %v2598 = vadd.f32 %v2183, %v2597
        %v2599 = vpop.f32.mrf.mxu0
        %v2600 = vadd.f32 %v2187, %v2599
        %v2601 = vpop.f32.mrf.mxu0
        %v2602 = vadd.f32 %v2183, %v2601
        %v2603 = vpop.f32.mrf.mxu0
        %v2604 = vadd.f32 %v2187, %v2603
        %2605 = vdwg.mxu0
        %2606 = vmatprep.subr.bf16.mxu0 0
        %2607 = vmatpush1.bf16.msra.mxu0 0
        %2608 = vmatprep.subr.bf16.mxu0 0
        %2609 = vmatpush1.bf16.msra.mxu0 0
        %2610 = vmatprep.subr.bf16.mxu0 0
        %2611 = vmatpush1.bf16.msra.mxu0 0
        %2612 = vmatprep.subr.bf16.mxu0 0
        %2613 = vmatpush1.bf16.msra.mxu0 0
        %2614 = vmatprep.subr.bf16.mxu0 0
        %2615 = vmatpush1.bf16.msra.mxu0 0
        %2616 = vmatprep.subr.bf16.mxu0 0
        %2617 = vmatpush1.bf16.msra.mxu0 0
        %2618 = vmatprep.subr.bf16.mxu0 %v2351
        %2619 = vmatpush1.bf16.msra.mxu0 %v2350
        %2620 = vmatprep.subr.bf16.mxu0 %v2335
        %2621 = vmatpush1.bf16.msra.mxu0 %v2334
        %2622 = vmatprep.subr.bf16.mxu0 0
        %2623 = vmatpush2.bf16.msra.mxu0 0
        %2624 = vmatprep.subr.bf16.mxu0 0
        %2625 = vmatpush2.bf16.msra.mxu0 0
        %2626 = vmatprep.subr.bf16.mxu0 0
        %2627 = vmatpush2.bf16.msra.mxu0 0
        %2628 = vmatprep.subr.bf16.mxu0 0
        %2629 = vmatpush2.bf16.msra.mxu0 0
        %2630 = vmatprep.subr.bf16.mxu0 0
        %2631 = vmatpush2.bf16.msra.mxu0 0
        %2632 = vmatprep.subr.bf16.mxu0 0
        %2633 = vmatpush2.bf16.msra.mxu0 0
        %2634 = vmatprep.subr.bf16.mxu0 0
        %2635 = vmatpush2.bf16.msra.mxu0 0
        %2636 = vmatprep.subr.bf16.mxu0 0
        %2637 = vmatpush2.bf16.msra.mxu0 0
        %2638 = vmatprep.mubr.bf16.mxu0 0
        %2639 = vmatmul.mubr.bf16.gmra.mxu0 %v2389
        %v2640 = vpop.f32.mrf.mxu0
        %v2641 = vadd.f32 %v2191, %v2640
        %v2642 = vpop.f32.mrf.mxu0
        %v2643 = vadd.f32 %v2195, %v2642
        %v2644 = vpop.f32.mrf.mxu0
        %v2645 = vadd.f32 %v2191, %v2644
        %v2646 = vpop.f32.mrf.mxu0
        %v2647 = vadd.f32 %v2195, %v2646
        %2648 = vdwg.mxu0
        %2649 = vmatprep.subr.bf16.mxu0 0
        %2650 = vmatpush1.bf16.msra.mxu0 0
        %2651 = vmatprep.subr.bf16.mxu0 0
        %2652 = vmatpush1.bf16.msra.mxu0 0
        %2653 = vmatprep.subr.bf16.mxu0 0
        %2654 = vmatpush1.bf16.msra.mxu0 0
        %2655 = vmatprep.subr.bf16.mxu0 0
        %2656 = vmatpush1.bf16.msra.mxu0 0
        %2657 = vmatprep.subr.bf16.mxu0 0
        %2658 = vmatpush1.bf16.msra.mxu0 0
        %2659 = vmatprep.subr.bf16.mxu0 0
        %2660 = vmatpush1.bf16.msra.mxu0 0
        %2661 = vmatprep.subr.bf16.mxu0 %v2353
        %2662 = vmatpush1.bf16.msra.mxu0 %v2352
        %2663 = vmatprep.subr.bf16.mxu0 %v2337
        %2664 = vmatpush1.bf16.msra.mxu0 %v2336
        %2665 = vmatprep.subr.bf16.mxu0 0
        %2666 = vmatpush2.bf16.msra.mxu0 0
        %2667 = vmatprep.subr.bf16.mxu0 0
        %2668 = vmatpush2.bf16.msra.mxu0 0
        %2669 = vmatprep.subr.bf16.mxu0 0
        %2670 = vmatpush2.bf16.msra.mxu0 0
        %2671 = vmatprep.subr.bf16.mxu0 0
        %2672 = vmatpush2.bf16.msra.mxu0 0
        %2673 = vmatprep.subr.bf16.mxu0 0
        %2674 = vmatpush2.bf16.msra.mxu0 0
        %2675 = vmatprep.subr.bf16.mxu0 0
        %2676 = vmatpush2.bf16.msra.mxu0 0
        %2677 = vmatprep.subr.bf16.mxu0 0
        %2678 = vmatpush2.bf16.msra.mxu0 0
        %2679 = vmatprep.subr.bf16.mxu0 0
        %2680 = vmatpush2.bf16.msra.mxu0 0
        %2681 = vmatprep.mubr.bf16.mxu0 0
        %2682 = vmatmul.mubr.bf16.gmra.mxu0 %v2389
        %v2683 = vpop.f32.mrf.mxu0
        %v2684 = vadd.f32 %v2199, %v2683
        %v2685 = vpop.f32.mrf.mxu0
        %v2686 = vadd.f32 %v2203, %v2685
        %v2687 = vpop.f32.mrf.mxu0
        %v2688 = vadd.f32 %v2199, %v2687
        %v2689 = vpop.f32.mrf.mxu0
        %v2690 = vadd.f32 %v2203, %v2689
        %2691 = vdwg.mxu0
        %2692 = vmatprep.subr.bf16.mxu0 0
        %2693 = vmatpush1.bf16.msra.mxu0 0
        %2694 = vmatprep.subr.bf16.mxu0 0
        %2695 = vmatpush1.bf16.msra.mxu0 0
        %2696 = vmatprep.subr.bf16.mxu0 0
        %2697 = vmatpush1.bf16.msra.mxu0 0
        %2698 = vmatprep.subr.bf16.mxu0 0
        %2699 = vmatpush1.bf16.msra.mxu0 0
        %2700 = vmatprep.subr.bf16.mxu0 0
        %2701 = vmatpush1.bf16.msra.mxu0 0
        %2702 = vmatprep.subr.bf16.mxu0 0
        %2703 = vmatpush1.bf16.msra.mxu0 0
        %2704 = vmatprep.subr.bf16.mxu0 %v2355
        %2705 = vmatpush1.bf16.msra.mxu0 %v2354
        %2706 = vmatprep.subr.bf16.mxu0 %v2339
        %2707 = vmatpush1.bf16.msra.mxu0 %v2338
        %2708 = vmatprep.subr.bf16.mxu0 0
        %2709 = vmatpush2.bf16.msra.mxu0 0
        %2710 = vmatprep.subr.bf16.mxu0 0
        %2711 = vmatpush2.bf16.msra.mxu0 0
        %2712 = vmatprep.subr.bf16.mxu0 0
        %2713 = vmatpush2.bf16.msra.mxu0 0
        %2714 = vmatprep.subr.bf16.mxu0 0
        %2715 = vmatpush2.bf16.msra.mxu0 0
        %2716 = vmatprep.subr.bf16.mxu0 0
        %2717 = vmatpush2.bf16.msra.mxu0 0
        %2718 = vmatprep.subr.bf16.mxu0 0
        %2719 = vmatpush2.bf16.msra.mxu0 0
        %2720 = vmatprep.subr.bf16.mxu0 0
        %2721 = vmatpush2.bf16.msra.mxu0 0
        %2722 = vmatprep.subr.bf16.mxu0 0
        %2723 = vmatpush2.bf16.msra.mxu0 0
        %2724 = vmatprep.mubr.bf16.mxu0 0
        %2725 = vmatmul.mubr.bf16.gmra.mxu0 %v2389
        %v2726 = vpop.f32.mrf.mxu0
        %v2727 = vadd.f32 %v2207, %v2726
        %v2728 = vpop.f32.mrf.mxu0
        %v2729 = vadd.f32 %v2211, %v2728
        %v2730 = vpop.f32.mrf.mxu0
        %v2731 = vadd.f32 %v2207, %v2730
        %v2732 = vpop.f32.mrf.mxu0
        %v2733 = vadd.f32 %v2211, %v2732
        %2734 = vdwg.mxu0
        %v2735 = vmax.f32 %v2426, 0.0
        %v2736 = vmax.f32 %v2428, 0.0
        %v2737 = vmax.f32 %v2469, 0.0
        %v2738 = vmax.f32 %v2471, 0.0
        %v2739 = vmax.f32 %v2512, 0.0
        %v2740 = vmax.f32 %v2514, 0.0
        %v2741 = vmax.f32 %v2555, 0.0
        %v2742 = vmax.f32 %v2557, 0.0
        %v2743 = vmax.f32 %v2598, 0.0
        %v2744 = vmax.f32 %v2600, 0.0
        %v2745 = vmax.f32 %v2641, 0.0
        %v2746 = vmax.f32 %v2643, 0.0
        %v2747 = vmax.f32 %v2684, 0.0
        %v2748 = vmax.f32 %v2686, 0.0
        %v2749 = vmax.f32 %v2727, 0.0
        %v2750 = vmax.f32 %v2729, 0.0
        %v2751 = vmax.f32 %v2430, 0.0
        %v2752 = vmax.f32 %v2432, 0.0
        %v2753 = vmax.f32 %v2473, 0.0
        %v2754 = vmax.f32 %v2475, 0.0
        %v2755 = vmax.f32 %v2516, 0.0
        %v2756 = vmax.f32 %v2518, 0.0
        %v2757 = vmax.f32 %v2559, 0.0
        %v2758 = vmax.f32 %v2561, 0.0
        %v2759 = vmax.f32 %v2602, 0.0
        %v2760 = vmax.f32 %v2604, 0.0
        %v2761 = vmax.f32 %v2645, 0.0
        %v2762 = vmax.f32 %v2647, 0.0
        %v2763 = vmax.f32 %v2688, 0.0
        %v2764 = vmax.f32 %v2690, 0.0
        %v2765 = vmax.f32 %v2731, 0.0
        %v2766 = vmax.f32 %v2733, 0.0
        %v2767 = vpack.c.bf16 %v2751, %v2735
        %v2768 = vpack.c.bf16 %v2752, %v2736
        %v2769 = vpack.c.bf16 %v2753, %v2737
        %v2770 = vpack.c.bf16 %v2754, %v2738
        %v2771 = vpack.c.bf16 %v2755, %v2739
        %v2772 = vpack.c.bf16 %v2756, %v2740
        %v2773 = vpack.c.bf16 %v2757, %v2741
        %v2774 = vpack.c.bf16 %v2758, %v2742
        %v2775 = vpack.c.bf16 %v2759, %v2743
        %v2776 = vpack.c.bf16 %v2760, %v2744
        %v2777 = vpack.c.bf16 %v2761, %v2745
        %v2778 = vpack.c.bf16 %v2762, %v2746
        %v2779 = vpack.c.bf16 %v2763, %v2747
        %v2780 = vpack.c.bf16 %v2764, %v2748
        %v2781 = vpack.c.bf16 %v2765, %v2749
        %v2782 = vpack.c.bf16 %v2766, %v2750
        %v2784 = vlaneseq
        %v2785 = vshrl.u32 %v2784, 7
        %v2786 = vsub.s32 0, %v2785
        %v2787 = vrot.slane %v1038, %v2786
        %v3045 = vunpack.c.l.b16 %v782
        %v3046 = vunpack.c.l.b16 %v783
        %v3047 = vunpack.c.l.b16 %v784
        %v3048 = vunpack.c.l.b16 %v785
        %v3049 = vunpack.c.l.b16 %v786
        %v3050 = vunpack.c.l.b16 %v787
        %v3051 = vunpack.c.l.b16 %v788
        %v3052 = vunpack.c.l.b16 %v789
        %v3053 = vunpack.c.l.b16 %v790
        %v3054 = vunpack.c.l.b16 %v791
        %v3055 = vunpack.c.l.b16 %v792
        %v3056 = vunpack.c.l.b16 %v793
        %v3057 = vunpack.c.l.b16 %v794
        %v3058 = vunpack.c.l.b16 %v795
        %v3059 = vunpack.c.l.b16 %v796
        %v3060 = vunpack.c.l.b16 %v797
        %v3061 = vunpack.c.l.b16 %v798
        %v3062 = vunpack.c.l.b16 %v799
        %v3063 = vunpack.c.l.b16 %v800
        %v3064 = vunpack.c.l.b16 %v801
        %v3065 = vunpack.c.l.b16 %v802
        %v3066 = vunpack.c.l.b16 %v803
        %v3067 = vunpack.c.l.b16 %v804
        %v3068 = vunpack.c.l.b16 %v805
        %v3069 = vunpack.c.l.b16 %v806
        %v3070 = vunpack.c.l.b16 %v807
        %v3071 = vunpack.c.l.b16 %v808
        %v3072 = vunpack.c.l.b16 %v809
        %v3073 = vunpack.c.l.b16 %v810
        %v3074 = vunpack.c.l.b16 %v811
        %v3075 = vunpack.c.l.b16 %v812
        %v3076 = vunpack.c.l.b16 %v813
        %v3077 = vunpack.c.l.b16 %v814
        %v3078 = vunpack.c.l.b16 %v815
        %v3079 = vunpack.c.l.b16 %v816
        %v3080 = vunpack.c.l.b16 %v817
        %v3081 = vunpack.c.l.b16 %v818
        %v3082 = vunpack.c.l.b16 %v819
        %v3083 = vunpack.c.l.b16 %v820
        %v3084 = vunpack.c.l.b16 %v821
        %v3085 = vunpack.c.l.b16 %v822
        %v3086 = vunpack.c.l.b16 %v823
        %v3087 = vunpack.c.l.b16 %v824
        %v3088 = vunpack.c.l.b16 %v825
        %v3089 = vunpack.c.l.b16 %v826
        %v3090 = vunpack.c.l.b16 %v827
        %v3091 = vunpack.c.l.b16 %v828
        %v3092 = vunpack.c.l.b16 %v829
        %v3093 = vunpack.c.l.b16 %v830
        %v3094 = vunpack.c.l.b16 %v831
        %v3095 = vunpack.c.l.b16 %v832
        %v3096 = vunpack.c.l.b16 %v833
        %v3097 = vunpack.c.l.b16 %v834
        %v3098 = vunpack.c.l.b16 %v835
        %v3099 = vunpack.c.l.b16 %v836
        %v3100 = vunpack.c.l.b16 %v837
        %v3101 = vunpack.c.l.b16 %v838
        %v3102 = vunpack.c.l.b16 %v839
        %v3103 = vunpack.c.l.b16 %v840
        %v3104 = vunpack.c.l.b16 %v841
        %v3105 = vunpack.c.l.b16 %v842
        %v3106 = vunpack.c.l.b16 %v843
        %v3107 = vunpack.c.l.b16 %v844
        %v3108 = vunpack.c.l.b16 %v845
        %v3109 = vunpack.c.l.b16 %v846
        %v3110 = vunpack.c.l.b16 %v847
        %v3111 = vunpack.c.l.b16 %v848
        %v3112 = vunpack.c.l.b16 %v849
        %v3113 = vunpack.c.l.b16 %v850
        %v3114 = vunpack.c.l.b16 %v851
        %v3115 = vunpack.c.l.b16 %v852
        %v3116 = vunpack.c.l.b16 %v853
        %v3117 = vunpack.c.l.b16 %v854
        %v3118 = vunpack.c.l.b16 %v855
        %v3119 = vunpack.c.l.b16 %v856
        %v3120 = vunpack.c.l.b16 %v857
        %v3121 = vunpack.c.l.b16 %v858
        %v3122 = vunpack.c.l.b16 %v859
        %v3123 = vunpack.c.l.b16 %v860
        %v3124 = vunpack.c.l.b16 %v861
        %v3125 = vunpack.c.l.b16 %v862
        %v3126 = vunpack.c.l.b16 %v863
        %v3127 = vunpack.c.l.b16 %v864
        %v3128 = vunpack.c.l.b16 %v865
        %v3129 = vunpack.c.l.b16 %v866
        %v3130 = vunpack.c.l.b16 %v867
        %v3131 = vunpack.c.l.b16 %v868
        %v3132 = vunpack.c.l.b16 %v869
        %v3133 = vunpack.c.l.b16 %v870
        %v3134 = vunpack.c.l.b16 %v871
        %v3135 = vunpack.c.l.b16 %v872
        %v3136 = vunpack.c.l.b16 %v873
        %v3137 = vunpack.c.l.b16 %v874
        %v3138 = vunpack.c.l.b16 %v875
        %v3139 = vunpack.c.l.b16 %v876
        %v3140 = vunpack.c.l.b16 %v877
        %v3141 = vunpack.c.l.b16 %v878
        %v3142 = vunpack.c.l.b16 %v879
        %v3143 = vunpack.c.l.b16 %v880
        %v3144 = vunpack.c.l.b16 %v881
        %v3145 = vunpack.c.l.b16 %v882
        %v3146 = vunpack.c.l.b16 %v883
        %v3147 = vunpack.c.l.b16 %v884
        %v3148 = vunpack.c.l.b16 %v885
        %v3149 = vunpack.c.l.b16 %v886
        %v3150 = vunpack.c.l.b16 %v887
        %v3151 = vunpack.c.l.b16 %v888
        %v3152 = vunpack.c.l.b16 %v889
        %v3153 = vunpack.c.l.b16 %v890
        %v3154 = vunpack.c.l.b16 %v891
        %v3155 = vunpack.c.l.b16 %v892
        %v3156 = vunpack.c.l.b16 %v893
        %v3157 = vunpack.c.l.b16 %v894
        %v3158 = vunpack.c.l.b16 %v895
        %v3159 = vunpack.c.l.b16 %v896
        %v3160 = vunpack.c.l.b16 %v897
        %v3161 = vunpack.c.l.b16 %v898
        %v3162 = vunpack.c.l.b16 %v899
        %v3163 = vunpack.c.l.b16 %v900
        %v3164 = vunpack.c.l.b16 %v901
        %v3165 = vunpack.c.l.b16 %v902
        %v3166 = vunpack.c.l.b16 %v903
        %v3167 = vunpack.c.l.b16 %v904
        %v3168 = vunpack.c.l.b16 %v905
        %v3169 = vunpack.c.l.b16 %v906
        %v3170 = vunpack.c.l.b16 %v907
        %v3171 = vunpack.c.l.b16 %v908
        %v3172 = vunpack.c.l.b16 %v909
        %v3173 = vunpack.c.l.b16 %v910
        %v3174 = vunpack.c.l.b16 %v911
        %v3175 = vunpack.c.l.b16 %v912
        %v3176 = vunpack.c.l.b16 %v913
        %v3177 = vunpack.c.l.b16 %v914
        %v3178 = vunpack.c.l.b16 %v915
        %v3179 = vunpack.c.l.b16 %v916
        %v3180 = vunpack.c.l.b16 %v917
        %v3181 = vunpack.c.l.b16 %v918
        %v3182 = vunpack.c.l.b16 %v919
        %v3183 = vunpack.c.l.b16 %v920
        %v3184 = vunpack.c.l.b16 %v921
        %v3185 = vunpack.c.l.b16 %v922
        %v3186 = vunpack.c.l.b16 %v923
        %v3187 = vunpack.c.l.b16 %v924
        %v3188 = vunpack.c.l.b16 %v925
        %v3189 = vunpack.c.l.b16 %v926
        %v3190 = vunpack.c.l.b16 %v927
        %v3191 = vunpack.c.l.b16 %v928
        %v3192 = vunpack.c.l.b16 %v929
        %v3193 = vunpack.c.l.b16 %v930
        %v3194 = vunpack.c.l.b16 %v931
        %v3195 = vunpack.c.l.b16 %v932
        %v3196 = vunpack.c.l.b16 %v933
        %v3197 = vunpack.c.l.b16 %v934
        %v3198 = vunpack.c.l.b16 %v935
        %v3199 = vunpack.c.l.b16 %v936
        %v3200 = vunpack.c.l.b16 %v937
        %v3201 = vunpack.c.l.b16 %v938
        %v3202 = vunpack.c.l.b16 %v939
        %v3203 = vunpack.c.l.b16 %v940
        %v3204 = vunpack.c.l.b16 %v941
        %v3205 = vunpack.c.l.b16 %v942
        %v3206 = vunpack.c.l.b16 %v943
        %v3207 = vunpack.c.l.b16 %v944
        %v3208 = vunpack.c.l.b16 %v945
        %v3209 = vunpack.c.l.b16 %v946
        %v3210 = vunpack.c.l.b16 %v947
        %v3211 = vunpack.c.l.b16 %v948
        %v3212 = vunpack.c.l.b16 %v949
        %v3213 = vunpack.c.l.b16 %v950
        %v3214 = vunpack.c.l.b16 %v951
        %v3215 = vunpack.c.l.b16 %v952
        %v3216 = vunpack.c.l.b16 %v953
        %v3217 = vunpack.c.l.b16 %v954
        %v3218 = vunpack.c.l.b16 %v955
        %v3219 = vunpack.c.l.b16 %v956
        %v3220 = vunpack.c.l.b16 %v957
        %v3221 = vunpack.c.l.b16 %v958
        %v3222 = vunpack.c.l.b16 %v959
        %v3223 = vunpack.c.l.b16 %v960
        %v3224 = vunpack.c.l.b16 %v961
        %v3225 = vunpack.c.l.b16 %v962
        %v3226 = vunpack.c.l.b16 %v963
        %v3227 = vunpack.c.l.b16 %v964
        %v3228 = vunpack.c.l.b16 %v965
        %v3229 = vunpack.c.l.b16 %v966
        %v3230 = vunpack.c.l.b16 %v967
        %v3231 = vunpack.c.l.b16 %v968
        %v3232 = vunpack.c.l.b16 %v969
        %v3233 = vunpack.c.l.b16 %v970
        %v3234 = vunpack.c.l.b16 %v971
        %v3235 = vunpack.c.l.b16 %v972
        %v3236 = vunpack.c.l.b16 %v973
        %v3237 = vunpack.c.l.b16 %v974
        %v3238 = vunpack.c.l.b16 %v975
        %v3239 = vunpack.c.l.b16 %v976
        %v3240 = vunpack.c.l.b16 %v977
        %v3241 = vunpack.c.l.b16 %v978
        %v3242 = vunpack.c.l.b16 %v979
        %v3243 = vunpack.c.l.b16 %v980
        %v3244 = vunpack.c.l.b16 %v981
        %v3245 = vunpack.c.l.b16 %v982
        %v3246 = vunpack.c.l.b16 %v983
        %v3247 = vunpack.c.l.b16 %v984
        %v3248 = vunpack.c.l.b16 %v985
        %v3249 = vunpack.c.l.b16 %v986
        %v3250 = vunpack.c.l.b16 %v987
        %v3251 = vunpack.c.l.b16 %v988
        %v3252 = vunpack.c.l.b16 %v989
        %v3253 = vunpack.c.l.b16 %v990
        %v3254 = vunpack.c.l.b16 %v991
        %v3255 = vunpack.c.l.b16 %v992
        %v3256 = vunpack.c.l.b16 %v993
        %v3257 = vunpack.c.l.b16 %v994
        %v3258 = vunpack.c.l.b16 %v995
        %v3259 = vunpack.c.l.b16 %v996
        %v3260 = vunpack.c.l.b16 %v997
        %v3261 = vunpack.c.l.b16 %v998
        %v3262 = vunpack.c.l.b16 %v999
        %v3263 = vunpack.c.l.b16 %v1000
        %v3264 = vunpack.c.l.b16 %v1001
        %v3265 = vunpack.c.l.b16 %v1002
        %v3266 = vunpack.c.l.b16 %v1003
        %v3267 = vunpack.c.l.b16 %v1004
        %v3268 = vunpack.c.l.b16 %v1005
        %v3269 = vunpack.c.l.b16 %v1006
        %v3270 = vunpack.c.l.b16 %v1007
        %v3271 = vunpack.c.l.b16 %v1008
        %v3272 = vunpack.c.l.b16 %v1009
        %v3273 = vunpack.c.l.b16 %v1010
        %v3274 = vunpack.c.l.b16 %v1011
        %v3275 = vunpack.c.l.b16 %v1012
        %v3276 = vunpack.c.l.b16 %v1013
        %v3277 = vunpack.c.l.b16 %v1014
        %v3278 = vunpack.c.l.b16 %v1015
        %v3279 = vunpack.c.l.b16 %v1016
        %v3280 = vunpack.c.l.b16 %v1017
        %v3281 = vunpack.c.l.b16 %v1018
        %v3282 = vunpack.c.l.b16 %v1019
        %v3283 = vunpack.c.l.b16 %v1020
        %v3284 = vunpack.c.l.b16 %v1021
        %v3285 = vunpack.c.l.b16 %v1022
        %v3286 = vunpack.c.l.b16 %v1023
        %v3287 = vunpack.c.l.b16 %v1024
        %v3288 = vunpack.c.l.b16 %v1025
        %v3289 = vunpack.c.l.b16 %v1026
        %v3290 = vunpack.c.l.b16 %v1027
        %v3291 = vunpack.c.l.b16 %v1028
        %v3292 = vunpack.c.l.b16 %v1029
        %v3293 = vunpack.c.l.b16 %v1030
        %v3294 = vunpack.c.l.b16 %v1031
        %v3295 = vunpack.c.l.b16 %v1032
        %v3296 = vunpack.c.l.b16 %v1033
        %v3297 = vunpack.c.l.b16 %v1034
        %v3298 = vunpack.c.l.b16 %v1035
        %v3299 = vunpack.c.l.b16 %v1036
        %v3300 = vunpack.c.l.b16 %v1037
        %v3301 = vpack.c.b16 %v3046, %v3045
        %v3302 = vpack.c.b16 %v3048, %v3047
        %v3303 = vpack.c.b16 %v3050, %v3049
        %v3304 = vpack.c.b16 %v3052, %v3051
        %v3305 = vpack.c.b16 %v3054, %v3053
        %v3306 = vpack.c.b16 %v3056, %v3055
        %v3307 = vpack.c.b16 %v3058, %v3057
        %v3308 = vpack.c.b16 %v3060, %v3059
        %v3309 = vpack.c.b16 %v3062, %v3061
        %v3310 = vpack.c.b16 %v3064, %v3063
        %v3311 = vpack.c.b16 %v3066, %v3065
        %v3312 = vpack.c.b16 %v3068, %v3067
        %v3313 = vpack.c.b16 %v3070, %v3069
        %v3314 = vpack.c.b16 %v3072, %v3071
        %v3315 = vpack.c.b16 %v3074, %v3073
        %v3316 = vpack.c.b16 %v3076, %v3075
        %v3317 = vpack.c.b16 %v3078, %v3077
        %v3318 = vpack.c.b16 %v3080, %v3079
        %v3319 = vpack.c.b16 %v3082, %v3081
        %v3320 = vpack.c.b16 %v3084, %v3083
        %v3321 = vpack.c.b16 %v3086, %v3085
        %v3322 = vpack.c.b16 %v3088, %v3087
        %v3323 = vpack.c.b16 %v3090, %v3089
        %v3324 = vpack.c.b16 %v3092, %v3091
        %v3325 = vpack.c.b16 %v3094, %v3093
        %v3326 = vpack.c.b16 %v3096, %v3095
        %v3327 = vpack.c.b16 %v3098, %v3097
        %v3328 = vpack.c.b16 %v3100, %v3099
        %v3329 = vpack.c.b16 %v3102, %v3101
        %v3330 = vpack.c.b16 %v3104, %v3103
        %v3331 = vpack.c.b16 %v3106, %v3105
        %v3332 = vpack.c.b16 %v3108, %v3107
        %v3333 = vpack.c.b16 %v3110, %v3109
        %v3334 = vpack.c.b16 %v3112, %v3111
        %v3335 = vpack.c.b16 %v3114, %v3113
        %v3336 = vpack.c.b16 %v3116, %v3115
        %v3337 = vpack.c.b16 %v3118, %v3117
        %v3338 = vpack.c.b16 %v3120, %v3119
        %v3339 = vpack.c.b16 %v3122, %v3121
        %v3340 = vpack.c.b16 %v3124, %v3123
        %v3341 = vpack.c.b16 %v3126, %v3125
        %v3342 = vpack.c.b16 %v3128, %v3127
        %v3343 = vpack.c.b16 %v3130, %v3129
        %v3344 = vpack.c.b16 %v3132, %v3131
        %v3345 = vpack.c.b16 %v3134, %v3133
        %v3346 = vpack.c.b16 %v3136, %v3135
        %v3347 = vpack.c.b16 %v3138, %v3137
        %v3348 = vpack.c.b16 %v3140, %v3139
        %v3349 = vpack.c.b16 %v3142, %v3141
        %v3350 = vpack.c.b16 %v3144, %v3143
        %v3351 = vpack.c.b16 %v3146, %v3145
        %v3352 = vpack.c.b16 %v3148, %v3147
        %v3353 = vpack.c.b16 %v3150, %v3149
        %v3354 = vpack.c.b16 %v3152, %v3151
        %v3355 = vpack.c.b16 %v3154, %v3153
        %v3356 = vpack.c.b16 %v3156, %v3155
        %v3357 = vpack.c.b16 %v3158, %v3157
        %v3358 = vpack.c.b16 %v3160, %v3159
        %v3359 = vpack.c.b16 %v3162, %v3161
        %v3360 = vpack.c.b16 %v3164, %v3163
        %v3361 = vpack.c.b16 %v3166, %v3165
        %v3362 = vpack.c.b16 %v3168, %v3167
        %v3363 = vpack.c.b16 %v3170, %v3169
        %v3364 = vpack.c.b16 %v3172, %v3171
        %v3365 = vpack.c.b16 %v3174, %v3173
        %v3366 = vpack.c.b16 %v3176, %v3175
        %v3367 = vpack.c.b16 %v3178, %v3177
        %v3368 = vpack.c.b16 %v3180, %v3179
        %v3369 = vpack.c.b16 %v3182, %v3181
        %v3370 = vpack.c.b16 %v3184, %v3183
        %v3371 = vpack.c.b16 %v3186, %v3185
        %v3372 = vpack.c.b16 %v3188, %v3187
        %v3373 = vpack.c.b16 %v3190, %v3189
        %v3374 = vpack.c.b16 %v3192, %v3191
        %v3375 = vpack.c.b16 %v3194, %v3193
        %v3376 = vpack.c.b16 %v3196, %v3195
        %v3377 = vpack.c.b16 %v3198, %v3197
        %v3378 = vpack.c.b16 %v3200, %v3199
        %v3379 = vpack.c.b16 %v3202, %v3201
        %v3380 = vpack.c.b16 %v3204, %v3203
        %v3381 = vpack.c.b16 %v3206, %v3205
        %v3382 = vpack.c.b16 %v3208, %v3207
        %v3383 = vpack.c.b16 %v3210, %v3209
        %v3384 = vpack.c.b16 %v3212, %v3211
        %v3385 = vpack.c.b16 %v3214, %v3213
        %v3386 = vpack.c.b16 %v3216, %v3215
        %v3387 = vpack.c.b16 %v3218, %v3217
        %v3388 = vpack.c.b16 %v3220, %v3219
        %v3389 = vpack.c.b16 %v3222, %v3221
        %v3390 = vpack.c.b16 %v3224, %v3223
        %v3391 = vpack.c.b16 %v3226, %v3225
        %v3392 = vpack.c.b16 %v3228, %v3227
        %v3393 = vpack.c.b16 %v3230, %v3229
        %v3394 = vpack.c.b16 %v3232, %v3231
        %v3395 = vpack.c.b16 %v3234, %v3233
        %v3396 = vpack.c.b16 %v3236, %v3235
        %v3397 = vpack.c.b16 %v3238, %v3237
        %v3398 = vpack.c.b16 %v3240, %v3239
        %v3399 = vpack.c.b16 %v3242, %v3241
        %v3400 = vpack.c.b16 %v3244, %v3243
        %v3401 = vpack.c.b16 %v3246, %v3245
        %v3402 = vpack.c.b16 %v3248, %v3247
        %v3403 = vpack.c.b16 %v3250, %v3249
        %v3404 = vpack.c.b16 %v3252, %v3251
        %v3405 = vpack.c.b16 %v3254, %v3253
        %v3406 = vpack.c.b16 %v3256, %v3255
        %v3407 = vpack.c.b16 %v3258, %v3257
        %v3408 = vpack.c.b16 %v3260, %v3259
        %v3409 = vpack.c.b16 %v3262, %v3261
        %v3410 = vpack.c.b16 %v3264, %v3263
        %v3411 = vpack.c.b16 %v3266, %v3265
        %v3412 = vpack.c.b16 %v3268, %v3267
        %v3413 = vpack.c.b16 %v3270, %v3269
        %v3414 = vpack.c.b16 %v3272, %v3271
        %v3415 = vpack.c.b16 %v3274, %v3273
        %v3416 = vpack.c.b16 %v3276, %v3275
        %v3417 = vpack.c.b16 %v3278, %v3277
        %v3418 = vpack.c.b16 %v3280, %v3279
        %v3419 = vpack.c.b16 %v3282, %v3281
        %v3420 = vpack.c.b16 %v3284, %v3283
        %v3421 = vpack.c.b16 %v3286, %v3285
        %v3422 = vpack.c.b16 %v3288, %v3287
        %v3423 = vpack.c.b16 %v3290, %v3289
        %v3424 = vpack.c.b16 %v3292, %v3291
        %v3425 = vpack.c.b16 %v3294, %v3293
        %v3426 = vpack.c.b16 %v3296, %v3295
        %v3427 = vpack.c.b16 %v3298, %v3297
        %v3428 = vpack.c.b16 %v3300, %v3299
        %3557 = vmatprep.subr.bf16.mxu0 0
        %3558 = vmatpush1.bf16.msra.mxu0 %v3308
        %3559 = vmatprep.subr.bf16.mxu0 0
        %3560 = vmatpush1.bf16.msra.mxu0 %v3307
        %3561 = vmatprep.subr.bf16.mxu0 0
        %3562 = vmatpush1.bf16.msra.mxu0 %v3306
        %3563 = vmatprep.subr.bf16.mxu0 0
        %3564 = vmatpush1.bf16.msra.mxu0 %v3305
        %3565 = vmatprep.subr.bf16.mxu0 0
        %3566 = vmatpush1.bf16.msra.mxu0 %v3304
        %3567 = vmatprep.subr.bf16.mxu0 0
        %3568 = vmatpush1.bf16.msra.mxu0 %v3303
        %3569 = vmatprep.subr.bf16.mxu0 0
        %3570 = vmatpush1.bf16.msra.mxu0 %v3302
        %3571 = vmatprep.subr.bf16.mxu0 0
        %3572 = vmatpush1.bf16.msra.mxu0 %v3301
        %3573 = vmatprep.subr.bf16.mxu0 0
        %3574 = vmatpush2.bf16.msra.mxu0 %v3316
        %3575 = vmatprep.subr.bf16.mxu0 0
        %3576 = vmatpush2.bf16.msra.mxu0 %v3315
        %3577 = vmatprep.subr.bf16.mxu0 0
        %3578 = vmatpush2.bf16.msra.mxu0 %v3314
        %3579 = vmatprep.subr.bf16.mxu0 0
        %3580 = vmatpush2.bf16.msra.mxu0 %v3313
        %3581 = vmatprep.subr.bf16.mxu0 0
        %3582 = vmatpush2.bf16.msra.mxu0 %v3312
        %3583 = vmatprep.subr.bf16.mxu0 0
        %3584 = vmatpush2.bf16.msra.mxu0 %v3311
        %3585 = vmatprep.subr.bf16.mxu0 0
        %3586 = vmatpush2.bf16.msra.mxu0 %v3310
        %3587 = vmatprep.subr.bf16.mxu0 0
        %3588 = vmatpush2.bf16.msra.mxu0 %v3309
        %3589 = vmatprep.mubr.bf16.mxu0 %v2768
        %3590 = vmatmul.mubr.bf16.gmra.mxu0 %v2767
        %v3591 = vpop.f32.mrf.mxu0
        %v3592 = vadd.f32 %v2787, %v3591
        %v3593 = vpop.f32.mrf.mxu0
        %v3594 = vpop.f32.mrf.mxu0
        %v3595 = vadd.f32 %v2787, %v3594
        %v3596 = vpop.f32.mrf.mxu0
        %3597 = vdwg.mxu0
        %3598 = vmatprep.subr.bf16.mxu0 0
        %3599 = vmatpush1.bf16.msra.mxu0 %v3324
        %3600 = vmatprep.subr.bf16.mxu0 0
        %3601 = vmatpush1.bf16.msra.mxu0 %v3323
        %3602 = vmatprep.subr.bf16.mxu0 0
        %3603 = vmatpush1.bf16.msra.mxu0 %v3322
        %3604 = vmatprep.subr.bf16.mxu0 0
        %3605 = vmatpush1.bf16.msra.mxu0 %v3321
        %3606 = vmatprep.subr.bf16.mxu0 0
        %3607 = vmatpush1.bf16.msra.mxu0 %v3320
        %3608 = vmatprep.subr.bf16.mxu0 0
        %3609 = vmatpush1.bf16.msra.mxu0 %v3319
        %3610 = vmatprep.subr.bf16.mxu0 0
        %3611 = vmatpush1.bf16.msra.mxu0 %v3318
        %3612 = vmatprep.subr.bf16.mxu0 0
        %3613 = vmatpush1.bf16.msra.mxu0 %v3317
        %3614 = vmatprep.subr.bf16.mxu0 0
        %3615 = vmatpush2.bf16.msra.mxu0 %v3332
        %3616 = vmatprep.subr.bf16.mxu0 0
        %3617 = vmatpush2.bf16.msra.mxu0 %v3331
        %3618 = vmatprep.subr.bf16.mxu0 0
        %3619 = vmatpush2.bf16.msra.mxu0 %v3330
        %3620 = vmatprep.subr.bf16.mxu0 0
        %3621 = vmatpush2.bf16.msra.mxu0 %v3329
        %3622 = vmatprep.subr.bf16.mxu0 0
        %3623 = vmatpush2.bf16.msra.mxu0 %v3328
        %3624 = vmatprep.subr.bf16.mxu0 0
        %3625 = vmatpush2.bf16.msra.mxu0 %v3327
        %3626 = vmatprep.subr.bf16.mxu0 0
        %3627 = vmatpush2.bf16.msra.mxu0 %v3326
        %3628 = vmatprep.subr.bf16.mxu0 0
        %3629 = vmatpush2.bf16.msra.mxu0 %v3325
        %3630 = vmatprep.mubr.bf16.mxu0 %v2770
        %3631 = vmatmul.mubr.bf16.gmra.mxu0 %v2769
        %v3632 = vpop.f32.mrf.mxu0
        %v3633 = vadd.f32 %v3592, %v3632
        %v3634 = vpop.f32.mrf.mxu0
        %v3635 = vpop.f32.mrf.mxu0
        %v3636 = vadd.f32 %v3595, %v3635
        %v3637 = vpop.f32.mrf.mxu0
        %3638 = vdwg.mxu0
        %3639 = vmatprep.subr.bf16.mxu0 0
        %3640 = vmatpush1.bf16.msra.mxu0 %v3340
        %3641 = vmatprep.subr.bf16.mxu0 0
        %3642 = vmatpush1.bf16.msra.mxu0 %v3339
        %3643 = vmatprep.subr.bf16.mxu0 0
        %3644 = vmatpush1.bf16.msra.mxu0 %v3338
        %3645 = vmatprep.subr.bf16.mxu0 0
        %3646 = vmatpush1.bf16.msra.mxu0 %v3337
        %3647 = vmatprep.subr.bf16.mxu0 0
        %3648 = vmatpush1.bf16.msra.mxu0 %v3336
        %3649 = vmatprep.subr.bf16.mxu0 0
        %3650 = vmatpush1.bf16.msra.mxu0 %v3335
        %3651 = vmatprep.subr.bf16.mxu0 0
        %3652 = vmatpush1.bf16.msra.mxu0 %v3334
        %3653 = vmatprep.subr.bf16.mxu0 0
        %3654 = vmatpush1.bf16.msra.mxu0 %v3333
        %3655 = vmatprep.subr.bf16.mxu0 0
        %3656 = vmatpush2.bf16.msra.mxu0 %v3348
        %3657 = vmatprep.subr.bf16.mxu0 0
        %3658 = vmatpush2.bf16.msra.mxu0 %v3347
        %3659 = vmatprep.subr.bf16.mxu0 0
        %3660 = vmatpush2.bf16.msra.mxu0 %v3346
        %3661 = vmatprep.subr.bf16.mxu0 0
        %3662 = vmatpush2.bf16.msra.mxu0 %v3345
        %3663 = vmatprep.subr.bf16.mxu0 0
        %3664 = vmatpush2.bf16.msra.mxu0 %v3344
        %3665 = vmatprep.subr.bf16.mxu0 0
        %3666 = vmatpush2.bf16.msra.mxu0 %v3343
        %3667 = vmatprep.subr.bf16.mxu0 0
        %3668 = vmatpush2.bf16.msra.mxu0 %v3342
        %3669 = vmatprep.subr.bf16.mxu0 0
        %3670 = vmatpush2.bf16.msra.mxu0 %v3341
        %3671 = vmatprep.mubr.bf16.mxu0 %v2772
        %3672 = vmatmul.mubr.bf16.gmra.mxu0 %v2771
        %v3673 = vpop.f32.mrf.mxu0
        %v3674 = vadd.f32 %v3633, %v3673
        %v3675 = vpop.f32.mrf.mxu0
        %v3676 = vpop.f32.mrf.mxu0
        %v3677 = vadd.f32 %v3636, %v3676
        %v3678 = vpop.f32.mrf.mxu0
        %3679 = vdwg.mxu0
        %3680 = vmatprep.subr.bf16.mxu0 0
        %3681 = vmatpush1.bf16.msra.mxu0 %v3356
        %3682 = vmatprep.subr.bf16.mxu0 0
        %3683 = vmatpush1.bf16.msra.mxu0 %v3355
        %3684 = vmatprep.subr.bf16.mxu0 0
        %3685 = vmatpush1.bf16.msra.mxu0 %v3354
        %3686 = vmatprep.subr.bf16.mxu0 0
        %3687 = vmatpush1.bf16.msra.mxu0 %v3353
        %3688 = vmatprep.subr.bf16.mxu0 0
        %3689 = vmatpush1.bf16.msra.mxu0 %v3352
        %3690 = vmatprep.subr.bf16.mxu0 0
        %3691 = vmatpush1.bf16.msra.mxu0 %v3351
        %3692 = vmatprep.subr.bf16.mxu0 0
        %3693 = vmatpush1.bf16.msra.mxu0 %v3350
        %3694 = vmatprep.subr.bf16.mxu0 0
        %3695 = vmatpush1.bf16.msra.mxu0 %v3349
        %3696 = vmatprep.subr.bf16.mxu0 0
        %3697 = vmatpush2.bf16.msra.mxu0 %v3364
        %3698 = vmatprep.subr.bf16.mxu0 0
        %3699 = vmatpush2.bf16.msra.mxu0 %v3363
        %3700 = vmatprep.subr.bf16.mxu0 0
        %3701 = vmatpush2.bf16.msra.mxu0 %v3362
        %3702 = vmatprep.subr.bf16.mxu0 0
        %3703 = vmatpush2.bf16.msra.mxu0 %v3361
        %3704 = vmatprep.subr.bf16.mxu0 0
        %3705 = vmatpush2.bf16.msra.mxu0 %v3360
        %3706 = vmatprep.subr.bf16.mxu0 0
        %3707 = vmatpush2.bf16.msra.mxu0 %v3359
        %3708 = vmatprep.subr.bf16.mxu0 0
        %3709 = vmatpush2.bf16.msra.mxu0 %v3358
        %3710 = vmatprep.subr.bf16.mxu0 0
        %3711 = vmatpush2.bf16.msra.mxu0 %v3357
        %3712 = vmatprep.mubr.bf16.mxu0 %v2774
        %3713 = vmatmul.mubr.bf16.gmra.mxu0 %v2773
        %v3714 = vpop.f32.mrf.mxu0
        %v3715 = vadd.f32 %v3674, %v3714
        %v3716 = vpop.f32.mrf.mxu0
        %v3717 = vpop.f32.mrf.mxu0
        %v3718 = vadd.f32 %v3677, %v3717
        %v3719 = vpop.f32.mrf.mxu0
        %3720 = vdwg.mxu0
        %3721 = vmatprep.subr.bf16.mxu0 0
        %3722 = vmatpush1.bf16.msra.mxu0 %v3372
        %3723 = vmatprep.subr.bf16.mxu0 0
        %3724 = vmatpush1.bf16.msra.mxu0 %v3371
        %3725 = vmatprep.subr.bf16.mxu0 0
        %3726 = vmatpush1.bf16.msra.mxu0 %v3370
        %3727 = vmatprep.subr.bf16.mxu0 0
        %3728 = vmatpush1.bf16.msra.mxu0 %v3369
        %3729 = vmatprep.subr.bf16.mxu0 0
        %3730 = vmatpush1.bf16.msra.mxu0 %v3368
        %3731 = vmatprep.subr.bf16.mxu0 0
        %3732 = vmatpush1.bf16.msra.mxu0 %v3367
        %3733 = vmatprep.subr.bf16.mxu0 0
        %3734 = vmatpush1.bf16.msra.mxu0 %v3366
        %3735 = vmatprep.subr.bf16.mxu0 0
        %3736 = vmatpush1.bf16.msra.mxu0 %v3365
        %3737 = vmatprep.subr.bf16.mxu0 0
        %3738 = vmatpush2.bf16.msra.mxu0 %v3380
        %3739 = vmatprep.subr.bf16.mxu0 0
        %3740 = vmatpush2.bf16.msra.mxu0 %v3379
        %3741 = vmatprep.subr.bf16.mxu0 0
        %3742 = vmatpush2.bf16.msra.mxu0 %v3378
        %3743 = vmatprep.subr.bf16.mxu0 0
        %3744 = vmatpush2.bf16.msra.mxu0 %v3377
        %3745 = vmatprep.subr.bf16.mxu0 0
        %3746 = vmatpush2.bf16.msra.mxu0 %v3376
        %3747 = vmatprep.subr.bf16.mxu0 0
        %3748 = vmatpush2.bf16.msra.mxu0 %v3375
        %3749 = vmatprep.subr.bf16.mxu0 0
        %3750 = vmatpush2.bf16.msra.mxu0 %v3374
        %3751 = vmatprep.subr.bf16.mxu0 0
        %3752 = vmatpush2.bf16.msra.mxu0 %v3373
        %3753 = vmatprep.mubr.bf16.mxu0 %v2776
        %3754 = vmatmul.mubr.bf16.gmra.mxu0 %v2775
        %v3755 = vpop.f32.mrf.mxu0
        %v3756 = vadd.f32 %v3715, %v3755
        %v3757 = vpop.f32.mrf.mxu0
        %v3758 = vpop.f32.mrf.mxu0
        %v3759 = vadd.f32 %v3718, %v3758
        %v3760 = vpop.f32.mrf.mxu0
        %3761 = vdwg.mxu0
        %3762 = vmatprep.subr.bf16.mxu0 0
        %3763 = vmatpush1.bf16.msra.mxu0 %v3388
        %3764 = vmatprep.subr.bf16.mxu0 0
        %3765 = vmatpush1.bf16.msra.mxu0 %v3387
        %3766 = vmatprep.subr.bf16.mxu0 0
        %3767 = vmatpush1.bf16.msra.mxu0 %v3386
        %3768 = vmatprep.subr.bf16.mxu0 0
        %3769 = vmatpush1.bf16.msra.mxu0 %v3385
        %3770 = vmatprep.subr.bf16.mxu0 0
        %3771 = vmatpush1.bf16.msra.mxu0 %v3384
        %3772 = vmatprep.subr.bf16.mxu0 0
        %3773 = vmatpush1.bf16.msra.mxu0 %v3383
        %3774 = vmatprep.subr.bf16.mxu0 0
        %3775 = vmatpush1.bf16.msra.mxu0 %v3382
        %3776 = vmatprep.subr.bf16.mxu0 0
        %3777 = vmatpush1.bf16.msra.mxu0 %v3381
        %3778 = vmatprep.subr.bf16.mxu0 0
        %3779 = vmatpush2.bf16.msra.mxu0 %v3396
        %3780 = vmatprep.subr.bf16.mxu0 0
        %3781 = vmatpush2.bf16.msra.mxu0 %v3395
        %3782 = vmatprep.subr.bf16.mxu0 0
        %3783 = vmatpush2.bf16.msra.mxu0 %v3394
        %3784 = vmatprep.subr.bf16.mxu0 0
        %3785 = vmatpush2.bf16.msra.mxu0 %v3393
        %3786 = vmatprep.subr.bf16.mxu0 0
        %3787 = vmatpush2.bf16.msra.mxu0 %v3392
        %3788 = vmatprep.subr.bf16.mxu0 0
        %3789 = vmatpush2.bf16.msra.mxu0 %v3391
        %3790 = vmatprep.subr.bf16.mxu0 0
        %3791 = vmatpush2.bf16.msra.mxu0 %v3390
        %3792 = vmatprep.subr.bf16.mxu0 0
        %3793 = vmatpush2.bf16.msra.mxu0 %v3389
        %3794 = vmatprep.mubr.bf16.mxu0 %v2778
        %3795 = vmatmul.mubr.bf16.gmra.mxu0 %v2777
        %v3796 = vpop.f32.mrf.mxu0
        %v3797 = vadd.f32 %v3756, %v3796
        %v3798 = vpop.f32.mrf.mxu0
        %v3799 = vpop.f32.mrf.mxu0
        %v3800 = vadd.f32 %v3759, %v3799
        %v3801 = vpop.f32.mrf.mxu0
        %3802 = vdwg.mxu0
        %3803 = vmatprep.subr.bf16.mxu0 0
        %3804 = vmatpush1.bf16.msra.mxu0 %v3404
        %3805 = vmatprep.subr.bf16.mxu0 0
        %3806 = vmatpush1.bf16.msra.mxu0 %v3403
        %3807 = vmatprep.subr.bf16.mxu0 0
        %3808 = vmatpush1.bf16.msra.mxu0 %v3402
        %3809 = vmatprep.subr.bf16.mxu0 0
        %3810 = vmatpush1.bf16.msra.mxu0 %v3401
        %3811 = vmatprep.subr.bf16.mxu0 0
        %3812 = vmatpush1.bf16.msra.mxu0 %v3400
        %3813 = vmatprep.subr.bf16.mxu0 0
        %3814 = vmatpush1.bf16.msra.mxu0 %v3399
        %3815 = vmatprep.subr.bf16.mxu0 0
        %3816 = vmatpush1.bf16.msra.mxu0 %v3398
        %3817 = vmatprep.subr.bf16.mxu0 0
        %3818 = vmatpush1.bf16.msra.mxu0 %v3397
        %3819 = vmatprep.subr.bf16.mxu0 0
        %3820 = vmatpush2.bf16.msra.mxu0 %v3412
        %3821 = vmatprep.subr.bf16.mxu0 0
        %3822 = vmatpush2.bf16.msra.mxu0 %v3411
        %3823 = vmatprep.subr.bf16.mxu0 0
        %3824 = vmatpush2.bf16.msra.mxu0 %v3410
        %3825 = vmatprep.subr.bf16.mxu0 0
        %3826 = vmatpush2.bf16.msra.mxu0 %v3409
        %3827 = vmatprep.subr.bf16.mxu0 0
        %3828 = vmatpush2.bf16.msra.mxu0 %v3408
        %3829 = vmatprep.subr.bf16.mxu0 0
        %3830 = vmatpush2.bf16.msra.mxu0 %v3407
        %3831 = vmatprep.subr.bf16.mxu0 0
        %3832 = vmatpush2.bf16.msra.mxu0 %v3406
        %3833 = vmatprep.subr.bf16.mxu0 0
        %3834 = vmatpush2.bf16.msra.mxu0 %v3405
        %3835 = vmatprep.mubr.bf16.mxu0 %v2780
        %3836 = vmatmul.mubr.bf16.gmra.mxu0 %v2779
        %v3837 = vpop.f32.mrf.mxu0
        %v3838 = vadd.f32 %v3797, %v3837
        %v3839 = vpop.f32.mrf.mxu0
        %v3840 = vpop.f32.mrf.mxu0
        %v3841 = vadd.f32 %v3800, %v3840
        %v3842 = vpop.f32.mrf.mxu0
        %3843 = vdwg.mxu0
        %3844 = vmatprep.subr.bf16.mxu0 0
        %3845 = vmatpush1.bf16.msra.mxu0 %v3420
        %3846 = vmatprep.subr.bf16.mxu0 0
        %3847 = vmatpush1.bf16.msra.mxu0 %v3419
        %3848 = vmatprep.subr.bf16.mxu0 0
        %3849 = vmatpush1.bf16.msra.mxu0 %v3418
        %3850 = vmatprep.subr.bf16.mxu0 0
        %3851 = vmatpush1.bf16.msra.mxu0 %v3417
        %3852 = vmatprep.subr.bf16.mxu0 0
        %3853 = vmatpush1.bf16.msra.mxu0 %v3416
        %3854 = vmatprep.subr.bf16.mxu0 0
        %3855 = vmatpush1.bf16.msra.mxu0 %v3415
        %3856 = vmatprep.subr.bf16.mxu0 0
        %3857 = vmatpush1.bf16.msra.mxu0 %v3414
        %3858 = vmatprep.subr.bf16.mxu0 0
        %3859 = vmatpush1.bf16.msra.mxu0 %v3413
        %3860 = vmatprep.subr.bf16.mxu0 0
        %3861 = vmatpush2.bf16.msra.mxu0 %v3428
        %3862 = vmatprep.subr.bf16.mxu0 0
        %3863 = vmatpush2.bf16.msra.mxu0 %v3427
        %3864 = vmatprep.subr.bf16.mxu0 0
        %3865 = vmatpush2.bf16.msra.mxu0 %v3426
        %3866 = vmatprep.subr.bf16.mxu0 0
        %3867 = vmatpush2.bf16.msra.mxu0 %v3425
        %3868 = vmatprep.subr.bf16.mxu0 0
        %3869 = vmatpush2.bf16.msra.mxu0 %v3424
        %3870 = vmatprep.subr.bf16.mxu0 0
        %3871 = vmatpush2.bf16.msra.mxu0 %v3423
        %3872 = vmatprep.subr.bf16.mxu0 0
        %3873 = vmatpush2.bf16.msra.mxu0 %v3422
        %3874 = vmatprep.subr.bf16.mxu0 0
        %3875 = vmatpush2.bf16.msra.mxu0 %v3421
        %3876 = vmatprep.mubr.bf16.mxu0 %v2782
        %3877 = vmatmul.mubr.bf16.gmra.mxu0 %v2781
        %v3878 = vpop.f32.mrf.mxu0
        %v3879 = vadd.f32 %v3838, %v3878
        %v3880 = vpop.f32.mrf.mxu0
        %v3881 = vpop.f32.mrf.mxu0
        %v3882 = vadd.f32 %v3841, %v3881
        %v3883 = vpop.f32.mrf.mxu0
        %3884 = vdwg.mxu0
        %v3885 = vadd.f32 %v2143, %v3879
        %v3886 = vadd.f32 %v2144, %v3882
        %v3887 = vsel %vm1060, %v3885, 0.0
        %3888 = vadd.xlane.f32.xlu0 %v3887
        %v3889 = vpop.xlane.xlu0 %3888
        %v3890 = vsel %vm1060, %v3886, 0.0
        %3891 = vadd.xlane.f32.xlu0 %v3890
        %v3892 = vpop.xlane.xlu0 %3891
        %v3893 = vmul.f32 %v3889, %v2108
        %v3894 = vmul.f32 %v3892, %v2108
        %v3895 = vsub.f32 %v3885, %v3893
        %v3896 = vsub.f32 %v3886, %v3894
        %v3897 = vmul.f32 %v3895, %v3895
        %v3898 = vmul.f32 %v3896, %v3896
        %v3899 = vsel %vm1060, %v3897, 0.0
        %3900 = vadd.xlane.f32.xlu0 %v3899
        %v3901 = vpop.xlane.xlu0 %3900
        %v3902 = vsel %vm1060, %v3898, 0.0
        %3903 = vadd.xlane.f32.xlu0 %v3902
        %v3904 = vpop.xlane.xlu0 %3903
        %v3905 = vmul.f32 %v3901, %v2108
        %v3906 = vmul.f32 %v3904, %v2108
        %v3907 = vadd.f32 %v3905, 1e-05
        %v3908 = vadd.f32 %v3906, 1e-05
        %v3909 = vrsqrt.pop %v3907
        %v3910 = vrsqrt.pop %v3908
        %v3911 = vmul.f32 %v3895, %v3909
        %v3912 = vmul.f32 %v3896, %v3910
        %v3914 = vlaneseq
        %v3915 = vshrl.u32 %v3914, 7
        %v3916 = vsub.s32 0, %v3915
        %v3917 = vrot.slane %v1039, %v3916
        %v3919 = vmul.f32 %v3911, %v3917
        %v3920 = vmul.f32 %v3912, %v3917
        %v3922 = vlaneseq
        %v3923 = vshrl.u32 %v3922, 7
        %v3924 = vsub.s32 0, %v3923
        %v3925 = vrot.slane %v1040, %v3924
        %v3927 = vadd.f32 %v3919, %v3925
        %v3928 = vadd.f32 %v3920, %v3925
        %3929 = vst.msk [vmem:[#allocation2] sm:$0xff] %vm1060, %v3927
        %3930 = vst.msk [vmem:[#allocation2 + $0x8] sm:$0xff] %vm1060, %v3928
        %p3931 = scmp.eq.s32.totalorder %s32, 1
        // Predicated region
        $region85: #{tpu_custom_call.1} parent=79 // pred_check
          %p3932 = pneg %p3931
        $region86: #{tpu_custom_call.1} parent=79 // pred_check_branch
          %3934 = sbr.rel (%p3932) target = $region88
        $region87: #{tpu_custom_call.1} parent=79 // pred_region
          %vm3935 = vcmask 57344
          %v3936 = vsel %vm3935, %v716, 0.0
          %3937 = vadd.xlane.f32.xlu0 %v3936
          %v3938 = vpop.xlane.xlu0 %3937
          %v3939 = vsel %vm3935, %v717, 0.0
          %3940 = vadd.xlane.f32.xlu0 %v3939
          %v3941 = vpop.xlane.xlu0 %3940
          %v3942 = vadd.f32 %v3938, 1e-12
          %v3943 = vadd.f32 %v3941, 1e-12
          %v3944 = vrcp.pop %v3942
          %v3945 = vrcp.pop %v3943
          %v3946 = vmul.f32 %v716, %v3944
          %v3947 = vmul.f32 %v717, %v3945
          %v3948 = vlaneseq
          %v3949 = vshrl.u32 %v3948, 7
          %v3950 = vsub.s32 0, %v3949
          %v3951 = vrot.slane %v3946, %v3950
          %3953 = vbcast.lane.b32.xlu0 %v3951, 256
          %v3954 = vpop.permute.xlu0 %3953
          %v3955 = vlaneseq
          %v3956 = vshrl.u32 %v3955, 7
          %v3957 = vsub.s32 0, %v3956
          %v3958 = vrot.slane %v3947, %v3957
          %3960 = vbcast.lane.b32.xlu0 %v3958, 256
          %v3961 = vpop.permute.xlu0 %3960
          %v3962 = vmul.f32 %v3927, %v3954
          %v3963 = vmul.f32 %v3928, %v3961
          %v3964 = vsel %vm1060, %v3962, 0.0
          %v3965 = vrot.slane %v3964, 4
          %v3966 = vadd.f32 %v3964, %v3965
          %v3967 = vrot.slane %v3966, 2
          %v3968 = vadd.f32 %v3966, %v3967
          %v3969 = vrot.slane %v3968, 1
          %v3970 = vadd.f32 %v3968, %v3969
          %v3971 = vsel %vm1060, %v3963, 0.0
          %v3972 = vrot.slane %v3971, 4
          %v3973 = vadd.f32 %v3971, %v3972
          %v3974 = vrot.slane %v3973, 2
          %v3975 = vadd.f32 %v3973, %v3974
          %v3976 = vrot.slane %v3975, 1
          %v3977 = vadd.f32 %v3975, %v3976
          %vm3978 = vcmask 253952
          %3979 = vst.msk [vmem:[#allocation3] sm:$0x1] %vm3978, %v3970
          %3980 = vst.msk [vmem:[#allocation3 + $0x1] sm:$0x1] %vm3978, %v3977
        $region88: #{tpu_custom_call.1} parent=79 // pred_fallthru
          _
        // Predicated region
        $region89: #{tpu_custom_call.1} parent=79 // pred_check
          %p3981 = pneg %p442
        $region90: #{tpu_custom_call.1} parent=79 // pred_check_branch
          %3983 = sbr.rel (%p3981) target = $region92
        $region91: #{tpu_custom_call.1} parent=79 // pred_region
          %s3984 = smul.u32 2, %s31
          %s3986 = ssub.s32 32, 32
          %3987 = vsyncadd [#allocation4], %s3986
          %s3988 = smul.addr %s3984, 16
          %s3989 = scalar_lea.hbm %s15, %s3988
          %s3990 = sshll.u32 [#allocation3], 4
          %s3991 = int_to_ptr.vmem [resolvable:$true] %s3990
          %3996 = dma.vmem_to_hbm [thread:$0]  %s3991, 32, %s3989, [#allocation4], 16, 16, 1
        $region92: #{tpu_custom_call.1} parent=79 // pred_fallthru
          _
        // Predicated region
        $region93: #{tpu_custom_call.1} parent=79 // pred_check
          %p3997 = pneg %p442
        $region94: #{tpu_custom_call.1} parent=79 // pred_check_branch
          %3999 = sbr.rel (%p3997) target = $region96
        $region95: #{tpu_custom_call.1} parent=79 // pred_region
          %4000 = dma.done [#allocation4], 32
        $region96: #{tpu_custom_call.1} parent=79 // pred_fallthru
          _
      $region80: #{tpu_custom_call.1} parent=5 // pred_fallthru
        _
      %p4001 = scmp.le.s32.totalorder 2, %s22
      // Predicated region
      $region97: #{tpu_custom_call.1} parent=5 // pred_check
        %p4002 = pneg %p4001
      $region98: #{tpu_custom_call.1} parent=5 // pred_check_branch
        %4004 = sbr.rel (%p4002) target = $region100
      $region99: #{tpu_custom_call.1} parent=5 // pred_region
        %s4005 = ssub.s32 %s22, 2
      $region100: #{tpu_custom_call.1} parent=5 // pred_fallthru
        _
    $region6: #{tpu_custom_call.1} parent=1 // loop_footer
      %s26 = sadd.s32 1, %s22
    $region7: #{tpu_custom_call.1} parent=1 // loop_footer_branch
      %21 = sbr.rel target = $region3
    $region8: #{tpu_custom_call.1} parent=1 // loop_exit
      _
    %4006 = vsyncpa [#allocation4], 1
    %s4007 = scalar_lea.sflag [#allocation4], 1
    %4008 = vsyncpa %s4007, 1

</llo_original>
